<compile_context>
chip_gen: v7x
topology: tpu7x:2x2x1
jax: 0.10.0
libtpu: 0.0.40
codegen_flags: <defaults>
</compile_context>

<pallas_src>
import functools

import numpy as np
import jax
import jax.numpy as jnp
from jax.experimental import pallas as pl
from jax.experimental.pallas import tpu as pltpu

EPS = 1e-5

# Matmul / pooled-feature dtype.  bf16 feeds the MXU at native rate on
# v5e/v6e/v7x and halves weight DMA + pool traffic; accumulation is always f32
# via preferred_element_type.  Set to jnp.float32 only if exact f32 matmul
# accuracy is required.
MATMUL_DTYPE = jnp.bfloat16


# ----------------------------- kernel -------------------------------------- #

def _tnet_kernel(x_ref,
                 w1_ref, t1_ref,
                 w2_ref, t2_ref,
                 w3_ref, t3_ref,
                 w4_ref, t4_ref,
                 w5_ref, t5_ref,
                 w6_ref, b6_ref,
                 out_ref, acc_ref, *, num_points, h_chunk):
    """Fused per-point MLP + max-pool + FC head.

    Grid: (batch blocks, point tiles).  acc_ref is a (max(tb,8), H) running-max
    accumulator (matmul dtype) resident across the point-tile ("arbitrary")
    axis; the FC head runs in the finalize branch at the last point tile and
    writes the lane-dense padded output directly.
    x_ref: (tb, TILE_N, C_in)   out_ref: (tb, OUT_PAD)   acc_ref: (>=8, H)
    """
    k = pl.program_id(1)
    tb, tile_n, c_in = x_ref.shape
    h_dim = acc_ref.shape[-1]
    md = w2_ref.dtype                       # matmul / pool element dtype

    @pl.when(k == 0)
    def _init():
        # ReLU output is >= 0, so 0-init is equivalent to -inf and is safe for
        # masked tail points and the zero-padded accumulator rows.
        acc_ref[...] = jnp.zeros(tuple(acc_ref.shape), acc_ref.dtype)

    x = x_ref[...].reshape(tb * tile_n, c_in)              # (M, C_in) f32

    # conv1 (+ folded BN): K = C_in (3) is tiny -> explicit VPU FMAs.
    h = x[:, 0:1] * w1_ref[0:1, :]
    for c in range(1, c_in):
        h = h + x[:, c:c + 1] * w1_ref[c:c + 1, :]
    h = jnp.maximum(h + t1_ref[...], 0.0)                  # (M, 64)   f32

    # conv2 (+ folded BN).
    h = jnp.dot(h.astype(md), w2_ref[...], preferred_element_type=jnp.float32)
    h = jnp.maximum(h + t2_ref[...], 0.0).astype(md)       # (M, 128)  md

    if num_points % tile_n != 0:
        pid = k * tile_n + jax.lax.broadcasted_iota(jnp.int32,
                                                    (1, tile_n, 1), 1)
        valid = pid < num_points

    # conv3 (+ folded BN) + ReLU + point max-pool, chunked over the H axis to
    # bound the dominant (M, h_chunk) temporary.  Shift/ReLU/pool run in the
    # matmul dtype (BN scale is already folded into w3).
    for ci in range(h_dim // h_chunk):
        lo, hi = ci * h_chunk, (ci + 1) * h_chunk
        hc = jnp.dot(h, w3_ref[:, lo:hi], preferred_element_type=jnp.float32)
        hc = jnp.maximum(hc.astype(md) + t3_ref[:, lo:hi], 0)
        hc = hc.reshape(tb, tile_n, h_chunk)
        if num_points % tile_n != 0:
            hc = jnp.where(valid, hc, 0)                   # masked tail tile
        acc_ref[0:tb, lo:hi] = jnp.maximum(acc_ref[0:tb, lo:hi],
                                           jnp.max(hc, axis=1))

    @pl.when(k == pl.num_programs(1) - 1)
    def _head():
        # FC head on the pooled features (fused; no second kernel launch).
        # acc has >= 8 rows so the MXU LHS never drops below a sublane tile;
        # padded rows are zeros and their finite outputs are sliced off.
        p = acc_ref[...]                                   # (rows, H)  md
        y = jnp.dot(p, w4_ref[...], preferred_element_type=jnp.float32)
        y = jnp.maximum(y + t4_ref[...], 0.0).astype(md)
        y = jnp.dot(y, w5_ref[...], preferred_element_type=jnp.float32)
        y = jnp.maximum(y + t5_ref[...], 0.0).astype(md)
        y = jnp.dot(y, w6_ref[...], preferred_element_type=jnp.float32)
        out_ref[...] = y[0:tb, :] + b6_ref[...]


# ----------------------------- wrapper ------------------------------------- #

def _const_spec(shape):
    """Whole-array block, same block at every grid step.

    Note: pipeline_mode=pl.Buffered(1) would halve resident-weight VMEM (v7x
    headroom); kept at the default buffering to stay conservative.
    """
    nd = len(shape)
    return pl.BlockSpec(shape, lambda *_, _nd=nd: (0,) * _nd)


def _prepare_params(params, output_dim, matmul_dtype):
    """Fold BN scale into weights, FC biases into shifts; pad fc3 to 128 lanes."""
    md = matmul_dtype
    DD = output_dim * output_dim
    out_pad = 128 * pl.cdiv(DD, 128)
    fp = {
        "w1": (params["w1"] * params["s1"]).astype(jnp.float32),
        "t1": params["t1"],
        "w2": (params["w2"] * params["s2"]).astype(md),
        "t2": params["t2"],
        "w3": (params["w3"] * params["s3"]).astype(md),
        "t3": params["t3"].astype(md),
        "w4": (params["w4"] * params["s4"]).astype(md),
        "t4": params["t4"] + params["b4"] * params["s4"],
        "w5": (params["w5"] * params["s5"]).astype(md),
        "t5": params["t5"] + params["b5"] * params["s5"],
    }
    w6p = jnp.zeros((params["w6"].shape[0], out_pad), jnp.float32)
    fp["w6"] = w6p.at[:, :DD].set(params["w6"]).astype(md)
    fp["b6"] = jnp.zeros((1, out_pad), jnp.float32).at[:, :DD].set(params["b6"])
    return fp


def transformation_net_forward(x, params, output_dim, *,
                               matmul_dtype=MATMUL_DTYPE, points_tile=None):
    """x: (B, num_points, input_dim) f32 -> (B, output_dim, output_dim) f32."""
    B, N, C_in = x.shape
    H = params["w3"].shape[1]
    D = output_dim
    DD = D * D
    out_pad = 128 * pl.cdiv(DD, 128)          # lane-dense head output width

    fp = _prepare_params(params, output_dim, matmul_dtype)

    # Batch tiling: keep >= 2 steps on the parallel batch axis so v7x's second
    # TensorCore gets work even at small B; cap at 8 rows per step.
    if B >= 16:
        tb = 8
    elif B >= 2:
        tb = max(1, B // 2)
    else:
        tb = 1
    grid_b = pl.cdiv(B, tb)

    if points_tile is None:
        # 512 is the safe default for v7x (64 MiB VMEM); v6e/v5e (128 MiB) can
        # profitably pass points_tile=1024 for long point clouds.
        points_tile = min(N, 512)
        for cand in (512, 256, 128):
            if N >= cand and N % cand == 0:
                points_tile = cand
                break
    grid_n = pl.cdiv(N, points_tile)

    h_chunk = 256 if H % 256 == 0 else H
    acc_rows = max(tb, 8)

    itemsize = jnp.dtype(matmul_dtype).itemsize
    flops = (2 * B * N * (C_in * 64 + 64 * 128 + 128 * H)
             + 2 * B * (H * 512 + 512 * 256 + 256 * out_pad))
    bytes_accessed = (x.size * 4 + grid_b * tb * out_pad * 4
                      + (C_in * 64 + 64 + 128 + 512 + 256 + out_pad) * 4
                      + (64 * 128 + 128 * H + H + H * 512 + 512 * 256
                         + 256 * out_pad) * itemsize)

    y_blk = pl.pallas_call(
        functools.partial(_tnet_kernel, num_points=N, h_chunk=h_chunk),
        out_shape=jax.ShapeDtypeStruct((grid_b, tb, out_pad), jnp.float32),
        grid=(grid_b, grid_n),
        in_specs=[
            pl.BlockSpec((tb, points_tile, C_in), lambda b, k: (b, k, 0)),
            _const_spec(fp["w1"].shape), _const_spec(fp["t1"].shape),
            _const_spec(fp["w2"].shape), _const_spec(fp["t2"].shape),
            _const_spec(fp["w3"].shape), _const_spec(fp["t3"].shape),
            _const_spec(fp["w4"].shape), _const_spec(fp["t4"].shape),
            _const_spec(fp["w5"].shape), _const_spec(fp["t5"].shape),
            _const_spec(fp["w6"].shape), _const_spec(fp["b6"].shape),
        ],
        out_specs=pl.BlockSpec((None, tb, out_pad), lambda b, k: (b, 0, 0)),
        scratch_shapes=[pltpu.VMEM((acc_rows, H), matmul_dtype)],
        compiler_params=pltpu.CompilerParams(
            dimension_semantics=("parallel", "arbitrary"),
            vmem_limit_bytes=40 * 1024 * 1024),
        cost_estimate=pl.CostEstimate(flops=flops, transcendentals=0,
                                      bytes_accessed=bytes_accessed),
    )(x,
      fp["w1"], fp["t1"], fp["w2"], fp["t2"], fp["w3"], fp["t3"],
      fp["w4"], fp["t4"], fp["w5"], fp["t5"], fp["w6"], fp["b6"])

    # Drop padded batch rows / lanes and add the identity outside the kernel.
    y = y_blk.reshape(grid_b * tb, out_pad)[:B, :DD]
    return y.reshape(B, D, D) + jnp.eye(D, dtype=jnp.float32)


# -------------------------- parameter init --------------------------------- #

def _bn_scale_shift(keys, c):
    kg, kb, km, kv = keys
    gamma = jax.random.uniform(kg, (1, c), jnp.float32, 0.8, 1.2)
    beta = 0.1 * jax.random.normal(kb, (1, c), jnp.float32)
    mean = 0.1 * jax.random.normal(km, (1, c), jnp.float32)
    var = jax.random.uniform(kv, (1, c), jnp.float32, 0.5, 1.5)
    scale = gamma / jnp.sqrt(var + EPS)
    shift = beta - mean * scale
    return scale, shift


def init_params(key, input_dim, output_dim, h_dim):
    ks = jax.random.split(key, 26)
    D2 = output_dim * output_dim
    p = {}
    # Conv1d(k=1, bias=False) weights stored pre-transposed as (in, out).
    p["w1"] = 0.1 * jax.random.normal(ks[0], (input_dim, 64), jnp.float32)
    p["w2"] = 0.1 * jax.random.normal(ks[1], (64, 128), jnp.float32)
    p["w3"] = 0.1 * jax.random.normal(ks[2], (128, h_dim), jnp.float32)
    p["s1"], p["t1"] = _bn_scale_shift(ks[3:7], 64)
    p["s2"], p["t2"] = _bn_scale_shift(ks[7:11], 128)
    p["s3"], p["t3"] = _bn_scale_shift(ks[11:15], h_dim)
    # Linear weights stored pre-transposed as (in, out), biases as (1, out).
    p["w4"] = 0.1 * jax.random.normal(ks[15], (h_dim, 512), jnp.float32)
    p["b4"] = 0.1 * jax.random.normal(ks[16], (1, 512), jnp.float32)
    p["w5"] = 0.1 * jax.random.normal(ks[17], (512, 256), jnp.float32)
    p["b5"] = 0.1 * jax.random.normal(ks[18], (1, 256), jnp.float32)
    p["w6"] = 0.1 * jax.random.normal(ks[19], (256, D2), jnp.float32)
    p["b6"] = 0.1 * jax.random.normal(ks[20], (1, D2), jnp.float32)
    p["s4"], p["t4"] = _bn_scale_shift(ks[21:25], 512)
    p["s5"], p["t5"] = _bn_scale_shift(jax.random.split(ks[25], 4), 256)
    return p


# ------------------------- pure-JAX references ----------------------------- #

def ref_forward(x, p, output_dim):
    """PyTorch-module math, full f32 (exact inference semantics)."""
    relu = jax.nn.relu
    B, N, _ = x.shape
    h = relu(jnp.einsum("bnc,ch->bnh", x, p["w1"]) * p["s1"] + p["t1"])
    h = h.reshape(B * N, -1)
    h = relu(jnp.dot(h, p["w2"]) * p["s2"] + p["t2"])
    h = relu(jnp.dot(h, p["w3"]) * p["s3"] + p["t3"])
    pooled = jnp.max(h.reshape(B, N, -1), axis=1)
    h = relu((jnp.dot(pooled, p["w4"]) + p["b4"]) * p["s4"] + p["t4"])
    h = relu((jnp.dot(h, p["w5"]) + p["b5"]) * p["s5"] + p["t5"])
    y = jnp.dot(h, p["w6"]) + p["b6"]
    D = output_dim
    return y.reshape(-1, D, D) + jnp.eye(D, dtype=jnp.float32)


def ref_forward_matched(x, fp, output_dim, matmul_dtype):
    """Mirrors the kernel math exactly (folded BN, bf16 operands, f32 accum)."""
    relu = jax.nn.relu
    md = matmul_dtype
    B, N, _ = x.shape
    h = relu(jnp.einsum("bnc,ch->bnh", x, fp["w1"]) + fp["t1"])     # f32
    h = h.reshape(B * N, -1).astype(md)
    h = jnp.dot(h, fp["w2"], preferred_element_type=jnp.float32)
    h = relu(h + fp["t2"]).astype(md)
    h = jnp.dot(h, fp["w3"], preferred_element_type=jnp.float32)
    h = relu(h.astype(md) + fp["t3"])                                # md
    pooled = jnp.max(h.reshape(B, N, -1), axis=1)                    # md
    h = jnp.dot(pooled, fp["w4"], preferred_element_type=jnp.float32)
    h = relu(h + fp["t4"]).astype(md)
    h = jnp.dot(h, fp["w5"], preferred_element_type=jnp.float32)
    h = relu(h + fp["t5"]).astype(md)
    y = jnp.dot(h, fp["w6"], preferred_element_type=jnp.float32) + fp["b6"]
    D = output_dim
    y = y[:, :D * D].reshape(B, D, D) + jnp.eye(D, dtype=jnp.float32)
    return y


# ------------------------------- main -------------------------------------- #

if __name__ == "__main__":
    B, N = 8, 512            # batch, num_points
    INPUT_DIM = 3            # xyz point features
    OUTPUT_DIM = 3           # 3x3 transform
    H_DIM = 128              # small h_dim for the test (module default 1024)

    key = jax.random.PRNGKey(0)
    kx, kp = jax.random.split(key)
    x = jax.random.normal(kx, (B, N, INPUT_DIM), jnp.float32)
    params = init_params(kp, INPUT_DIM, OUTPUT_DIM, H_DIM)

    # points_tile=256 -> 2 point tiles: exercises the running-max accumulator;
    # B=8 -> tb=4, 2 batch grid steps: exercises the padded head accumulator.
    fwd = jax.jit(functools.partial(transformation_net_forward,
                                    output_dim=OUTPUT_DIM,
                                    points_tile=256))
    out = jax.block_until_ready(fwd(x, params))
    assert out.shape == (B, OUTPUT_DIM, OUTPUT_DIM), out.shape

    # Matched-precision reference (same folded weights, bf16 operands, f32 acc).
    fp = _prepare_params(params, OUTPUT_DIM, MATMUL_DTYPE)
    ref_m = jax.block_until_ready(
        ref_forward_matched(x, fp, OUTPUT_DIM, MATMUL_DTYPE))
    np.testing.assert_allclose(np.asarray(out), np.asarray(ref_m),
                               rtol=2e-3, atol=2e-3)

    # Full-f32 reference (PyTorch-module semantics), loose precision check.
    ref_f = jax.block_until_ready(ref_forward(x, params, OUTPUT_DIM))
    np.testing.assert_allclose(np.asarray(out), np.asarray(ref_f),
                               rtol=5e-2, atol=5e-2)

    print("KERNEL_OK")
</pallas_src>

<mosaic_0001>
module attributes {stable_mosaic.version = 11 : i64} {
  func.func @_tnet_kernel(%arg0: i32, %arg1: i32, %arg2: memref<4x256x3xf32, #tpu.memory_space<vmem>>, %arg3: memref<3x64xf32, #tpu.memory_space<vmem>>, %arg4: memref<1x64xf32, #tpu.memory_space<vmem>>, %arg5: memref<64x128xbf16, #tpu.memory_space<vmem>>, %arg6: memref<1x128xf32, #tpu.memory_space<vmem>>, %arg7: memref<128x128xbf16, #tpu.memory_space<vmem>>, %arg8: memref<1x128xbf16, #tpu.memory_space<vmem>>, %arg9: memref<128x512xbf16, #tpu.memory_space<vmem>>, %arg10: memref<1x512xf32, #tpu.memory_space<vmem>>, %arg11: memref<512x256xbf16, #tpu.memory_space<vmem>>, %arg12: memref<1x256xf32, #tpu.memory_space<vmem>>, %arg13: memref<256x128xbf16, #tpu.memory_space<vmem>>, %arg14: memref<1x128xf32, #tpu.memory_space<vmem>>, %arg15: memref<1x4x128xf32, #tpu.memory_space<vmem>>, %arg16: memref<8x128xbf16, #tpu.memory_space<vmem>>) attributes {dimension_semantics = [#tpu.dimension_semantics<parallel>, #tpu.dimension_semantics<arbitrary>], iteration_bounds = array<i64: 2, 2>, scalar_prefetch = 0 : i64, scratch_operands = 1 : i64, tpu.core_type = #tpu.core_type<tc>, window_params = [{transform_indices = @transform_0, window_bounds = array<i64: 4, 256, 3>}, {pipeline_mode = #tpu.pipeline_mode<synchronous>, transform_indices = @transform_1, window_bounds = array<i64: 3, 64>}, {pipeline_mode = #tpu.pipeline_mode<synchronous>, transform_indices = @transform_2, window_bounds = array<i64: 1, 64>}, {pipeline_mode = #tpu.pipeline_mode<synchronous>, transform_indices = @transform_3, window_bounds = array<i64: 64, 128>}, {pipeline_mode = #tpu.pipeline_mode<synchronous>, transform_indices = @transform_4, window_bounds = array<i64: 1, 128>}, {pipeline_mode = #tpu.pipeline_mode<synchronous>, transform_indices = @transform_5, window_bounds = array<i64: 128, 128>}, {pipeline_mode = #tpu.pipeline_mode<synchronous>, transform_indices = @transform_6, window_bounds = array<i64: 1, 128>}, {pipeline_mode = #tpu.pipeline_mode<synchronous>, transform_indices = @transform_7, window_bounds = array<i64: 128, 512>}, {pipeline_mode = #tpu.pipeline_mode<synchronous>, transform_indices = @transform_8, window_bounds = array<i64: 1, 512>}, {pipeline_mode = #tpu.pipeline_mode<synchronous>, transform_indices = @transform_9, window_bounds = array<i64: 512, 256>}, {pipeline_mode = #tpu.pipeline_mode<synchronous>, transform_indices = @transform_10, window_bounds = array<i64: 1, 256>}, {pipeline_mode = #tpu.pipeline_mode<synchronous>, transform_indices = @transform_11, window_bounds = array<i64: 256, 128>}, {pipeline_mode = #tpu.pipeline_mode<synchronous>, transform_indices = @transform_12, window_bounds = array<i64: 1, 128>}, {transform_indices = @transform_13, window_bounds = array<i64: 1, 4, 128>}]} {
    %c0_i32 = arith.constant 0 : i32
    %0 = arith.cmpi eq, %arg1, %c0_i32 : i32
    %1 = arith.extui %0 : i1 to i32
    %c0_i32_0 = arith.constant 0 : i32
    %2 = arith.cmpi ne, %1, %c0_i32_0 : i32
    scf.if %2 {
      %cst_27 = arith.constant 0.000000e+00 : bf16
      %52 = vector.broadcast %cst_27 : bf16 to vector<8x128xbf16>
      %c0_28 = arith.constant 0 : index
      %c0_29 = arith.constant 0 : index
      %53 = vector.load %arg16[%c0_28, %c0_29] : memref<8x128xbf16, #tpu.memory_space<vmem>>, vector<8x128xbf16>
      tpu.vector_store %arg16[%c0_28, %c0_29], %52 {strides = array<i32>} : memref<8x128xbf16, #tpu.memory_space<vmem>>, vector<8x128xbf16>,
    } else {
    }
    %c0 = arith.constant 0 : index
    %c0_1 = arith.constant 0 : index
    %c0_2 = arith.constant 0 : index
    %3 = vector.load %arg2[%c0, %c0_1, %c0_2] : memref<4x256x3xf32, #tpu.memory_space<vmem>>, vector<4x256x3xf32>
    %4 = vector.shape_cast %3 : vector<4x256x3xf32> to vector<1024x3xf32>
    %5 = vector.extract_strided_slice %4 {offsets = [0, 0], sizes = [1024, 1], strides = [1, 1]} : vector<1024x3xf32> to vector<1024x1xf32>
    %c0_3 = arith.constant 0 : index
    %c0_4 = arith.constant 0 : index
    %6 = vector.load %arg3[%c0_3, %c0_4] : memref<3x64xf32, #tpu.memory_space<vmem>>, vector<1x64xf32>
    %7 = vector.broadcast %5 : vector<1024x1xf32> to vector<1024x64xf32>
    %8 = vector.broadcast %6 : vector<1x64xf32> to vector<1024x64xf32>
    %9 = arith.mulf %7, %8 : vector<1024x64xf32>
    %10 = vector.extract_strided_slice %4 {offsets = [0, 1], sizes = [1024, 1], strides = [1, 1]} : vector<1024x3xf32> to vector<1024x1xf32>
    %c1 = arith.constant 1 : index
    %c0_5 = arith.constant 0 : index
    %11 = vector.load %arg3[%c1, %c0_5] : memref<3x64xf32, #tpu.memory_space<vmem>>, vector<1x64xf32>
    %12 = vector.broadcast %10 : vector<1024x1xf32> to vector<1024x64xf32>
    %13 = vector.broadcast %11 : vector<1x64xf32> to vector<1024x64xf32>
    %14 = arith.mulf %12, %13 : vector<1024x64xf32>
    %15 = arith.addf %9, %14 : vector<1024x64xf32>
    %16 = vector.extract_strided_slice %4 {offsets = [0, 2], sizes = [1024, 1], strides = [1, 1]} : vector<1024x3xf32> to vector<1024x1xf32>
    %c2 = arith.constant 2 : index
    %c0_6 = arith.constant 0 : index
    %17 = vector.load %arg3[%c2, %c0_6] : memref<3x64xf32, #tpu.memory_space<vmem>>, vector<1x64xf32>
    %18 = vector.broadcast %16 : vector<1024x1xf32> to vector<1024x64xf32>
    %19 = vector.broadcast %17 : vector<1x64xf32> to vector<1024x64xf32>
    %20 = arith.mulf %18, %19 : vector<1024x64xf32>
    %21 = arith.addf %15, %20 : vector<1024x64xf32>
    %c0_7 = arith.constant 0 : index
    %c0_8 = arith.constant 0 : index
    %22 = vector.load %arg4[%c0_7, %c0_8] : memref<1x64xf32, #tpu.memory_space<vmem>>, vector<1x64xf32>
    %23 = vector.broadcast %22 : vector<1x64xf32> to vector<1024x64xf32>
    %24 = arith.addf %21, %23 : vector<1024x64xf32>
    %cst = arith.constant 0.000000e+00 : f32
    %25 = vector.broadcast %cst : f32 to vector<1024x64xf32>
    %26 = arith.maximumf %24, %25 : vector<1024x64xf32>
    %27 = arith.truncf %26 : vector<1024x64xf32> to vector<1024x64xbf16>
    %c0_9 = arith.constant 0 : index
    %c0_10 = arith.constant 0 : index
    %28 = vector.load %arg5[%c0_9, %c0_10] : memref<64x128xbf16, #tpu.memory_space<vmem>>, vector<64x128xbf16>
    %cst_11 = arith.constant dense<0.000000e+00> : vector<1024x128xf32>
    %29 = tpu.matmul %27, %28, %cst_11 {dimension_numbers = #tpu.dot_dimension_numbers<[1], [0], [0], [1], [0, 0, 1, 1], [], []>} : vector<1024x64xbf16>, vector<64x128xbf16>, vector<1024x128xf32> -> vector<1024x128xf32>
    %c0_12 = arith.constant 0 : index
    %c0_13 = arith.constant 0 : index
    %30 = vector.load %arg6[%c0_12, %c0_13] : memref<1x128xf32, #tpu.memory_space<vmem>>, vector<1x128xf32>
    %31 = vector.broadcast %30 : vector<1x128xf32> to vector<1024x128xf32>
    %32 = arith.addf %29, %31 : vector<1024x128xf32>
    %cst_14 = arith.constant 0.000000e+00 : f32
    %33 = vector.broadcast %cst_14 : f32 to vector<1024x128xf32>
    %34 = arith.maximumf %32, %33 : vector<1024x128xf32>
    %35 = arith.truncf %34 : vector<1024x128xf32> to vector<1024x128xbf16>
    %c0_15 = arith.constant 0 : index
    %c0_16 = arith.constant 0 : index
    %36 = vector.load %arg7[%c0_15, %c0_16] : memref<128x128xbf16, #tpu.memory_space<vmem>>, vector<128x128xbf16>
    %cst_17 = arith.constant dense<0.000000e+00> : vector<1024x128xf32>
    %37 = tpu.matmul %35, %36, %cst_17 {dimension_numbers = #tpu.dot_dimension_numbers<[1], [0], [0], [1], [0, 0, 1, 1], [], []>} : vector<1024x128xbf16>, vector<128x128xbf16>, vector<1024x128xf32> -> vector<1024x128xf32>
    %38 = arith.truncf %37 : vector<1024x128xf32> to vector<1024x128xbf16>
    %c0_18 = arith.constant 0 : index
    %c0_19 = arith.constant 0 : index
    %39 = vector.load %arg8[%c0_18, %c0_19] : memref<1x128xbf16, #tpu.memory_space<vmem>>, vector<1x128xbf16>
    %40 = vector.broadcast %39 : vector<1x128xbf16> to vector<1024x128xbf16>
    %41 = arith.addf %38, %40 : vector<1024x128xbf16>
    %cst_20 = arith.constant 0.000000e+00 : bf16
    %42 = vector.broadcast %cst_20 : bf16 to vector<1024x128xbf16>
    %43 = arith.maximumf %41, %42 : vector<1024x128xbf16>
    %44 = vector.shape_cast %43 : vector<1024x128xbf16> to vector<4x256x128xbf16>
    %c0_21 = arith.constant 0 : index
    %c0_22 = arith.constant 0 : index
    %45 = vector.load %arg16[%c0_21, %c0_22] : memref<8x128xbf16, #tpu.memory_space<vmem>>, vector<4x128xbf16>
    %cst_23 = arith.constant dense<0xFF80> : vector<4x128xbf16>
    %46 = vector.multi_reduction <maximumf>, %44, %cst_23 [1] : vector<4x256x128xbf16> to vector<4x128xbf16>
    %47 = arith.maximumf %45, %46 : vector<4x128xbf16>
    %c0_24 = arith.constant 0 : index
    %c0_25 = arith.constant 0 : index
    %48 = vector.load %arg16[%c0_24, %c0_25] : memref<8x128xbf16, #tpu.memory_space<vmem>>, vector<4x128xbf16>
    tpu.vector_store %arg16[%c0_24, %c0_25], %47 {strides = array<i32>} : memref<8x128xbf16, #tpu.memory_space<vmem>>, vector<4x128xbf16>,
    %c1_i32 = arith.constant 1 : i32
    %49 = arith.cmpi eq, %arg1, %c1_i32 : i32
    %50 = arith.extui %49 : i1 to i32
    %c0_i32_26 = arith.constant 0 : i32
    %51 = arith.cmpi ne, %50, %c0_i32_26 : i32
    scf.if %51 {
      %c0_27 = arith.constant 0 : index
      %c0_28 = arith.constant 0 : index
      %52 = vector.load %arg16[%c0_27, %c0_28] : memref<8x128xbf16, #tpu.memory_space<vmem>>, vector<8x128xbf16>
      %c0_29 = arith.constant 0 : index
      %c0_30 = arith.constant 0 : index
      %53 = vector.load %arg9[%c0_29, %c0_30] : memref<128x512xbf16, #tpu.memory_space<vmem>>, vector<128x512xbf16>
      %cst_31 = arith.constant dense<0.000000e+00> : vector<8x512xf32>
      %54 = tpu.matmul %52, %53, %cst_31 {dimension_numbers = #tpu.dot_dimension_numbers<[1], [0], [0], [1], [0, 0, 1, 1], [], []>} : vector<8x128xbf16>, vector<128x512xbf16>, vector<8x512xf32> -> vector<8x512xf32>
      %c0_32 = arith.constant 0 : index
      %c0_33 = arith.constant 0 : index
      %55 = vector.load %arg10[%c0_32, %c0_33] : memref<1x512xf32, #tpu.memory_space<vmem>>, vector<1x512xf32>
      %56 = vector.broadcast %55 : vector<1x512xf32> to vector<8x512xf32>
      %57 = arith.addf %54, %56 : vector<8x512xf32>
      %cst_34 = arith.constant 0.000000e+00 : f32
      %58 = vector.broadcast %cst_34 : f32 to vector<8x512xf32>
      %59 = arith.maximumf %57, %58 : vector<8x512xf32>
      %60 = arith.truncf %59 : vector<8x512xf32> to vector<8x512xbf16>
      %c0_35 = arith.constant 0 : index
      %c0_36 = arith.constant 0 : index
      %61 = vector.load %arg11[%c0_35, %c0_36] : memref<512x256xbf16, #tpu.memory_space<vmem>>, vector<512x256xbf16>
      %cst_37 = arith.constant dense<0.000000e+00> : vector<8x256xf32>
      %62 = tpu.matmul %60, %61, %cst_37 {dimension_numbers = #tpu.dot_dimension_numbers<[1], [0], [0], [1], [0, 0, 1, 1], [], []>} : vector<8x512xbf16>, vector<512x256xbf16>, vector<8x256xf32> -> vector<8x256xf32>
      %c0_38 = arith.constant 0 : index
      %c0_39 = arith.constant 0 : index
      %63 = vector.load %arg12[%c0_38, %c0_39] : memref<1x256xf32, #tpu.memory_space<vmem>>, vector<1x256xf32>
      %64 = vector.broadcast %63 : vector<1x256xf32> to vector<8x256xf32>
      %65 = arith.addf %62, %64 : vector<8x256xf32>
      %cst_40 = arith.constant 0.000000e+00 : f32
      %66 = vector.broadcast %cst_40 : f32 to vector<8x256xf32>
      %67 = arith.maximumf %65, %66 : vector<8x256xf32>
      %68 = arith.truncf %67 : vector<8x256xf32> to vector<8x256xbf16>
      %c0_41 = arith.constant 0 : index
      %c0_42 = arith.constant 0 : index
      %69 = vector.load %arg13[%c0_41, %c0_42] : memref<256x128xbf16, #tpu.memory_space<vmem>>, vector<256x128xbf16>
      %cst_43 = arith.constant dense<0.000000e+00> : vector<8x128xf32>
      %70 = tpu.matmul %68, %69, %cst_43 {dimension_numbers = #tpu.dot_dimension_numbers<[1], [0], [0], [1], [0, 0, 1, 1], [], []>} : vector<8x256xbf16>, vector<256x128xbf16>, vector<8x128xf32> -> vector<8x128xf32>
      %71 = vector.extract_strided_slice %70 {offsets = [0, 0], sizes = [4, 128], strides = [1, 1]} : vector<8x128xf32> to vector<4x128xf32>
      %c0_44 = arith.constant 0 : index
      %c0_45 = arith.constant 0 : index
      %72 = vector.load %arg14[%c0_44, %c0_45] : memref<1x128xf32, #tpu.memory_space<vmem>>, vector<1x128xf32>
      %73 = vector.broadcast %72 : vector<1x128xf32> to vector<4x128xf32>
      %74 = arith.addf %71, %73 : vector<4x128xf32>
      %c0_46 = arith.constant 0 : index
      %c0_47 = arith.constant 0 : index
      %c0_48 = arith.constant 0 : index
      %75 = vector.load %arg15[%c0_46, %c0_47, %c0_48] : memref<1x4x128xf32, #tpu.memory_space<vmem>>, vector<1x4x128xf32>
      %76 = vector.shape_cast %75 : vector<1x4x128xf32> to vector<4x128xf32>
      %77 = vector.shape_cast %74 : vector<4x128xf32> to vector<1x4x128xf32>
      tpu.vector_store %arg15[%c0_46, %c0_47, %c0_48], %77 {strides = array<i32>} : memref<1x4x128xf32, #tpu.memory_space<vmem>>, vector<1x4x128xf32>,
    } else {
    }
    return
  }
  func.func @transform_0(%arg0: i32, %arg1: i32) -> (i32, i32, i32) {
    %c0_i32 = arith.constant 0 : i32
    %c0_i32_0 = arith.constant 0 : i32
    return %arg0, %arg1, %c0_i32 : i32, i32, i32
  }
  func.func @transform_1(%arg0: i32, %arg1: i32) -> (i32, i32) {
    %c0_i32 = arith.constant 0 : i32
    %c0_i32_0 = arith.constant 0 : i32
    %c0_i32_1 = arith.constant 0 : i32
    return %c0_i32, %c0_i32_0 : i32, i32
  }
  func.func @transform_2(%arg0: i32, %arg1: i32) -> (i32, i32) {
    %c0_i32 = arith.constant 0 : i32
    %c0_i32_0 = arith.constant 0 : i32
    %c0_i32_1 = arith.constant 0 : i32
    return %c0_i32, %c0_i32_0 : i32, i32
  }
  func.func @transform_3(%arg0: i32, %arg1: i32) -> (i32, i32) {
    %c0_i32 = arith.constant 0 : i32
    %c0_i32_0 = arith.constant 0 : i32
    %c0_i32_1 = arith.constant 0 : i32
    return %c0_i32, %c0_i32_0 : i32, i32
  }
  func.func @transform_4(%arg0: i32, %arg1: i32) -> (i32, i32) {
    %c0_i32 = arith.constant 0 : i32
    %c0_i32_0 = arith.constant 0 : i32
    %c0_i32_1 = arith.constant 0 : i32
    return %c0_i32, %c0_i32_0 : i32, i32
  }
  func.func @transform_5(%arg0: i32, %arg1: i32) -> (i32, i32) {
    %c0_i32 = arith.constant 0 : i32
    %c0_i32_0 = arith.constant 0 : i32
    %c0_i32_1 = arith.constant 0 : i32
    return %c0_i32, %c0_i32_0 : i32, i32
  }
  func.func @transform_6(%arg0: i32, %arg1: i32) -> (i32, i32) {
    %c0_i32 = arith.constant 0 : i32
    %c0_i32_0 = arith.constant 0 : i32
    %c0_i32_1 = arith.constant 0 : i32
    return %c0_i32, %c0_i32_0 : i32, i32
  }
  func.func @transform_7(%arg0: i32, %arg1: i32) -> (i32, i32) {
    %c0_i32 = arith.constant 0 : i32
    %c0_i32_0 = arith.constant 0 : i32
    %c0_i32_1 = arith.constant 0 : i32
    return %c0_i32, %c0_i32_0 : i32, i32
  }
  func.func @transform_8(%arg0: i32, %arg1: i32) -> (i32, i32) {
    %c0_i32 = arith.constant 0 : i32
    %c0_i32_0 = arith.constant 0 : i32
    %c0_i32_1 = arith.constant 0 : i32
    return %c0_i32, %c0_i32_0 : i32, i32
  }
  func.func @transform_9(%arg0: i32, %arg1: i32) -> (i32, i32) {
    %c0_i32 = arith.constant 0 : i32
    %c0_i32_0 = arith.constant 0 : i32
    %c0_i32_1 = arith.constant 0 : i32
    return %c0_i32, %c0_i32_0 : i32, i32
  }
  func.func @transform_10(%arg0: i32, %arg1: i32) -> (i32, i32) {
    %c0_i32 = arith.constant 0 : i32
    %c0_i32_0 = arith.constant 0 : i32
    %c0_i32_1 = arith.constant 0 : i32
    return %c0_i32, %c0_i32_0 : i32, i32
  }
  func.func @transform_11(%arg0: i32, %arg1: i32) -> (i32, i32) {
    %c0_i32 = arith.constant 0 : i32
    %c0_i32_0 = arith.constant 0 : i32
    %c0_i32_1 = arith.constant 0 : i32
    return %c0_i32, %c0_i32_0 : i32, i32
  }
  func.func @transform_12(%arg0: i32, %arg1: i32) -> (i32, i32) {
    %c0_i32 = arith.constant 0 : i32
    %c0_i32_0 = arith.constant 0 : i32
    %c0_i32_1 = arith.constant 0 : i32
    return %c0_i32, %c0_i32_0 : i32, i32
  }
  func.func @transform_13(%arg0: i32, %arg1: i32) -> (i32, i32, i32) {
    %c0_i32 = arith.constant 0 : i32
    %c0_i32_0 = arith.constant 0 : i32
    %c0_i32_1 = arith.constant 0 : i32
    return %arg0, %c0_i32, %c0_i32_0 : i32, i32, i32
  }
}

</mosaic_0001>

<llo_original>
// kernel: transformation_net_forward.1
$region0: #{transformation_net_forward.1}
  #allocation0 [shape = 'u32[]', space=smem, size = 0x4, offset = 0x4, fixed_abs, tag = 'smem constant byte address 0x4 - core index']
  #allocation1 [shape = 'u32[144,128]{1,0:T(1,128)}', space=vmem, size = 0x12000, scoped, tag = 'internal scratch']
  #allocation2 [shape = 'bf16[8,128]{1,0:T(8,128)(2,1)}', space=vmem, size = 0x800, scoped, tag = 'scratch operand']
  %s0 = inlined_call_operand.vmem [shape: f32[8,512,3], index: 0, kind: input, shape index: {}]
  %s1 = inlined_call_operand.vmem [shape: f32[3,64], index: 1, kind: input, shape index: {}]
  %s2 = inlined_call_operand.vmem [shape: f32[1,64], index: 2, kind: input, shape index: {}]
  %s3 = inlined_call_operand.vmem [shape: bf16[64,128], index: 3, kind: input, shape index: {}]
  %s4 = inlined_call_operand.vmem [shape: f32[1,128], index: 4, kind: input, shape index: {}]
  %s5 = inlined_call_operand.vmem [shape: bf16[128,128], index: 5, kind: input, shape index: {}]
  %s6 = inlined_call_operand.vmem [shape: bf16[1,128], index: 6, kind: input, shape index: {}]
  %s7 = inlined_call_operand.vmem [shape: bf16[128,512], index: 7, kind: input, shape index: {}]
  %s8 = inlined_call_operand.vmem [shape: f32[1,512], index: 8, kind: input, shape index: {}]
  %s9 = inlined_call_operand.vmem [shape: bf16[512,256], index: 9, kind: input, shape index: {}]
  %s10 = inlined_call_operand.vmem [shape: f32[1,256], index: 10, kind: input, shape index: {}]
  %s11 = inlined_call_operand.vmem [shape: bf16[256,128], index: 11, kind: input, shape index: {}]
  %s12 = inlined_call_operand.vmem [shape: f32[1,128], index: 12, kind: input, shape index: {}]
  %s13 = inlined_call_operand.vmem [shape: f32[2,4,128], index: 13, kind: output, shape index: {}]
  %s14 = sld [smem:[#allocation0]]
  $region131: #{transformation_net_forward.1} parent=0
    _
  %s16 = ssub.s32 1, %s14
  %s17 = scalar_select 0, %s16, %s14
  $region1: #{transformation_net_forward.1} parent=0
    #allocation3 [shape = 'u8[1048576]{0}', space=vmem, size = 0x100000, scoped, tag = 'input window, operand 0']
    loop: start=0, step=1, limit=6
    $region2: #{transformation_net_forward.1} parent=1 // loop_pre_header
      _
    $region3: #{transformation_net_forward.1} parent=1 // loop_header
      %s19 = sphi 0, %s23
      %p20 = scmp.ge.s32.totalorder %s19, 6
      %s26 = sphi 0, %s38
      %s27 = sphi 0, %s34
      %s28 = sphi 0, %s26
      %s29 = sphi 0, %s27
      %s30 = sphi 0, %s28
      %s31 = sphi 0, %s29
      %s43 = sphi 0, %s45
      %s46 = sphi 0, %s43
      %s47 = sphi 0, %s46
      %s63 = sphi 0, %s47
      %s67 = sphi 0, %s67
      %s69 = sphi 0, %s67
      %s70 = sphi 0, %s69
      %s84 = sphi 0, %s70
      %s88 = sphi 0, %s88
      %s90 = sphi 0, %s88
      %s91 = sphi 0, %s90
      %s105 = sphi 0, %s91
      %s109 = sphi 0, %s109
      %s111 = sphi 0, %s109
      %s112 = sphi 0, %s111
      %s126 = sphi 0, %s112
      %s130 = sphi 0, %s130
      %s132 = sphi 0, %s130
      %s133 = sphi 0, %s132
      %s147 = sphi 0, %s133
      %s151 = sphi 0, %s151
      %s153 = sphi 0, %s151
      %s154 = sphi 0, %s153
      %s168 = sphi 0, %s154
      %s172 = sphi 0, %s172
      %s174 = sphi 0, %s172
      %s175 = sphi 0, %s174
      %s189 = sphi 0, %s175
      %s193 = sphi 0, %s193
      %s195 = sphi 0, %s193
      %s196 = sphi 0, %s195
      %s210 = sphi 0, %s196
      %s214 = sphi 0, %s214
      %s216 = sphi 0, %s214
      %s217 = sphi 0, %s216
      %s231 = sphi 0, %s217
      %s235 = sphi 0, %s235
      %s237 = sphi 0, %s235
      %s238 = sphi 0, %s237
      %s252 = sphi 0, %s238
      %s256 = sphi 0, %s256
      %s258 = sphi 0, %s256
      %s259 = sphi 0, %s258
      %s273 = sphi 0, %s259
      %s277 = sphi 0, %s277
      %s279 = sphi 0, %s277
      %s280 = sphi 0, %s279
      %s294 = sphi 0, %s280
      %s298 = sphi 0, %s298
      %s300 = sphi 0, %s298
      %s301 = sphi 0, %s300
      %s315 = sphi 0, %s301
      %s321 = sphi 0, %s323
      %s324 = sphi 0, %s321
      %s325 = sphi 0, %s324
      %s341 = sphi 0, %s325
    $region4: #{transformation_net_forward.1} parent=1 // loop_header_branch
      %22 = sbr.rel (%p20) target = $region8
    $region5: #{transformation_net_forward.1} parent=1 // loop_body
      %s24 = ssub.s32 %s19, 1
      %s25 = ssub.s32 %s19, 2
      %s32 = sadd.s32 1, %s27
      %p33 = scmp.ge.s32.totalorder %s32, 2
      %s34 = scalar_select %p33, 0, %s32
      %s35 = sadd.s32 1, %s26
      %s36 = scalar_select %p33, %s35, %s26
      %p37 = scmp.ge.s32.totalorder %s36, 2
      %s38 = scalar_select %p37, 0, %s36
      %s39 = ssub.s32 %s26, %s38
      %s40 = ssub.s32 %s27, %s34
      %s41 = sor.u32 %s39, %s40
      %p42 = scmp.eq.s32.totalorder %s41, 0
      %s44 = sadd.s32 %s43, 1
      %s45 = scalar_select %p42, %s43, %s44
      %p48 = pneg %p42
      %p49 = scmp.eq.s32.totalorder %s19, 3
      %p50 = por %p48, %p49
      %p51 = scmp.ne.s32.totalorder %s43, %s46
      %p52 = scmp.eq.s32.totalorder %s19, 0
      %p53 = por %p51, %p52
      %p54 = scmp.ne.s32.totalorder %s43, %s46
      %p55 = scmp.eq.s32.totalorder %s24, 3
      %p56 = por %p54, %p55
      %p57 = scmp.ne.s32.totalorder %s46, %s47
      %p58 = scmp.eq.s32.totalorder %s24, 0
      %p59 = por %p57, %p58
      %p60 = scmp.ne.s32.totalorder %s46, %s47
      %p61 = scmp.eq.s32.totalorder %s25, 3
      %p62 = por %p60, %p61
      %p64 = scmp.ne.s32.totalorder %s47, %s63
      %p65 = scmp.eq.s32.totalorder %s25, 0
      %p66 = por %p64, %p65
      %s68 = sadd.s32 %s67, 1
      %p71 = scmp.eq.s32.totalorder %s19, 3
      %p72 = scmp.ne.s32.totalorder %s67, %s69
      %p73 = scmp.eq.s32.totalorder %s19, 0
      %p74 = por %p72, %p73
      %p75 = scmp.ne.s32.totalorder %s67, %s69
      %p76 = scmp.eq.s32.totalorder %s24, 3
      %p77 = por %p75, %p76
      %p78 = scmp.ne.s32.totalorder %s69, %s70
      %p79 = scmp.eq.s32.totalorder %s24, 0
      %p80 = por %p78, %p79
      %p81 = scmp.ne.s32.totalorder %s69, %s70
      %p82 = scmp.eq.s32.totalorder %s25, 3
      %p83 = por %p81, %p82
      %p85 = scmp.ne.s32.totalorder %s70, %s84
      %p86 = scmp.eq.s32.totalorder %s25, 0
      %p87 = por %p85, %p86
      %s89 = sadd.s32 %s88, 1
      %p92 = scmp.eq.s32.totalorder %s19, 3
      %p93 = scmp.ne.s32.totalorder %s88, %s90
      %p94 = scmp.eq.s32.totalorder %s19, 0
      %p95 = por %p93, %p94
      %p96 = scmp.ne.s32.totalorder %s88, %s90
      %p97 = scmp.eq.s32.totalorder %s24, 3
      %p98 = por %p96, %p97
      %p99 = scmp.ne.s32.totalorder %s90, %s91
      %p100 = scmp.eq.s32.totalorder %s24, 0
      %p101 = por %p99, %p100
      %p102 = scmp.ne.s32.totalorder %s90, %s91
      %p103 = scmp.eq.s32.totalorder %s25, 3
      %p104 = por %p102, %p103
      %p106 = scmp.ne.s32.totalorder %s91, %s105
      %p107 = scmp.eq.s32.totalorder %s25, 0
      %p108 = por %p106, %p107
      %s110 = sadd.s32 %s109, 1
      %p113 = scmp.eq.s32.totalorder %s19, 3
      %p114 = scmp.ne.s32.totalorder %s109, %s111
      %p115 = scmp.eq.s32.totalorder %s19, 0
      %p116 = por %p114, %p115
      %p117 = scmp.ne.s32.totalorder %s109, %s111
      %p118 = scmp.eq.s32.totalorder %s24, 3
      %p119 = por %p117, %p118
      %p120 = scmp.ne.s32.totalorder %s111, %s112
      %p121 = scmp.eq.s32.totalorder %s24, 0
      %p122 = por %p120, %p121
      %p123 = scmp.ne.s32.totalorder %s111, %s112
      %p124 = scmp.eq.s32.totalorder %s25, 3
      %p125 = por %p123, %p124
      %p127 = scmp.ne.s32.totalorder %s112, %s126
      %p128 = scmp.eq.s32.totalorder %s25, 0
      %p129 = por %p127, %p128
      %s131 = sadd.s32 %s130, 1
      %p134 = scmp.eq.s32.totalorder %s19, 3
      %p135 = scmp.ne.s32.totalorder %s130, %s132
      %p136 = scmp.eq.s32.totalorder %s19, 0
      %p137 = por %p135, %p136
      %p138 = scmp.ne.s32.totalorder %s130, %s132
      %p139 = scmp.eq.s32.totalorder %s24, 3
      %p140 = por %p138, %p139
      %p141 = scmp.ne.s32.totalorder %s132, %s133
      %p142 = scmp.eq.s32.totalorder %s24, 0
      %p143 = por %p141, %p142
      %p144 = scmp.ne.s32.totalorder %s132, %s133
      %p145 = scmp.eq.s32.totalorder %s25, 3
      %p146 = por %p144, %p145
      %p148 = scmp.ne.s32.totalorder %s133, %s147
      %p149 = scmp.eq.s32.totalorder %s25, 0
      %p150 = por %p148, %p149
      %s152 = sadd.s32 %s151, 1
      %p155 = scmp.eq.s32.totalorder %s19, 3
      %p156 = scmp.ne.s32.totalorder %s151, %s153
      %p157 = scmp.eq.s32.totalorder %s19, 0
      %p158 = por %p156, %p157
      %p159 = scmp.ne.s32.totalorder %s151, %s153
      %p160 = scmp.eq.s32.totalorder %s24, 3
      %p161 = por %p159, %p160
      %p162 = scmp.ne.s32.totalorder %s153, %s154
      %p163 = scmp.eq.s32.totalorder %s24, 0
      %p164 = por %p162, %p163
      %p165 = scmp.ne.s32.totalorder %s153, %s154
      %p166 = scmp.eq.s32.totalorder %s25, 3
      %p167 = por %p165, %p166
      %p169 = scmp.ne.s32.totalorder %s154, %s168
      %p170 = scmp.eq.s32.totalorder %s25, 0
      %p171 = por %p169, %p170
      %s173 = sadd.s32 %s172, 1
      %p176 = scmp.eq.s32.totalorder %s19, 3
      %p177 = scmp.ne.s32.totalorder %s172, %s174
      %p178 = scmp.eq.s32.totalorder %s19, 0
      %p179 = por %p177, %p178
      %p180 = scmp.ne.s32.totalorder %s172, %s174
      %p181 = scmp.eq.s32.totalorder %s24, 3
      %p182 = por %p180, %p181
      %p183 = scmp.ne.s32.totalorder %s174, %s175
      %p184 = scmp.eq.s32.totalorder %s24, 0
      %p185 = por %p183, %p184
      %p186 = scmp.ne.s32.totalorder %s174, %s175
      %p187 = scmp.eq.s32.totalorder %s25, 3
      %p188 = por %p186, %p187
      %p190 = scmp.ne.s32.totalorder %s175, %s189
      %p191 = scmp.eq.s32.totalorder %s25, 0
      %p192 = por %p190, %p191
      %s194 = sadd.s32 %s193, 1
      %p197 = scmp.eq.s32.totalorder %s19, 3
      %p198 = scmp.ne.s32.totalorder %s193, %s195
      %p199 = scmp.eq.s32.totalorder %s19, 0
      %p200 = por %p198, %p199
      %p201 = scmp.ne.s32.totalorder %s193, %s195
      %p202 = scmp.eq.s32.totalorder %s24, 3
      %p203 = por %p201, %p202
      %p204 = scmp.ne.s32.totalorder %s195, %s196
      %p205 = scmp.eq.s32.totalorder %s24, 0
      %p206 = por %p204, %p205
      %p207 = scmp.ne.s32.totalorder %s195, %s196
      %p208 = scmp.eq.s32.totalorder %s25, 3
      %p209 = por %p207, %p208
      %p211 = scmp.ne.s32.totalorder %s196, %s210
      %p212 = scmp.eq.s32.totalorder %s25, 0
      %p213 = por %p211, %p212
      %s215 = sadd.s32 %s214, 1
      %p218 = scmp.eq.s32.totalorder %s19, 3
      %p219 = scmp.ne.s32.totalorder %s214, %s216
      %p220 = scmp.eq.s32.totalorder %s19, 0
      %p221 = por %p219, %p220
      %p222 = scmp.ne.s32.totalorder %s214, %s216
      %p223 = scmp.eq.s32.totalorder %s24, 3
      %p224 = por %p222, %p223
      %p225 = scmp.ne.s32.totalorder %s216, %s217
      %p226 = scmp.eq.s32.totalorder %s24, 0
      %p227 = por %p225, %p226
      %p228 = scmp.ne.s32.totalorder %s216, %s217
      %p229 = scmp.eq.s32.totalorder %s25, 3
      %p230 = por %p228, %p229
      %p232 = scmp.ne.s32.totalorder %s217, %s231
      %p233 = scmp.eq.s32.totalorder %s25, 0
      %p234 = por %p232, %p233
      %s236 = sadd.s32 %s235, 1
      %p239 = scmp.eq.s32.totalorder %s19, 3
      %p240 = scmp.ne.s32.totalorder %s235, %s237
      %p241 = scmp.eq.s32.totalorder %s19, 0
      %p242 = por %p240, %p241
      %p243 = scmp.ne.s32.totalorder %s235, %s237
      %p244 = scmp.eq.s32.totalorder %s24, 3
      %p245 = por %p243, %p244
      %p246 = scmp.ne.s32.totalorder %s237, %s238
      %p247 = scmp.eq.s32.totalorder %s24, 0
      %p248 = por %p246, %p247
      %p249 = scmp.ne.s32.totalorder %s237, %s238
      %p250 = scmp.eq.s32.totalorder %s25, 3
      %p251 = por %p249, %p250
      %p253 = scmp.ne.s32.totalorder %s238, %s252
      %p254 = scmp.eq.s32.totalorder %s25, 0
      %p255 = por %p253, %p254
      %s257 = sadd.s32 %s256, 1
      %p260 = scmp.eq.s32.totalorder %s19, 3
      %p261 = scmp.ne.s32.totalorder %s256, %s258
      %p262 = scmp.eq.s32.totalorder %s19, 0
      %p263 = por %p261, %p262
      %p264 = scmp.ne.s32.totalorder %s256, %s258
      %p265 = scmp.eq.s32.totalorder %s24, 3
      %p266 = por %p264, %p265
      %p267 = scmp.ne.s32.totalorder %s258, %s259
      %p268 = scmp.eq.s32.totalorder %s24, 0
      %p269 = por %p267, %p268
      %p270 = scmp.ne.s32.totalorder %s258, %s259
      %p271 = scmp.eq.s32.totalorder %s25, 3
      %p272 = por %p270, %p271
      %p274 = scmp.ne.s32.totalorder %s259, %s273
      %p275 = scmp.eq.s32.totalorder %s25, 0
      %p276 = por %p274, %p275
      %s278 = sadd.s32 %s277, 1
      %p281 = scmp.eq.s32.totalorder %s19, 3
      %p282 = scmp.ne.s32.totalorder %s277, %s279
      %p283 = scmp.eq.s32.totalorder %s19, 0
      %p284 = por %p282, %p283
      %p285 = scmp.ne.s32.totalorder %s277, %s279
      %p286 = scmp.eq.s32.totalorder %s24, 3
      %p287 = por %p285, %p286
      %p288 = scmp.ne.s32.totalorder %s279, %s280
      %p289 = scmp.eq.s32.totalorder %s24, 0
      %p290 = por %p288, %p289
      %p291 = scmp.ne.s32.totalorder %s279, %s280
      %p292 = scmp.eq.s32.totalorder %s25, 3
      %p293 = por %p291, %p292
      %p295 = scmp.ne.s32.totalorder %s280, %s294
      %p296 = scmp.eq.s32.totalorder %s25, 0
      %p297 = por %p295, %p296
      %s299 = sadd.s32 %s298, 1
      %p302 = scmp.eq.s32.totalorder %s19, 3
      %p303 = scmp.ne.s32.totalorder %s298, %s300
      %p304 = scmp.eq.s32.totalorder %s19, 0
      %p305 = por %p303, %p304
      %p306 = scmp.ne.s32.totalorder %s298, %s300
      %p307 = scmp.eq.s32.totalorder %s24, 3
      %p308 = por %p306, %p307
      %p309 = scmp.ne.s32.totalorder %s300, %s301
      %p310 = scmp.eq.s32.totalorder %s24, 0
      %p311 = por %p309, %p310
      %p312 = scmp.ne.s32.totalorder %s300, %s301
      %p313 = scmp.eq.s32.totalorder %s25, 3
      %p314 = por %p312, %p313
      %p316 = scmp.ne.s32.totalorder %s301, %s315
      %p317 = scmp.eq.s32.totalorder %s25, 0
      %p318 = por %p316, %p317
      %s319 = ssub.s32 %s26, %s38
      %p320 = scmp.eq.s32.totalorder %s319, 0
      %s322 = sadd.s32 %s321, 1
      %s323 = scalar_select %p320, %s321, %s322
      %p326 = pneg %p320
      %p327 = scmp.eq.s32.totalorder %s19, 3
      %p328 = por %p326, %p327
      %p329 = scmp.ne.s32.totalorder %s321, %s324
      %p330 = scmp.eq.s32.totalorder %s19, 0
      %p331 = por %p329, %p330
      %p332 = scmp.ne.s32.totalorder %s321, %s324
      %p333 = scmp.eq.s32.totalorder %s24, 3
      %p334 = por %p332, %p333
      %p335 = scmp.ne.s32.totalorder %s324, %s325
      %p336 = scmp.eq.s32.totalorder %s24, 0
      %p337 = por %p335, %p336
      %p338 = scmp.ne.s32.totalorder %s324, %s325
      %p339 = scmp.eq.s32.totalorder %s25, 3
      %p340 = por %p338, %p339
      %p342 = scmp.ne.s32.totalorder %s325, %s341
      %p343 = scmp.eq.s32.totalorder %s25, 0
      %p344 = por %p342, %p343
      %p345 = scmp.le.s32.totalorder 1, %s19
      %p346 = scmp.lt.s32.totalorder %s19, 5
      %p347 = pnand %p345, %p346
      %p348 = pneg %p347
      // Predicated region
      $region9: #{transformation_net_forward.1} parent=5 // pred_check
        _
      $region10: #{transformation_net_forward.1} parent=5 // pred_check_branch
        %350 = sbr.rel (%p347) target = $region12
      $region11: #{transformation_net_forward.1} parent=5 // pred_region
        %s351 = ssub.s32 %s19, 1
        // Predicated region
        $region13: #{transformation_net_forward.1} parent=11 // pred_check
          %p352 = pneg %p80
        $region14: #{transformation_net_forward.1} parent=11 // pred_check_branch
          %354 = sbr.rel (%p352) target = $region16
        $region15: #{transformation_net_forward.1} parent=11 // pred_region
          _
        $region16: #{transformation_net_forward.1} parent=11 // pred_fallthru
          _
        // Predicated region
        $region17: #{transformation_net_forward.1} parent=11 // pred_check
          %p355 = pneg %p101
        $region18: #{transformation_net_forward.1} parent=11 // pred_check_branch
          %357 = sbr.rel (%p355) target = $region20
        $region19: #{transformation_net_forward.1} parent=11 // pred_region
          _
        $region20: #{transformation_net_forward.1} parent=11 // pred_fallthru
          _
        // Predicated region
        $region21: #{transformation_net_forward.1} parent=11 // pred_check
          %p358 = pneg %p122
        $region22: #{transformation_net_forward.1} parent=11 // pred_check_branch
          %360 = sbr.rel (%p358) target = $region24
        $region23: #{transformation_net_forward.1} parent=11 // pred_region
          _
        $region24: #{transformation_net_forward.1} parent=11 // pred_fallthru
          _
        // Predicated region
        $region25: #{transformation_net_forward.1} parent=11 // pred_check
          %p361 = pneg %p143
        $region26: #{transformation_net_forward.1} parent=11 // pred_check_branch
          %363 = sbr.rel (%p361) target = $region28
        $region27: #{transformation_net_forward.1} parent=11 // pred_region
          _
        $region28: #{transformation_net_forward.1} parent=11 // pred_fallthru
          _
        // Predicated region
        $region29: #{transformation_net_forward.1} parent=11 // pred_check
          %p364 = pneg %p164
        $region30: #{transformation_net_forward.1} parent=11 // pred_check_branch
          %366 = sbr.rel (%p364) target = $region32
        $region31: #{transformation_net_forward.1} parent=11 // pred_region
          _
        $region32: #{transformation_net_forward.1} parent=11 // pred_fallthru
          _
        // Predicated region
        $region33: #{transformation_net_forward.1} parent=11 // pred_check
          %p367 = pneg %p185
        $region34: #{transformation_net_forward.1} parent=11 // pred_check_branch
          %369 = sbr.rel (%p367) target = $region36
        $region35: #{transformation_net_forward.1} parent=11 // pred_region
          _
        $region36: #{transformation_net_forward.1} parent=11 // pred_fallthru
          _
        // Predicated region
        $region37: #{transformation_net_forward.1} parent=11 // pred_check
          %p370 = pneg %p206
        $region38: #{transformation_net_forward.1} parent=11 // pred_check_branch
          %372 = sbr.rel (%p370) target = $region40
        $region39: #{transformation_net_forward.1} parent=11 // pred_region
          _
        $region40: #{transformation_net_forward.1} parent=11 // pred_fallthru
          _
        // Predicated region
        $region41: #{transformation_net_forward.1} parent=11 // pred_check
          %p373 = pneg %p227
        $region42: #{transformation_net_forward.1} parent=11 // pred_check_branch
          %375 = sbr.rel (%p373) target = $region44
        $region43: #{transformation_net_forward.1} parent=11 // pred_region
          _
        $region44: #{transformation_net_forward.1} parent=11 // pred_fallthru
          _
        // Predicated region
        $region45: #{transformation_net_forward.1} parent=11 // pred_check
          %p376 = pneg %p248
        $region46: #{transformation_net_forward.1} parent=11 // pred_check_branch
          %378 = sbr.rel (%p376) target = $region48
        $region47: #{transformation_net_forward.1} parent=11 // pred_region
          _
        $region48: #{transformation_net_forward.1} parent=11 // pred_fallthru
          _
        // Predicated region
        $region49: #{transformation_net_forward.1} parent=11 // pred_check
          %p379 = pneg %p269
        $region50: #{transformation_net_forward.1} parent=11 // pred_check_branch
          %381 = sbr.rel (%p379) target = $region52
        $region51: #{transformation_net_forward.1} parent=11 // pred_region
          _
        $region52: #{transformation_net_forward.1} parent=11 // pred_fallthru
          _
        // Predicated region
        $region53: #{transformation_net_forward.1} parent=11 // pred_check
          %p382 = pneg %p290
        $region54: #{transformation_net_forward.1} parent=11 // pred_check_branch
          %384 = sbr.rel (%p382) target = $region56
        $region55: #{transformation_net_forward.1} parent=11 // pred_region
          _
        $region56: #{transformation_net_forward.1} parent=11 // pred_fallthru
          _
        // Predicated region
        $region57: #{transformation_net_forward.1} parent=11 // pred_check
          %p385 = pneg %p311
        $region58: #{transformation_net_forward.1} parent=11 // pred_check_branch
          %387 = sbr.rel (%p385) target = $region60
        $region59: #{transformation_net_forward.1} parent=11 // pred_region
          _
        $region60: #{transformation_net_forward.1} parent=11 // pred_fallthru
          _
      $region12: #{transformation_net_forward.1} parent=5 // pred_fallthru
        _
      %p388 = scmp.lt.s32.totalorder %s19, 4
      // Predicated region
      $region61: #{transformation_net_forward.1} parent=5 // pred_check
        %p389 = pneg %p388
      $region62: #{transformation_net_forward.1} parent=5 // pred_check_branch
        %391 = sbr.rel (%p389) target = $region64
      $region63: #{transformation_net_forward.1} parent=5 // pred_region
        // Predicated region
        $region65: #{transformation_net_forward.1} parent=63 // pred_check
          %p392 = pneg %p53
        $region66: #{transformation_net_forward.1} parent=63 // pred_check_branch
          %394 = sbr.rel (%p392) target = $region68
        $region67: #{transformation_net_forward.1} parent=63 // pred_region
          %s395 = sand.u32 %s43, 1
          %s396 = sand.u32 %s43, 1
          %s397 = smul.addr %s396, 1024
          %s398 = scalar_lea.vmem [#allocation3], %s397
          %s399 = smul.u32 4, %s26
          %s400 = smul.u32 32, %s27
          %s401 = smul.addr %s399, 64
          %s402 = sadd.s32 %s400, %s401
          %s403 = smul.addr %s402, 8
          %s404 = scalar_lea.vmem %s0, %s403
          // Predicated region
          $region69: #{transformation_net_forward.1} parent=67 // pred_check
            _
          $region70: #{transformation_net_forward.1} parent=67 // pred_check_branch
            %406 = sbr.rel (0) target = $region72
          $region71: #{transformation_net_forward.1} parent=67 // pred_region
            // Predicated region
            $region73: #{transformation_net_forward.1} parent=71 // pred_check
              _
            $region74: #{transformation_net_forward.1} parent=71 // pred_check_branch
              %408 = sbr.rel (0) target = $region76
            $region75: #{transformation_net_forward.1} parent=71 // pred_region
              // Predicated region
              $region88: #{transformation_net_forward.1} parent=75 // pred_check
                _
              $region89: #{transformation_net_forward.1} parent=75 // pred_check_branch
                %677 = sbr.rel (0) target = $region91
              $region90: #{transformation_net_forward.1} parent=75 // pred_region
                loop: start=0, step=1, limit=1
                $region92: #{transformation_net_forward.1} parent=90 // loop_pre_header
                  _
                $region93: #{transformation_net_forward.1} parent=90 // loop_header
                  %s679 = sphi 0, %s683
                  %p680 = scmp.ge.s32.totalorder %s679, 1
                  %s684 = sphi %s404, %s404
                  %s685 = sphi %s398, %s398
                $region94: #{transformation_net_forward.1} parent=90 // loop_header_branch
                  %682 = sbr.rel (%p680) target = $region98
                $region95: #{transformation_net_forward.1} parent=90 // loop_body
                  %v686 = vld [vmem:[%s684] sm:$0xff]
                  %687 = vst [vmem:[%s685] sm:$0xff] %v686
                  %v688 = vld [vmem:[%s684 + $0x8] sm:$0xff]
                  %689 = vst [vmem:[%s685 + $0x8] sm:$0xff] %v688
                  %v690 = vld [vmem:[%s684 + $0x10] sm:$0xff]
                  %691 = vst [vmem:[%s685 + $0x10] sm:$0xff] %v690
                  %v692 = vld [vmem:[%s684 + $0x18] sm:$0xff]
                  %693 = vst [vmem:[%s685 + $0x18] sm:$0xff] %v692
                  %v694 = vld [vmem:[%s684 + $0x20] sm:$0xff]
                  %695 = vst [vmem:[%s685 + $0x20] sm:$0xff] %v694
                  %v696 = vld [vmem:[%s684 + $0x28] sm:$0xff]
                  %697 = vst [vmem:[%s685 + $0x28] sm:$0xff] %v696
                  %v698 = vld [vmem:[%s684 + $0x30] sm:$0xff]
                  %699 = vst [vmem:[%s685 + $0x30] sm:$0xff] %v698
                  %v700 = vld [vmem:[%s684 + $0x38] sm:$0xff]
                  %701 = vst [vmem:[%s685 + $0x38] sm:$0xff] %v700
                  %v702 = vld [vmem:[%s684 + $0x40] sm:$0xff]
                  %703 = vst [vmem:[%s685 + $0x40] sm:$0xff] %v702
                  %v704 = vld [vmem:[%s684 + $0x48] sm:$0xff]
                  %705 = vst [vmem:[%s685 + $0x48] sm:$0xff] %v704
                  %v706 = vld [vmem:[%s684 + $0x50] sm:$0xff]
                  %707 = vst [vmem:[%s685 + $0x50] sm:$0xff] %v706
                  %v708 = vld [vmem:[%s684 + $0x58] sm:$0xff]
                  %709 = vst [vmem:[%s685 + $0x58] sm:$0xff] %v708
                  %v710 = vld [vmem:[%s684 + $0x60] sm:$0xff]
                  %711 = vst [vmem:[%s685 + $0x60] sm:$0xff] %v710
                  %v712 = vld [vmem:[%s684 + $0x68] sm:$0xff]
                  %713 = vst [vmem:[%s685 + $0x68] sm:$0xff] %v712
                  %v714 = vld [vmem:[%s684 + $0x70] sm:$0xff]
                  %715 = vst [vmem:[%s685 + $0x70] sm:$0xff] %v714
                  %v716 = vld [vmem:[%s684 + $0x78] sm:$0xff]
                  %717 = vst [vmem:[%s685 + $0x78] sm:$0xff] %v716
                  %v718 = vld [vmem:[%s684 + $0x80] sm:$0xff]
                  %719 = vst [vmem:[%s685 + $0x80] sm:$0xff] %v718
                  %v720 = vld [vmem:[%s684 + $0x88] sm:$0xff]
                  %721 = vst [vmem:[%s685 + $0x88] sm:$0xff] %v720
                  %v722 = vld [vmem:[%s684 + $0x90] sm:$0xff]
                  %723 = vst [vmem:[%s685 + $0x90] sm:$0xff] %v722
                  %v724 = vld [vmem:[%s684 + $0x98] sm:$0xff]
                  %725 = vst [vmem:[%s685 + $0x98] sm:$0xff] %v724
                  %v726 = vld [vmem:[%s684 + $0xa0] sm:$0xff]
                  %727 = vst [vmem:[%s685 + $0xa0] sm:$0xff] %v726
                  %v728 = vld [vmem:[%s684 + $0xa8] sm:$0xff]
                  %729 = vst [vmem:[%s685 + $0xa8] sm:$0xff] %v728
                  %v730 = vld [vmem:[%s684 + $0xb0] sm:$0xff]
                  %731 = vst [vmem:[%s685 + $0xb0] sm:$0xff] %v730
                  %v732 = vld [vmem:[%s684 + $0xb8] sm:$0xff]
                  %733 = vst [vmem:[%s685 + $0xb8] sm:$0xff] %v732
                  %v734 = vld [vmem:[%s684 + $0xc0] sm:$0xff]
                  %735 = vst [vmem:[%s685 + $0xc0] sm:$0xff] %v734
                  %v736 = vld [vmem:[%s684 + $0xc8] sm:$0xff]
                  %737 = vst [vmem:[%s685 + $0xc8] sm:$0xff] %v736
                  %v738 = vld [vmem:[%s684 + $0xd0] sm:$0xff]
                  %739 = vst [vmem:[%s685 + $0xd0] sm:$0xff] %v738
                  %v740 = vld [vmem:[%s684 + $0xd8] sm:$0xff]
                  %741 = vst [vmem:[%s685 + $0xd8] sm:$0xff] %v740
                  %v742 = vld [vmem:[%s684 + $0xe0] sm:$0xff]
                  %743 = vst [vmem:[%s685 + $0xe0] sm:$0xff] %v742
                  %v744 = vld [vmem:[%s684 + $0xe8] sm:$0xff]
                  %745 = vst [vmem:[%s685 + $0xe8] sm:$0xff] %v744
                  %v746 = vld [vmem:[%s684 + $0xf0] sm:$0xff]
                  %747 = vst [vmem:[%s685 + $0xf0] sm:$0xff] %v746
                  %v748 = vld [vmem:[%s684 + $0xf8] sm:$0xff]
                  %749 = vst [vmem:[%s685 + $0xf8] sm:$0xff] %v748
                  %v750 = vld [vmem:[%s684 + $0x200] sm:$0xff]
                  %751 = vst [vmem:[%s685 + $0x100] sm:$0xff] %v750
                  %v752 = vld [vmem:[%s684 + $0x208] sm:$0xff]
                  %753 = vst [vmem:[%s685 + $0x108] sm:$0xff] %v752
                  %v754 = vld [vmem:[%s684 + $0x210] sm:$0xff]
                  %755 = vst [vmem:[%s685 + $0x110] sm:$0xff] %v754
                  %v756 = vld [vmem:[%s684 + $0x218] sm:$0xff]
                  %757 = vst [vmem:[%s685 + $0x118] sm:$0xff] %v756
                  %v758 = vld [vmem:[%s684 + $0x220] sm:$0xff]
                  %759 = vst [vmem:[%s685 + $0x120] sm:$0xff] %v758
                  %v760 = vld [vmem:[%s684 + $0x228] sm:$0xff]
                  %761 = vst [vmem:[%s685 + $0x128] sm:$0xff] %v760
                  %v762 = vld [vmem:[%s684 + $0x230] sm:$0xff]
                  %763 = vst [vmem:[%s685 + $0x130] sm:$0xff] %v762
                  %v764 = vld [vmem:[%s684 + $0x238] sm:$0xff]
                  %765 = vst [vmem:[%s685 + $0x138] sm:$0xff] %v764
                  %v766 = vld [vmem:[%s684 + $0x240] sm:$0xff]
                  %767 = vst [vmem:[%s685 + $0x140] sm:$0xff] %v766
                  %v768 = vld [vmem:[%s684 + $0x248] sm:$0xff]
                  %769 = vst [vmem:[%s685 + $0x148] sm:$0xff] %v768
                  %v770 = vld [vmem:[%s684 + $0x250] sm:$0xff]
                  %771 = vst [vmem:[%s685 + $0x150] sm:$0xff] %v770
                  %v772 = vld [vmem:[%s684 + $0x258] sm:$0xff]
                  %773 = vst [vmem:[%s685 + $0x158] sm:$0xff] %v772
                  %v774 = vld [vmem:[%s684 + $0x260] sm:$0xff]
                  %775 = vst [vmem:[%s685 + $0x160] sm:$0xff] %v774
                  %v776 = vld [vmem:[%s684 + $0x268] sm:$0xff]
                  %777 = vst [vmem:[%s685 + $0x168] sm:$0xff] %v776
                  %v778 = vld [vmem:[%s684 + $0x270] sm:$0xff]
                  %779 = vst [vmem:[%s685 + $0x170] sm:$0xff] %v778
                  %v780 = vld [vmem:[%s684 + $0x278] sm:$0xff]
                  %781 = vst [vmem:[%s685 + $0x178] sm:$0xff] %v780
                  %v782 = vld [vmem:[%s684 + $0x280] sm:$0xff]
                  %783 = vst [vmem:[%s685 + $0x180] sm:$0xff] %v782
                  %v784 = vld [vmem:[%s684 + $0x288] sm:$0xff]
                  %785 = vst [vmem:[%s685 + $0x188] sm:$0xff] %v784
                  %v786 = vld [vmem:[%s684 + $0x290] sm:$0xff]
                  %787 = vst [vmem:[%s685 + $0x190] sm:$0xff] %v786
                  %v788 = vld [vmem:[%s684 + $0x298] sm:$0xff]
                  %789 = vst [vmem:[%s685 + $0x198] sm:$0xff] %v788
                  %v790 = vld [vmem:[%s684 + $0x2a0] sm:$0xff]
                  %791 = vst [vmem:[%s685 + $0x1a0] sm:$0xff] %v790
                  %v792 = vld [vmem:[%s684 + $0x2a8] sm:$0xff]
                  %793 = vst [vmem:[%s685 + $0x1a8] sm:$0xff] %v792
                  %v794 = vld [vmem:[%s684 + $0x2b0] sm:$0xff]
                  %795 = vst [vmem:[%s685 + $0x1b0] sm:$0xff] %v794
                  %v796 = vld [vmem:[%s684 + $0x2b8] sm:$0xff]
                  %797 = vst [vmem:[%s685 + $0x1b8] sm:$0xff] %v796
                  %v798 = vld [vmem:[%s684 + $0x2c0] sm:$0xff]
                  %799 = vst [vmem:[%s685 + $0x1c0] sm:$0xff] %v798
                  %v800 = vld [vmem:[%s684 + $0x2c8] sm:$0xff]
                  %801 = vst [vmem:[%s685 + $0x1c8] sm:$0xff] %v800
                  %v802 = vld [vmem:[%s684 + $0x2d0] sm:$0xff]
                  %803 = vst [vmem:[%s685 + $0x1d0] sm:$0xff] %v802
                  %v804 = vld [vmem:[%s684 + $0x2d8] sm:$0xff]
                  %805 = vst [vmem:[%s685 + $0x1d8] sm:$0xff] %v804
                  %v806 = vld [vmem:[%s684 + $0x2e0] sm:$0xff]
                  %807 = vst [vmem:[%s685 + $0x1e0] sm:$0xff] %v806
                  %v808 = vld [vmem:[%s684 + $0x2e8] sm:$0xff]
                  %809 = vst [vmem:[%s685 + $0x1e8] sm:$0xff] %v808
                  %v810 = vld [vmem:[%s684 + $0x2f0] sm:$0xff]
                  %811 = vst [vmem:[%s685 + $0x1f0] sm:$0xff] %v810
                  %v812 = vld [vmem:[%s684 + $0x2f8] sm:$0xff]
                  %813 = vst [vmem:[%s685 + $0x1f8] sm:$0xff] %v812
                  %v814 = vld [vmem:[%s684 + $0x400] sm:$0xff]
                  %815 = vst [vmem:[%s685 + $0x200] sm:$0xff] %v814
                  %v816 = vld [vmem:[%s684 + $0x408] sm:$0xff]
                  %817 = vst [vmem:[%s685 + $0x208] sm:$0xff] %v816
                  %v818 = vld [vmem:[%s684 + $0x410] sm:$0xff]
                  %819 = vst [vmem:[%s685 + $0x210] sm:$0xff] %v818
                  %v820 = vld [vmem:[%s684 + $0x418] sm:$0xff]
                  %821 = vst [vmem:[%s685 + $0x218] sm:$0xff] %v820
                  %v822 = vld [vmem:[%s684 + $0x420] sm:$0xff]
                  %823 = vst [vmem:[%s685 + $0x220] sm:$0xff] %v822
                  %v824 = vld [vmem:[%s684 + $0x428] sm:$0xff]
                  %825 = vst [vmem:[%s685 + $0x228] sm:$0xff] %v824
                  %v826 = vld [vmem:[%s684 + $0x430] sm:$0xff]
                  %827 = vst [vmem:[%s685 + $0x230] sm:$0xff] %v826
                  %v828 = vld [vmem:[%s684 + $0x438] sm:$0xff]
                  %829 = vst [vmem:[%s685 + $0x238] sm:$0xff] %v828
                  %v830 = vld [vmem:[%s684 + $0x440] sm:$0xff]
                  %831 = vst [vmem:[%s685 + $0x240] sm:$0xff] %v830
                  %v832 = vld [vmem:[%s684 + $0x448] sm:$0xff]
                  %833 = vst [vmem:[%s685 + $0x248] sm:$0xff] %v832
                  %v834 = vld [vmem:[%s684 + $0x450] sm:$0xff]
                  %835 = vst [vmem:[%s685 + $0x250] sm:$0xff] %v834
                  %v836 = vld [vmem:[%s684 + $0x458] sm:$0xff]
                  %837 = vst [vmem:[%s685 + $0x258] sm:$0xff] %v836
                  %v838 = vld [vmem:[%s684 + $0x460] sm:$0xff]
                  %839 = vst [vmem:[%s685 + $0x260] sm:$0xff] %v838
                  %v840 = vld [vmem:[%s684 + $0x468] sm:$0xff]
                  %841 = vst [vmem:[%s685 + $0x268] sm:$0xff] %v840
                  %v842 = vld [vmem:[%s684 + $0x470] sm:$0xff]
                  %843 = vst [vmem:[%s685 + $0x270] sm:$0xff] %v842
                  %v844 = vld [vmem:[%s684 + $0x478] sm:$0xff]
                  %845 = vst [vmem:[%s685 + $0x278] sm:$0xff] %v844
                  %v846 = vld [vmem:[%s684 + $0x480] sm:$0xff]
                  %847 = vst [vmem:[%s685 + $0x280] sm:$0xff] %v846
                  %v848 = vld [vmem:[%s684 + $0x488] sm:$0xff]
                  %849 = vst [vmem:[%s685 + $0x288] sm:$0xff] %v848
                  %v850 = vld [vmem:[%s684 + $0x490] sm:$0xff]
                  %851 = vst [vmem:[%s685 + $0x290] sm:$0xff] %v850
                  %v852 = vld [vmem:[%s684 + $0x498] sm:$0xff]
                  %853 = vst [vmem:[%s685 + $0x298] sm:$0xff] %v852
                  %v854 = vld [vmem:[%s684 + $0x4a0] sm:$0xff]
                  %855 = vst [vmem:[%s685 + $0x2a0] sm:$0xff] %v854
                  %v856 = vld [vmem:[%s684 + $0x4a8] sm:$0xff]
                  %857 = vst [vmem:[%s685 + $0x2a8] sm:$0xff] %v856
                  %v858 = vld [vmem:[%s684 + $0x4b0] sm:$0xff]
                  %859 = vst [vmem:[%s685 + $0x2b0] sm:$0xff] %v858
                  %v860 = vld [vmem:[%s684 + $0x4b8] sm:$0xff]
                  %861 = vst [vmem:[%s685 + $0x2b8] sm:$0xff] %v860
                  %v862 = vld [vmem:[%s684 + $0x4c0] sm:$0xff]
                  %863 = vst [vmem:[%s685 + $0x2c0] sm:$0xff] %v862
                  %v864 = vld [vmem:[%s684 + $0x4c8] sm:$0xff]
                  %865 = vst [vmem:[%s685 + $0x2c8] sm:$0xff] %v864
                  %v866 = vld [vmem:[%s684 + $0x4d0] sm:$0xff]
                  %867 = vst [vmem:[%s685 + $0x2d0] sm:$0xff] %v866
                  %v868 = vld [vmem:[%s684 + $0x4d8] sm:$0xff]
                  %869 = vst [vmem:[%s685 + $0x2d8] sm:$0xff] %v868
                  %v870 = vld [vmem:[%s684 + $0x4e0] sm:$0xff]
                  %871 = vst [vmem:[%s685 + $0x2e0] sm:$0xff] %v870
                  %v872 = vld [vmem:[%s684 + $0x4e8] sm:$0xff]
                  %873 = vst [vmem:[%s685 + $0x2e8] sm:$0xff] %v872
                  %v874 = vld [vmem:[%s684 + $0x4f0] sm:$0xff]
                  %875 = vst [vmem:[%s685 + $0x2f0] sm:$0xff] %v874
                  %v876 = vld [vmem:[%s684 + $0x4f8] sm:$0xff]
                  %877 = vst [vmem:[%s685 + $0x2f8] sm:$0xff] %v876
                  %v878 = vld [vmem:[%s684 + $0x600] sm:$0xff]
                  %879 = vst [vmem:[%s685 + $0x300] sm:$0xff] %v878
                  %v880 = vld [vmem:[%s684 + $0x608] sm:$0xff]
                  %881 = vst [vmem:[%s685 + $0x308] sm:$0xff] %v880
                  %v882 = vld [vmem:[%s684 + $0x610] sm:$0xff]
                  %883 = vst [vmem:[%s685 + $0x310] sm:$0xff] %v882
                  %v884 = vld [vmem:[%s684 + $0x618] sm:$0xff]
                  %885 = vst [vmem:[%s685 + $0x318] sm:$0xff] %v884
                  %v886 = vld [vmem:[%s684 + $0x620] sm:$0xff]
                  %887 = vst [vmem:[%s685 + $0x320] sm:$0xff] %v886
                  %v888 = vld [vmem:[%s684 + $0x628] sm:$0xff]
                  %889 = vst [vmem:[%s685 + $0x328] sm:$0xff] %v888
                  %v890 = vld [vmem:[%s684 + $0x630] sm:$0xff]
                  %891 = vst [vmem:[%s685 + $0x330] sm:$0xff] %v890
                  %v892 = vld [vmem:[%s684 + $0x638] sm:$0xff]
                  %893 = vst [vmem:[%s685 + $0x338] sm:$0xff] %v892
                  %v894 = vld [vmem:[%s684 + $0x640] sm:$0xff]
                  %895 = vst [vmem:[%s685 + $0x340] sm:$0xff] %v894
                  %v896 = vld [vmem:[%s684 + $0x648] sm:$0xff]
                  %897 = vst [vmem:[%s685 + $0x348] sm:$0xff] %v896
                  %v898 = vld [vmem:[%s684 + $0x650] sm:$0xff]
                  %899 = vst [vmem:[%s685 + $0x350] sm:$0xff] %v898
                  %v900 = vld [vmem:[%s684 + $0x658] sm:$0xff]
                  %901 = vst [vmem:[%s685 + $0x358] sm:$0xff] %v900
                  %v902 = vld [vmem:[%s684 + $0x660] sm:$0xff]
                  %903 = vst [vmem:[%s685 + $0x360] sm:$0xff] %v902
                  %v904 = vld [vmem:[%s684 + $0x668] sm:$0xff]
                  %905 = vst [vmem:[%s685 + $0x368] sm:$0xff] %v904
                  %v906 = vld [vmem:[%s684 + $0x670] sm:$0xff]
                  %907 = vst [vmem:[%s685 + $0x370] sm:$0xff] %v906
                  %v908 = vld [vmem:[%s684 + $0x678] sm:$0xff]
                  %909 = vst [vmem:[%s685 + $0x378] sm:$0xff] %v908
                  %v910 = vld [vmem:[%s684 + $0x680] sm:$0xff]
                  %911 = vst [vmem:[%s685 + $0x380] sm:$0xff] %v910
                  %v912 = vld [vmem:[%s684 + $0x688] sm:$0xff]
                  %913 = vst [vmem:[%s685 + $0x388] sm:$0xff] %v912
                  %v914 = vld [vmem:[%s684 + $0x690] sm:$0xff]
                  %915 = vst [vmem:[%s685 + $0x390] sm:$0xff] %v914
                  %v916 = vld [vmem:[%s684 + $0x698] sm:$0xff]
                  %917 = vst [vmem:[%s685 + $0x398] sm:$0xff] %v916
                  %v918 = vld [vmem:[%s684 + $0x6a0] sm:$0xff]
                  %919 = vst [vmem:[%s685 + $0x3a0] sm:$0xff] %v918
                  %v920 = vld [vmem:[%s684 + $0x6a8] sm:$0xff]
                  %921 = vst [vmem:[%s685 + $0x3a8] sm:$0xff] %v920
                  %v922 = vld [vmem:[%s684 + $0x6b0] sm:$0xff]
                  %923 = vst [vmem:[%s685 + $0x3b0] sm:$0xff] %v922
                  %v924 = vld [vmem:[%s684 + $0x6b8] sm:$0xff]
                  %925 = vst [vmem:[%s685 + $0x3b8] sm:$0xff] %v924
                  %v926 = vld [vmem:[%s684 + $0x6c0] sm:$0xff]
                  %927 = vst [vmem:[%s685 + $0x3c0] sm:$0xff] %v926
                  %v928 = vld [vmem:[%s684 + $0x6c8] sm:$0xff]
                  %929 = vst [vmem:[%s685 + $0x3c8] sm:$0xff] %v928
                  %v930 = vld [vmem:[%s684 + $0x6d0] sm:$0xff]
                  %931 = vst [vmem:[%s685 + $0x3d0] sm:$0xff] %v930
                  %v932 = vld [vmem:[%s684 + $0x6d8] sm:$0xff]
                  %933 = vst [vmem:[%s685 + $0x3d8] sm:$0xff] %v932
                  %v934 = vld [vmem:[%s684 + $0x6e0] sm:$0xff]
                  %935 = vst [vmem:[%s685 + $0x3e0] sm:$0xff] %v934
                  %v936 = vld [vmem:[%s684 + $0x6e8] sm:$0xff]
                  %937 = vst [vmem:[%s685 + $0x3e8] sm:$0xff] %v936
                  %v938 = vld [vmem:[%s684 + $0x6f0] sm:$0xff]
                  %939 = vst [vmem:[%s685 + $0x3f0] sm:$0xff] %v938
                  %v940 = vld [vmem:[%s684 + $0x6f8] sm:$0xff]
                  %941 = vst [vmem:[%s685 + $0x3f8] sm:$0xff] %v940
                $region96: #{transformation_net_forward.1} parent=90 // loop_footer
                  %s683 = sadd.s32 1, %s679
                $region97: #{transformation_net_forward.1} parent=90 // loop_footer_branch
                  %678 = sbr.rel target = $region93
                $region98: #{transformation_net_forward.1} parent=90 // loop_exit
                  _
              $region91: #{transformation_net_forward.1} parent=75 // pred_fallthru
                _
              // Predicated region
              $region99: #{transformation_net_forward.1} parent=75 // pred_check
                _
              $region100: #{transformation_net_forward.1} parent=75 // pred_check_branch
                %943 = sbr.rel target = $region102
              $region101: #{transformation_net_forward.1} parent=75 // pred_region
                _
              $region102: #{transformation_net_forward.1} parent=75 // pred_fallthru
                _
            $region76: #{transformation_net_forward.1} parent=71 // pred_fallthru
              _
            // Predicated region
            $region77: #{transformation_net_forward.1} parent=71 // pred_check
              _
            $region78: #{transformation_net_forward.1} parent=71 // pred_check_branch
              %410 = sbr.rel target = $region80
            $region79: #{transformation_net_forward.1} parent=71 // pred_region
              loop: start=0, step=1, limit=1
              $region81: #{transformation_net_forward.1} parent=79 // loop_pre_header
                _
              $region82: #{transformation_net_forward.1} parent=79 // loop_header
                %s413 = sphi 0, %s417
                %p414 = scmp.ge.s32.totalorder %s413, 1
                %s418 = sphi %s404, %s404
                %s419 = sphi %s398, %s398
              $region83: #{transformation_net_forward.1} parent=79 // loop_header_branch
                %416 = sbr.rel (%p414) target = $region87
              $region84: #{transformation_net_forward.1} parent=79 // loop_body
                %v420 = vld [vmem:[%s418] sm:$0xff]
                %421 = vst [vmem:[%s419] sm:$0xff] %v420
                %v422 = vld [vmem:[%s418 + $0x8] sm:$0xff]
                %423 = vst [vmem:[%s419 + $0x8] sm:$0xff] %v422
                %v424 = vld [vmem:[%s418 + $0x10] sm:$0xff]
                %425 = vst [vmem:[%s419 + $0x10] sm:$0xff] %v424
                %v426 = vld [vmem:[%s418 + $0x18] sm:$0xff]
                %427 = vst [vmem:[%s419 + $0x18] sm:$0xff] %v426
                %v428 = vld [vmem:[%s418 + $0x20] sm:$0xff]
                %429 = vst [vmem:[%s419 + $0x20] sm:$0xff] %v428
                %v430 = vld [vmem:[%s418 + $0x28] sm:$0xff]
                %431 = vst [vmem:[%s419 + $0x28] sm:$0xff] %v430
                %v432 = vld [vmem:[%s418 + $0x30] sm:$0xff]
                %433 = vst [vmem:[%s419 + $0x30] sm:$0xff] %v432
                %v434 = vld [vmem:[%s418 + $0x38] sm:$0xff]
                %435 = vst [vmem:[%s419 + $0x38] sm:$0xff] %v434
                %v436 = vld [vmem:[%s418 + $0x40] sm:$0xff]
                %437 = vst [vmem:[%s419 + $0x40] sm:$0xff] %v436
                %v438 = vld [vmem:[%s418 + $0x48] sm:$0xff]
                %439 = vst [vmem:[%s419 + $0x48] sm:$0xff] %v438
                %v440 = vld [vmem:[%s418 + $0x50] sm:$0xff]
                %441 = vst [vmem:[%s419 + $0x50] sm:$0xff] %v440
                %v442 = vld [vmem:[%s418 + $0x58] sm:$0xff]
                %443 = vst [vmem:[%s419 + $0x58] sm:$0xff] %v442
                %v444 = vld [vmem:[%s418 + $0x60] sm:$0xff]
                %445 = vst [vmem:[%s419 + $0x60] sm:$0xff] %v444
                %v446 = vld [vmem:[%s418 + $0x68] sm:$0xff]
                %447 = vst [vmem:[%s419 + $0x68] sm:$0xff] %v446
                %v448 = vld [vmem:[%s418 + $0x70] sm:$0xff]
                %449 = vst [vmem:[%s419 + $0x70] sm:$0xff] %v448
                %v450 = vld [vmem:[%s418 + $0x78] sm:$0xff]
                %451 = vst [vmem:[%s419 + $0x78] sm:$0xff] %v450
                %v452 = vld [vmem:[%s418 + $0x80] sm:$0xff]
                %453 = vst [vmem:[%s419 + $0x80] sm:$0xff] %v452
                %v454 = vld [vmem:[%s418 + $0x88] sm:$0xff]
                %455 = vst [vmem:[%s419 + $0x88] sm:$0xff] %v454
                %v456 = vld [vmem:[%s418 + $0x90] sm:$0xff]
                %457 = vst [vmem:[%s419 + $0x90] sm:$0xff] %v456
                %v458 = vld [vmem:[%s418 + $0x98] sm:$0xff]
                %459 = vst [vmem:[%s419 + $0x98] sm:$0xff] %v458
                %v460 = vld [vmem:[%s418 + $0xa0] sm:$0xff]
                %461 = vst [vmem:[%s419 + $0xa0] sm:$0xff] %v460
                %v462 = vld [vmem:[%s418 + $0xa8] sm:$0xff]
                %463 = vst [vmem:[%s419 + $0xa8] sm:$0xff] %v462
                %v464 = vld [vmem:[%s418 + $0xb0] sm:$0xff]
                %465 = vst [vmem:[%s419 + $0xb0] sm:$0xff] %v464
                %v466 = vld [vmem:[%s418 + $0xb8] sm:$0xff]
                %467 = vst [vmem:[%s419 + $0xb8] sm:$0xff] %v466
                %v468 = vld [vmem:[%s418 + $0xc0] sm:$0xff]
                %469 = vst [vmem:[%s419 + $0xc0] sm:$0xff] %v468
                %v470 = vld [vmem:[%s418 + $0xc8] sm:$0xff]
                %471 = vst [vmem:[%s419 + $0xc8] sm:$0xff] %v470
                %v472 = vld [vmem:[%s418 + $0xd0] sm:$0xff]
                %473 = vst [vmem:[%s419 + $0xd0] sm:$0xff] %v472
                %v474 = vld [vmem:[%s418 + $0xd8] sm:$0xff]
                %475 = vst [vmem:[%s419 + $0xd8] sm:$0xff] %v474
                %v476 = vld [vmem:[%s418 + $0xe0] sm:$0xff]
                %477 = vst [vmem:[%s419 + $0xe0] sm:$0xff] %v476
                %v478 = vld [vmem:[%s418 + $0xe8] sm:$0xff]
                %479 = vst [vmem:[%s419 + $0xe8] sm:$0xff] %v478
                %v480 = vld [vmem:[%s418 + $0xf0] sm:$0xff]
                %481 = vst [vmem:[%s419 + $0xf0] sm:$0xff] %v480
                %v482 = vld [vmem:[%s418 + $0xf8] sm:$0xff]
                %483 = vst [vmem:[%s419 + $0xf8] sm:$0xff] %v482
                %v484 = vld [vmem:[%s418 + $0x200] sm:$0xff]
                %485 = vst [vmem:[%s419 + $0x100] sm:$0xff] %v484
                %v486 = vld [vmem:[%s418 + $0x208] sm:$0xff]
                %487 = vst [vmem:[%s419 + $0x108] sm:$0xff] %v486
                %v488 = vld [vmem:[%s418 + $0x210] sm:$0xff]
                %489 = vst [vmem:[%s419 + $0x110] sm:$0xff] %v488
                %v490 = vld [vmem:[%s418 + $0x218] sm:$0xff]
                %491 = vst [vmem:[%s419 + $0x118] sm:$0xff] %v490
                %v492 = vld [vmem:[%s418 + $0x220] sm:$0xff]
                %493 = vst [vmem:[%s419 + $0x120] sm:$0xff] %v492
                %v494 = vld [vmem:[%s418 + $0x228] sm:$0xff]
                %495 = vst [vmem:[%s419 + $0x128] sm:$0xff] %v494
                %v496 = vld [vmem:[%s418 + $0x230] sm:$0xff]
                %497 = vst [vmem:[%s419 + $0x130] sm:$0xff] %v496
                %v498 = vld [vmem:[%s418 + $0x238] sm:$0xff]
                %499 = vst [vmem:[%s419 + $0x138] sm:$0xff] %v498
                %v500 = vld [vmem:[%s418 + $0x240] sm:$0xff]
                %501 = vst [vmem:[%s419 + $0x140] sm:$0xff] %v500
                %v502 = vld [vmem:[%s418 + $0x248] sm:$0xff]
                %503 = vst [vmem:[%s419 + $0x148] sm:$0xff] %v502
                %v504 = vld [vmem:[%s418 + $0x250] sm:$0xff]
                %505 = vst [vmem:[%s419 + $0x150] sm:$0xff] %v504
                %v506 = vld [vmem:[%s418 + $0x258] sm:$0xff]
                %507 = vst [vmem:[%s419 + $0x158] sm:$0xff] %v506
                %v508 = vld [vmem:[%s418 + $0x260] sm:$0xff]
                %509 = vst [vmem:[%s419 + $0x160] sm:$0xff] %v508
                %v510 = vld [vmem:[%s418 + $0x268] sm:$0xff]
                %511 = vst [vmem:[%s419 + $0x168] sm:$0xff] %v510
                %v512 = vld [vmem:[%s418 + $0x270] sm:$0xff]
                %513 = vst [vmem:[%s419 + $0x170] sm:$0xff] %v512
                %v514 = vld [vmem:[%s418 + $0x278] sm:$0xff]
                %515 = vst [vmem:[%s419 + $0x178] sm:$0xff] %v514
                %v516 = vld [vmem:[%s418 + $0x280] sm:$0xff]
                %517 = vst [vmem:[%s419 + $0x180] sm:$0xff] %v516
                %v518 = vld [vmem:[%s418 + $0x288] sm:$0xff]
                %519 = vst [vmem:[%s419 + $0x188] sm:$0xff] %v518
                %v520 = vld [vmem:[%s418 + $0x290] sm:$0xff]
                %521 = vst [vmem:[%s419 + $0x190] sm:$0xff] %v520
                %v522 = vld [vmem:[%s418 + $0x298] sm:$0xff]
                %523 = vst [vmem:[%s419 + $0x198] sm:$0xff] %v522
                %v524 = vld [vmem:[%s418 + $0x2a0] sm:$0xff]
                %525 = vst [vmem:[%s419 + $0x1a0] sm:$0xff] %v524
                %v526 = vld [vmem:[%s418 + $0x2a8] sm:$0xff]
                %527 = vst [vmem:[%s419 + $0x1a8] sm:$0xff] %v526
                %v528 = vld [vmem:[%s418 + $0x2b0] sm:$0xff]
                %529 = vst [vmem:[%s419 + $0x1b0] sm:$0xff] %v528
                %v530 = vld [vmem:[%s418 + $0x2b8] sm:$0xff]
                %531 = vst [vmem:[%s419 + $0x1b8] sm:$0xff] %v530
                %v532 = vld [vmem:[%s418 + $0x2c0] sm:$0xff]
                %533 = vst [vmem:[%s419 + $0x1c0] sm:$0xff] %v532
                %v534 = vld [vmem:[%s418 + $0x2c8] sm:$0xff]
                %535 = vst [vmem:[%s419 + $0x1c8] sm:$0xff] %v534
                %v536 = vld [vmem:[%s418 + $0x2d0] sm:$0xff]
                %537 = vst [vmem:[%s419 + $0x1d0] sm:$0xff] %v536
                %v538 = vld [vmem:[%s418 + $0x2d8] sm:$0xff]
                %539 = vst [vmem:[%s419 + $0x1d8] sm:$0xff] %v538
                %v540 = vld [vmem:[%s418 + $0x2e0] sm:$0xff]
                %541 = vst [vmem:[%s419 + $0x1e0] sm:$0xff] %v540
                %v542 = vld [vmem:[%s418 + $0x2e8] sm:$0xff]
                %543 = vst [vmem:[%s419 + $0x1e8] sm:$0xff] %v542
                %v544 = vld [vmem:[%s418 + $0x2f0] sm:$0xff]
                %545 = vst [vmem:[%s419 + $0x1f0] sm:$0xff] %v544
                %v546 = vld [vmem:[%s418 + $0x2f8] sm:$0xff]
                %547 = vst [vmem:[%s419 + $0x1f8] sm:$0xff] %v546
                %v548 = vld [vmem:[%s418 + $0x400] sm:$0xff]
                %549 = vst [vmem:[%s419 + $0x200] sm:$0xff] %v548
                %v550 = vld [vmem:[%s418 + $0x408] sm:$0xff]
                %551 = vst [vmem:[%s419 + $0x208] sm:$0xff] %v550
                %v552 = vld [vmem:[%s418 + $0x410] sm:$0xff]
                %553 = vst [vmem:[%s419 + $0x210] sm:$0xff] %v552
                %v554 = vld [vmem:[%s418 + $0x418] sm:$0xff]
                %555 = vst [vmem:[%s419 + $0x218] sm:$0xff] %v554
                %v556 = vld [vmem:[%s418 + $0x420] sm:$0xff]
                %557 = vst [vmem:[%s419 + $0x220] sm:$0xff] %v556
                %v558 = vld [vmem:[%s418 + $0x428] sm:$0xff]
                %559 = vst [vmem:[%s419 + $0x228] sm:$0xff] %v558
                %v560 = vld [vmem:[%s418 + $0x430] sm:$0xff]
                %561 = vst [vmem:[%s419 + $0x230] sm:$0xff] %v560
                %v562 = vld [vmem:[%s418 + $0x438] sm:$0xff]
                %563 = vst [vmem:[%s419 + $0x238] sm:$0xff] %v562
                %v564 = vld [vmem:[%s418 + $0x440] sm:$0xff]
                %565 = vst [vmem:[%s419 + $0x240] sm:$0xff] %v564
                %v566 = vld [vmem:[%s418 + $0x448] sm:$0xff]
                %567 = vst [vmem:[%s419 + $0x248] sm:$0xff] %v566
                %v568 = vld [vmem:[%s418 + $0x450] sm:$0xff]
                %569 = vst [vmem:[%s419 + $0x250] sm:$0xff] %v568
                %v570 = vld [vmem:[%s418 + $0x458] sm:$0xff]
                %571 = vst [vmem:[%s419 + $0x258] sm:$0xff] %v570
                %v572 = vld [vmem:[%s418 + $0x460] sm:$0xff]
                %573 = vst [vmem:[%s419 + $0x260] sm:$0xff] %v572
                %v574 = vld [vmem:[%s418 + $0x468] sm:$0xff]
                %575 = vst [vmem:[%s419 + $0x268] sm:$0xff] %v574
                %v576 = vld [vmem:[%s418 + $0x470] sm:$0xff]
                %577 = vst [vmem:[%s419 + $0x270] sm:$0xff] %v576
                %v578 = vld [vmem:[%s418 + $0x478] sm:$0xff]
                %579 = vst [vmem:[%s419 + $0x278] sm:$0xff] %v578
                %v580 = vld [vmem:[%s418 + $0x480] sm:$0xff]
                %581 = vst [vmem:[%s419 + $0x280] sm:$0xff] %v580
                %v582 = vld [vmem:[%s418 + $0x488] sm:$0xff]
                %583 = vst [vmem:[%s419 + $0x288] sm:$0xff] %v582
                %v584 = vld [vmem:[%s418 + $0x490] sm:$0xff]
                %585 = vst [vmem:[%s419 + $0x290] sm:$0xff] %v584
                %v586 = vld [vmem:[%s418 + $0x498] sm:$0xff]
                %587 = vst [vmem:[%s419 + $0x298] sm:$0xff] %v586
                %v588 = vld [vmem:[%s418 + $0x4a0] sm:$0xff]
                %589 = vst [vmem:[%s419 + $0x2a0] sm:$0xff] %v588
                %v590 = vld [vmem:[%s418 + $0x4a8] sm:$0xff]
                %591 = vst [vmem:[%s419 + $0x2a8] sm:$0xff] %v590
                %v592 = vld [vmem:[%s418 + $0x4b0] sm:$0xff]
                %593 = vst [vmem:[%s419 + $0x2b0] sm:$0xff] %v592
                %v594 = vld [vmem:[%s418 + $0x4b8] sm:$0xff]
                %595 = vst [vmem:[%s419 + $0x2b8] sm:$0xff] %v594
                %v596 = vld [vmem:[%s418 + $0x4c0] sm:$0xff]
                %597 = vst [vmem:[%s419 + $0x2c0] sm:$0xff] %v596
                %v598 = vld [vmem:[%s418 + $0x4c8] sm:$0xff]
                %599 = vst [vmem:[%s419 + $0x2c8] sm:$0xff] %v598
                %v600 = vld [vmem:[%s418 + $0x4d0] sm:$0xff]
                %601 = vst [vmem:[%s419 + $0x2d0] sm:$0xff] %v600
                %v602 = vld [vmem:[%s418 + $0x4d8] sm:$0xff]
                %603 = vst [vmem:[%s419 + $0x2d8] sm:$0xff] %v602
                %v604 = vld [vmem:[%s418 + $0x4e0] sm:$0xff]
                %605 = vst [vmem:[%s419 + $0x2e0] sm:$0xff] %v604
                %v606 = vld [vmem:[%s418 + $0x4e8] sm:$0xff]
                %607 = vst [vmem:[%s419 + $0x2e8] sm:$0xff] %v606
                %v608 = vld [vmem:[%s418 + $0x4f0] sm:$0xff]
                %609 = vst [vmem:[%s419 + $0x2f0] sm:$0xff] %v608
                %v610 = vld [vmem:[%s418 + $0x4f8] sm:$0xff]
                %611 = vst [vmem:[%s419 + $0x2f8] sm:$0xff] %v610
                %v612 = vld [vmem:[%s418 + $0x600] sm:$0xff]
                %613 = vst [vmem:[%s419 + $0x300] sm:$0xff] %v612
                %v614 = vld [vmem:[%s418 + $0x608] sm:$0xff]
                %615 = vst [vmem:[%s419 + $0x308] sm:$0xff] %v614
                %v616 = vld [vmem:[%s418 + $0x610] sm:$0xff]
                %617 = vst [vmem:[%s419 + $0x310] sm:$0xff] %v616
                %v618 = vld [vmem:[%s418 + $0x618] sm:$0xff]
                %619 = vst [vmem:[%s419 + $0x318] sm:$0xff] %v618
                %v620 = vld [vmem:[%s418 + $0x620] sm:$0xff]
                %621 = vst [vmem:[%s419 + $0x320] sm:$0xff] %v620
                %v622 = vld [vmem:[%s418 + $0x628] sm:$0xff]
                %623 = vst [vmem:[%s419 + $0x328] sm:$0xff] %v622
                %v624 = vld [vmem:[%s418 + $0x630] sm:$0xff]
                %625 = vst [vmem:[%s419 + $0x330] sm:$0xff] %v624
                %v626 = vld [vmem:[%s418 + $0x638] sm:$0xff]
                %627 = vst [vmem:[%s419 + $0x338] sm:$0xff] %v626
                %v628 = vld [vmem:[%s418 + $0x640] sm:$0xff]
                %629 = vst [vmem:[%s419 + $0x340] sm:$0xff] %v628
                %v630 = vld [vmem:[%s418 + $0x648] sm:$0xff]
                %631 = vst [vmem:[%s419 + $0x348] sm:$0xff] %v630
                %v632 = vld [vmem:[%s418 + $0x650] sm:$0xff]
                %633 = vst [vmem:[%s419 + $0x350] sm:$0xff] %v632
                %v634 = vld [vmem:[%s418 + $0x658] sm:$0xff]
                %635 = vst [vmem:[%s419 + $0x358] sm:$0xff] %v634
                %v636 = vld [vmem:[%s418 + $0x660] sm:$0xff]
                %637 = vst [vmem:[%s419 + $0x360] sm:$0xff] %v636
                %v638 = vld [vmem:[%s418 + $0x668] sm:$0xff]
                %639 = vst [vmem:[%s419 + $0x368] sm:$0xff] %v638
                %v640 = vld [vmem:[%s418 + $0x670] sm:$0xff]
                %641 = vst [vmem:[%s419 + $0x370] sm:$0xff] %v640
                %v642 = vld [vmem:[%s418 + $0x678] sm:$0xff]
                %643 = vst [vmem:[%s419 + $0x378] sm:$0xff] %v642
                %v644 = vld [vmem:[%s418 + $0x680] sm:$0xff]
                %645 = vst [vmem:[%s419 + $0x380] sm:$0xff] %v644
                %v646 = vld [vmem:[%s418 + $0x688] sm:$0xff]
                %647 = vst [vmem:[%s419 + $0x388] sm:$0xff] %v646
                %v648 = vld [vmem:[%s418 + $0x690] sm:$0xff]
                %649 = vst [vmem:[%s419 + $0x390] sm:$0xff] %v648
                %v650 = vld [vmem:[%s418 + $0x698] sm:$0xff]
                %651 = vst [vmem:[%s419 + $0x398] sm:$0xff] %v650
                %v652 = vld [vmem:[%s418 + $0x6a0] sm:$0xff]
                %653 = vst [vmem:[%s419 + $0x3a0] sm:$0xff] %v652
                %v654 = vld [vmem:[%s418 + $0x6a8] sm:$0xff]
                %655 = vst [vmem:[%s419 + $0x3a8] sm:$0xff] %v654
                %v656 = vld [vmem:[%s418 + $0x6b0] sm:$0xff]
                %657 = vst [vmem:[%s419 + $0x3b0] sm:$0xff] %v656
                %v658 = vld [vmem:[%s418 + $0x6b8] sm:$0xff]
                %659 = vst [vmem:[%s419 + $0x3b8] sm:$0xff] %v658
                %v660 = vld [vmem:[%s418 + $0x6c0] sm:$0xff]
                %661 = vst [vmem:[%s419 + $0x3c0] sm:$0xff] %v660
                %v662 = vld [vmem:[%s418 + $0x6c8] sm:$0xff]
                %663 = vst [vmem:[%s419 + $0x3c8] sm:$0xff] %v662
                %v664 = vld [vmem:[%s418 + $0x6d0] sm:$0xff]
                %665 = vst [vmem:[%s419 + $0x3d0] sm:$0xff] %v664
                %v666 = vld [vmem:[%s418 + $0x6d8] sm:$0xff]
                %667 = vst [vmem:[%s419 + $0x3d8] sm:$0xff] %v666
                %v668 = vld [vmem:[%s418 + $0x6e0] sm:$0xff]
                %669 = vst [vmem:[%s419 + $0x3e0] sm:$0xff] %v668
                %v670 = vld [vmem:[%s418 + $0x6e8] sm:$0xff]
                %671 = vst [vmem:[%s419 + $0x3e8] sm:$0xff] %v670
                %v672 = vld [vmem:[%s418 + $0x6f0] sm:$0xff]
                %673 = vst [vmem:[%s419 + $0x3f0] sm:$0xff] %v672
                %v674 = vld [vmem:[%s418 + $0x6f8] sm:$0xff]
                %675 = vst [vmem:[%s419 + $0x3f8] sm:$0xff] %v674
              $region85: #{transformation_net_forward.1} parent=79 // loop_footer
                %s417 = sadd.s32 1, %s413
              $region86: #{transformation_net_forward.1} parent=79 // loop_footer_branch
                %412 = sbr.rel target = $region82
              $region87: #{transformation_net_forward.1} parent=79 // loop_exit
                _
            $region80: #{transformation_net_forward.1} parent=71 // pred_fallthru
              _
          $region72: #{transformation_net_forward.1} parent=67 // pred_fallthru
            _
          %944 = vnop
        $region68: #{transformation_net_forward.1} parent=63 // pred_fallthru
          _
      $region64: #{transformation_net_forward.1} parent=5 // pred_fallthru
        _
      %p945 = scmp.le.s32.totalorder 1, %s19
      %p946 = scmp.lt.s32.totalorder %s19, 5
      %p947 = pnand %p945, %p946
      %p948 = pneg %p947
      // Predicated region
      $region103: #{transformation_net_forward.1} parent=5 // pred_check
        _
      $region104: #{transformation_net_forward.1} parent=5 // pred_check_branch
        %950 = sbr.rel (%p947) target = $region106
      $region105: #{transformation_net_forward.1} parent=5 // pred_region
        %s951 = ssub.s32 %s19, 1
        %s952 = sand.u32 %s46, 1
        %s953 = sand.u32 %s46, 1
        %s954 = smul.addr %s953, 1024
        %s955 = scalar_lea.vmem [#allocation3], %s954
        // Predicated region
        $region107: #{transformation_net_forward.1} parent=105 // pred_check
          %p956 = pneg %p59
        $region108: #{transformation_net_forward.1} parent=105 // pred_check_branch
          %958 = sbr.rel (%p956) target = $region110
        $region109: #{transformation_net_forward.1} parent=105 // pred_region
          _
        $region110: #{transformation_net_forward.1} parent=105 // pred_fallthru
          _
        %s959 = sand.u32 %s46, 1
        %s960 = sand.u32 %s46, 1
        %s961 = smul.addr %s960, 1024
        %s962 = scalar_lea.vmem [#allocation3], %s961
        %p963 = pneg %p59
        %p964 = pneg %p56
        %p965 = pneg %p80
        %p966 = pneg %p77
        %p967 = pneg %p101
        %p968 = pneg %p98
        %p969 = pneg %p122
        %p970 = pneg %p119
        %p971 = pneg %p143
        %p972 = pneg %p140
        %p973 = pneg %p164
        %p974 = pneg %p161
        %p975 = pneg %p185
        %p976 = pneg %p182
        %p977 = pneg %p206
        %p978 = pneg %p203
        %p979 = pneg %p227
        %p980 = pneg %p224
        %p981 = pneg %p248
        %p982 = pneg %p245
        %p983 = pneg %p269
        %p984 = pneg %p266
        %p985 = pneg %p290
        %p986 = pneg %p287
        %p987 = pneg %p311
        %p988 = pneg %p308
        %p989 = pneg %p337
        %p990 = pneg %p334
        %p991 = scmp.lt.s32.totalorder %s28, 1
        %s992 = scalar_select %p991, %s28, 1
        %s993 = smul.addr %s992, 4
        %s994 = scalar_lea.vmem %s13, %s993
        %s995 = smul.u32 4, %s28
        %s996 = smul.u32 32, %s29
        %p997 = scmp.lt.s32.totalorder %s28, 1
        %s998 = scalar_select %p997, %s28, 1
        %s999 = smul.addr %s998, 4
        %s1000 = scalar_lea.vmem %s13, %s999
        %p1002 = scmp.eq.s32.totalorder %s29, 0
        // Predicated region
        $region111: #{transformation_net_forward.1} parent=105 // pred_check
          %p1003 = pneg %p1002
        $region112: #{transformation_net_forward.1} parent=105 // pred_check_branch
          %1005 = sbr.rel (%p1003) target = $region114
        $region113: #{transformation_net_forward.1} parent=105 // pred_region
          %1006 = vst [vmem:[#allocation2] sm:$0xf] 0
        $region114: #{transformation_net_forward.1} parent=105 // pred_fallthru
          _
        %v1007 = vld [vmem:[%s955] sm:$0xff]
        %v1008 = vld [vmem:[%s955 + $0x8] sm:$0xff]
        %v1009 = vld [vmem:[%s955 + $0x10] sm:$0xff]
        %v1010 = vld [vmem:[%s955 + $0x18] sm:$0xff]
        %v1011 = vld [vmem:[%s955 + $0x20] sm:$0xff]
        %v1012 = vld [vmem:[%s955 + $0x28] sm:$0xff]
        %v1013 = vld [vmem:[%s955 + $0x30] sm:$0xff]
        %v1014 = vld [vmem:[%s955 + $0x38] sm:$0xff]
        %v1015 = vld [vmem:[%s955 + $0x40] sm:$0xff]
        %v1016 = vld [vmem:[%s955 + $0x48] sm:$0xff]
        %v1017 = vld [vmem:[%s955 + $0x50] sm:$0xff]
        %v1018 = vld [vmem:[%s955 + $0x58] sm:$0xff]
        %v1019 = vld [vmem:[%s955 + $0x60] sm:$0xff]
        %v1020 = vld [vmem:[%s955 + $0x68] sm:$0xff]
        %v1021 = vld [vmem:[%s955 + $0x70] sm:$0xff]
        %v1022 = vld [vmem:[%s955 + $0x78] sm:$0xff]
        %v1023 = vld [vmem:[%s955 + $0x80] sm:$0xff]
        %v1024 = vld [vmem:[%s955 + $0x88] sm:$0xff]
        %v1025 = vld [vmem:[%s955 + $0x90] sm:$0xff]
        %v1026 = vld [vmem:[%s955 + $0x98] sm:$0xff]
        %v1027 = vld [vmem:[%s955 + $0xa0] sm:$0xff]
        %v1028 = vld [vmem:[%s955 + $0xa8] sm:$0xff]
        %v1029 = vld [vmem:[%s955 + $0xb0] sm:$0xff]
        %v1030 = vld [vmem:[%s955 + $0xb8] sm:$0xff]
        %v1031 = vld [vmem:[%s955 + $0xc0] sm:$0xff]
        %v1032 = vld [vmem:[%s955 + $0xc8] sm:$0xff]
        %v1033 = vld [vmem:[%s955 + $0xd0] sm:$0xff]
        %v1034 = vld [vmem:[%s955 + $0xd8] sm:$0xff]
        %v1035 = vld [vmem:[%s955 + $0xe0] sm:$0xff]
        %v1036 = vld [vmem:[%s955 + $0xe8] sm:$0xff]
        %v1037 = vld [vmem:[%s955 + $0xf0] sm:$0xff]
        %v1038 = vld [vmem:[%s955 + $0xf8] sm:$0xff]
        %v1039 = vld [vmem:[%s955 + $0x100] sm:$0xff]
        %v1040 = vld [vmem:[%s955 + $0x108] sm:$0xff]
        %v1041 = vld [vmem:[%s955 + $0x110] sm:$0xff]
        %v1042 = vld [vmem:[%s955 + $0x118] sm:$0xff]
        %v1043 = vld [vmem:[%s955 + $0x120] sm:$0xff]
        %v1044 = vld [vmem:[%s955 + $0x128] sm:$0xff]
        %v1045 = vld [vmem:[%s955 + $0x130] sm:$0xff]
        %v1046 = vld [vmem:[%s955 + $0x138] sm:$0xff]
        %v1047 = vld [vmem:[%s955 + $0x140] sm:$0xff]
        %v1048 = vld [vmem:[%s955 + $0x148] sm:$0xff]
        %v1049 = vld [vmem:[%s955 + $0x150] sm:$0xff]
        %v1050 = vld [vmem:[%s955 + $0x158] sm:$0xff]
        %v1051 = vld [vmem:[%s955 + $0x160] sm:$0xff]
        %v1052 = vld [vmem:[%s955 + $0x168] sm:$0xff]
        %v1053 = vld [vmem:[%s955 + $0x170] sm:$0xff]
        %v1054 = vld [vmem:[%s955 + $0x178] sm:$0xff]
        %v1055 = vld [vmem:[%s955 + $0x180] sm:$0xff]
        %v1056 = vld [vmem:[%s955 + $0x188] sm:$0xff]
        %v1057 = vld [vmem:[%s955 + $0x190] sm:$0xff]
        %v1058 = vld [vmem:[%s955 + $0x198] sm:$0xff]
        %v1059 = vld [vmem:[%s955 + $0x1a0] sm:$0xff]
        %v1060 = vld [vmem:[%s955 + $0x1a8] sm:$0xff]
        %v1061 = vld [vmem:[%s955 + $0x1b0] sm:$0xff]
        %v1062 = vld [vmem:[%s955 + $0x1b8] sm:$0xff]
        %v1063 = vld [vmem:[%s955 + $0x1c0] sm:$0xff]
        %v1064 = vld [vmem:[%s955 + $0x1c8] sm:$0xff]
        %v1065 = vld [vmem:[%s955 + $0x1d0] sm:$0xff]
        %v1066 = vld [vmem:[%s955 + $0x1d8] sm:$0xff]
        %v1067 = vld [vmem:[%s955 + $0x1e0] sm:$0xff]
        %v1068 = vld [vmem:[%s955 + $0x1e8] sm:$0xff]
        %v1069 = vld [vmem:[%s955 + $0x1f0] sm:$0xff]
        %v1070 = vld [vmem:[%s955 + $0x1f8] sm:$0xff]
        %v1071 = vld [vmem:[%s955 + $0x200] sm:$0xff]
        %v1072 = vld [vmem:[%s955 + $0x208] sm:$0xff]
        %v1073 = vld [vmem:[%s955 + $0x210] sm:$0xff]
        %v1074 = vld [vmem:[%s955 + $0x218] sm:$0xff]
        %v1075 = vld [vmem:[%s955 + $0x220] sm:$0xff]
        %v1076 = vld [vmem:[%s955 + $0x228] sm:$0xff]
        %v1077 = vld [vmem:[%s955 + $0x230] sm:$0xff]
        %v1078 = vld [vmem:[%s955 + $0x238] sm:$0xff]
        %v1079 = vld [vmem:[%s955 + $0x240] sm:$0xff]
        %v1080 = vld [vmem:[%s955 + $0x248] sm:$0xff]
        %v1081 = vld [vmem:[%s955 + $0x250] sm:$0xff]
        %v1082 = vld [vmem:[%s955 + $0x258] sm:$0xff]
        %v1083 = vld [vmem:[%s955 + $0x260] sm:$0xff]
        %v1084 = vld [vmem:[%s955 + $0x268] sm:$0xff]
        %v1085 = vld [vmem:[%s955 + $0x270] sm:$0xff]
        %v1086 = vld [vmem:[%s955 + $0x278] sm:$0xff]
        %v1087 = vld [vmem:[%s955 + $0x280] sm:$0xff]
        %v1088 = vld [vmem:[%s955 + $0x288] sm:$0xff]
        %v1089 = vld [vmem:[%s955 + $0x290] sm:$0xff]
        %v1090 = vld [vmem:[%s955 + $0x298] sm:$0xff]
        %v1091 = vld [vmem:[%s955 + $0x2a0] sm:$0xff]
        %v1092 = vld [vmem:[%s955 + $0x2a8] sm:$0xff]
        %v1093 = vld [vmem:[%s955 + $0x2b0] sm:$0xff]
        %v1094 = vld [vmem:[%s955 + $0x2b8] sm:$0xff]
        %v1095 = vld [vmem:[%s955 + $0x2c0] sm:$0xff]
        %v1096 = vld [vmem:[%s955 + $0x2c8] sm:$0xff]
        %v1097 = vld [vmem:[%s955 + $0x2d0] sm:$0xff]
        %v1098 = vld [vmem:[%s955 + $0x2d8] sm:$0xff]
        %v1099 = vld [vmem:[%s955 + $0x2e0] sm:$0xff]
        %v1100 = vld [vmem:[%s955 + $0x2e8] sm:$0xff]
        %v1101 = vld [vmem:[%s955 + $0x2f0] sm:$0xff]
        %v1102 = vld [vmem:[%s955 + $0x2f8] sm:$0xff]
        %v1103 = vld [vmem:[%s955 + $0x300] sm:$0xff]
        %v1104 = vld [vmem:[%s955 + $0x308] sm:$0xff]
        %v1105 = vld [vmem:[%s955 + $0x310] sm:$0xff]
        %v1106 = vld [vmem:[%s955 + $0x318] sm:$0xff]
        %v1107 = vld [vmem:[%s955 + $0x320] sm:$0xff]
        %v1108 = vld [vmem:[%s955 + $0x328] sm:$0xff]
        %v1109 = vld [vmem:[%s955 + $0x330] sm:$0xff]
        %v1110 = vld [vmem:[%s955 + $0x338] sm:$0xff]
        %v1111 = vld [vmem:[%s955 + $0x340] sm:$0xff]
        %v1112 = vld [vmem:[%s955 + $0x348] sm:$0xff]
        %v1113 = vld [vmem:[%s955 + $0x350] sm:$0xff]
        %v1114 = vld [vmem:[%s955 + $0x358] sm:$0xff]
        %v1115 = vld [vmem:[%s955 + $0x360] sm:$0xff]
        %v1116 = vld [vmem:[%s955 + $0x368] sm:$0xff]
        %v1117 = vld [vmem:[%s955 + $0x370] sm:$0xff]
        %v1118 = vld [vmem:[%s955 + $0x378] sm:$0xff]
        %v1119 = vld [vmem:[%s955 + $0x380] sm:$0xff]
        %v1120 = vld [vmem:[%s955 + $0x388] sm:$0xff]
        %v1121 = vld [vmem:[%s955 + $0x390] sm:$0xff]
        %v1122 = vld [vmem:[%s955 + $0x398] sm:$0xff]
        %v1123 = vld [vmem:[%s955 + $0x3a0] sm:$0xff]
        %v1124 = vld [vmem:[%s955 + $0x3a8] sm:$0xff]
        %v1125 = vld [vmem:[%s955 + $0x3b0] sm:$0xff]
        %v1126 = vld [vmem:[%s955 + $0x3b8] sm:$0xff]
        %v1127 = vld [vmem:[%s955 + $0x3c0] sm:$0xff]
        %v1128 = vld [vmem:[%s955 + $0x3c8] sm:$0xff]
        %v1129 = vld [vmem:[%s955 + $0x3d0] sm:$0xff]
        %v1130 = vld [vmem:[%s955 + $0x3d8] sm:$0xff]
        %v1131 = vld [vmem:[%s955 + $0x3e0] sm:$0xff]
        %v1132 = vld [vmem:[%s955 + $0x3e8] sm:$0xff]
        %v1133 = vld [vmem:[%s955 + $0x3f0] sm:$0xff]
        %v1134 = vld [vmem:[%s955 + $0x3f8] sm:$0xff]
        %v1135 = vld [vmem:[%s1] sm:$0x1]
        %1137 = vset.pattern.permute.xlu0 0
        %1138 = vperm.xlu0 %1137, %v1007
        %v1139 = vpop.permute.xlu0 %1138
        %1142 = vset.pattern.permute.xlu0 0
        %1143 = vperm.xlu0 %1142, %v1008
        %v1144 = vpop.permute.xlu0 %1143
        %1147 = vset.pattern.permute.xlu0 0
        %1148 = vperm.xlu0 %1147, %v1009
        %v1149 = vpop.permute.xlu0 %1148
        %1152 = vset.pattern.permute.xlu0 0
        %1153 = vperm.xlu0 %1152, %v1010
        %v1154 = vpop.permute.xlu0 %1153
        %1157 = vset.pattern.permute.xlu0 0
        %1158 = vperm.xlu0 %1157, %v1011
        %v1159 = vpop.permute.xlu0 %1158
        %1162 = vset.pattern.permute.xlu0 0
        %1163 = vperm.xlu0 %1162, %v1012
        %v1164 = vpop.permute.xlu0 %1163
        %1167 = vset.pattern.permute.xlu0 0
        %1168 = vperm.xlu0 %1167, %v1013
        %v1169 = vpop.permute.xlu0 %1168
        %1172 = vset.pattern.permute.xlu0 0
        %1173 = vperm.xlu0 %1172, %v1014
        %v1174 = vpop.permute.xlu0 %1173
        %1177 = vset.pattern.permute.xlu0 0
        %1178 = vperm.xlu0 %1177, %v1015
        %v1179 = vpop.permute.xlu0 %1178
        %1182 = vset.pattern.permute.xlu0 0
        %1183 = vperm.xlu0 %1182, %v1016
        %v1184 = vpop.permute.xlu0 %1183
        %1187 = vset.pattern.permute.xlu0 0
        %1188 = vperm.xlu0 %1187, %v1017
        %v1189 = vpop.permute.xlu0 %1188
        %1192 = vset.pattern.permute.xlu0 0
        %1193 = vperm.xlu0 %1192, %v1018
        %v1194 = vpop.permute.xlu0 %1193
        %1197 = vset.pattern.permute.xlu0 0
        %1198 = vperm.xlu0 %1197, %v1019
        %v1199 = vpop.permute.xlu0 %1198
        %1202 = vset.pattern.permute.xlu0 0
        %1203 = vperm.xlu0 %1202, %v1020
        %v1204 = vpop.permute.xlu0 %1203
        %1207 = vset.pattern.permute.xlu0 0
        %1208 = vperm.xlu0 %1207, %v1021
        %v1209 = vpop.permute.xlu0 %1208
        %1212 = vset.pattern.permute.xlu0 0
        %1213 = vperm.xlu0 %1212, %v1022
        %v1214 = vpop.permute.xlu0 %1213
        %1217 = vset.pattern.permute.xlu0 0
        %1218 = vperm.xlu0 %1217, %v1023
        %v1219 = vpop.permute.xlu0 %1218
        %1222 = vset.pattern.permute.xlu0 0
        %1223 = vperm.xlu0 %1222, %v1024
        %v1224 = vpop.permute.xlu0 %1223
        %1227 = vset.pattern.permute.xlu0 0
        %1228 = vperm.xlu0 %1227, %v1025
        %v1229 = vpop.permute.xlu0 %1228
        %1232 = vset.pattern.permute.xlu0 0
        %1233 = vperm.xlu0 %1232, %v1026
        %v1234 = vpop.permute.xlu0 %1233
        %1237 = vset.pattern.permute.xlu0 0
        %1238 = vperm.xlu0 %1237, %v1027
        %v1239 = vpop.permute.xlu0 %1238
        %1242 = vset.pattern.permute.xlu0 0
        %1243 = vperm.xlu0 %1242, %v1028
        %v1244 = vpop.permute.xlu0 %1243
        %1247 = vset.pattern.permute.xlu0 0
        %1248 = vperm.xlu0 %1247, %v1029
        %v1249 = vpop.permute.xlu0 %1248
        %1252 = vset.pattern.permute.xlu0 0
        %1253 = vperm.xlu0 %1252, %v1030
        %v1254 = vpop.permute.xlu0 %1253
        %1257 = vset.pattern.permute.xlu0 0
        %1258 = vperm.xlu0 %1257, %v1031
        %v1259 = vpop.permute.xlu0 %1258
        %1262 = vset.pattern.permute.xlu0 0
        %1263 = vperm.xlu0 %1262, %v1032
        %v1264 = vpop.permute.xlu0 %1263
        %1267 = vset.pattern.permute.xlu0 0
        %1268 = vperm.xlu0 %1267, %v1033
        %v1269 = vpop.permute.xlu0 %1268
        %1272 = vset.pattern.permute.xlu0 0
        %1273 = vperm.xlu0 %1272, %v1034
        %v1274 = vpop.permute.xlu0 %1273
        %1277 = vset.pattern.permute.xlu0 0
        %1278 = vperm.xlu0 %1277, %v1035
        %v1279 = vpop.permute.xlu0 %1278
        %1282 = vset.pattern.permute.xlu0 0
        %1283 = vperm.xlu0 %1282, %v1036
        %v1284 = vpop.permute.xlu0 %1283
        %1287 = vset.pattern.permute.xlu0 0
        %1288 = vperm.xlu0 %1287, %v1037
        %v1289 = vpop.permute.xlu0 %1288
        %1292 = vset.pattern.permute.xlu0 0
        %1293 = vperm.xlu0 %1292, %v1038
        %v1294 = vpop.permute.xlu0 %1293
        %1297 = vset.pattern.permute.xlu0 0
        %1298 = vperm.xlu0 %1297, %v1039
        %v1299 = vpop.permute.xlu0 %1298
        %1302 = vset.pattern.permute.xlu0 0
        %1303 = vperm.xlu0 %1302, %v1040
        %v1304 = vpop.permute.xlu0 %1303
        %1307 = vset.pattern.permute.xlu0 0
        %1308 = vperm.xlu0 %1307, %v1041
        %v1309 = vpop.permute.xlu0 %1308
        %1312 = vset.pattern.permute.xlu0 0
        %1313 = vperm.xlu0 %1312, %v1042
        %v1314 = vpop.permute.xlu0 %1313
        %1317 = vset.pattern.permute.xlu0 0
        %1318 = vperm.xlu0 %1317, %v1043
        %v1319 = vpop.permute.xlu0 %1318
        %1322 = vset.pattern.permute.xlu0 0
        %1323 = vperm.xlu0 %1322, %v1044
        %v1324 = vpop.permute.xlu0 %1323
        %1327 = vset.pattern.permute.xlu0 0
        %1328 = vperm.xlu0 %1327, %v1045
        %v1329 = vpop.permute.xlu0 %1328
        %1332 = vset.pattern.permute.xlu0 0
        %1333 = vperm.xlu0 %1332, %v1046
        %v1334 = vpop.permute.xlu0 %1333
        %1337 = vset.pattern.permute.xlu0 0
        %1338 = vperm.xlu0 %1337, %v1047
        %v1339 = vpop.permute.xlu0 %1338
        %1342 = vset.pattern.permute.xlu0 0
        %1343 = vperm.xlu0 %1342, %v1048
        %v1344 = vpop.permute.xlu0 %1343
        %1347 = vset.pattern.permute.xlu0 0
        %1348 = vperm.xlu0 %1347, %v1049
        %v1349 = vpop.permute.xlu0 %1348
        %1352 = vset.pattern.permute.xlu0 0
        %1353 = vperm.xlu0 %1352, %v1050
        %v1354 = vpop.permute.xlu0 %1353
        %1357 = vset.pattern.permute.xlu0 0
        %1358 = vperm.xlu0 %1357, %v1051
        %v1359 = vpop.permute.xlu0 %1358
        %1362 = vset.pattern.permute.xlu0 0
        %1363 = vperm.xlu0 %1362, %v1052
        %v1364 = vpop.permute.xlu0 %1363
        %1367 = vset.pattern.permute.xlu0 0
        %1368 = vperm.xlu0 %1367, %v1053
        %v1369 = vpop.permute.xlu0 %1368
        %1372 = vset.pattern.permute.xlu0 0
        %1373 = vperm.xlu0 %1372, %v1054
        %v1374 = vpop.permute.xlu0 %1373
        %1377 = vset.pattern.permute.xlu0 0
        %1378 = vperm.xlu0 %1377, %v1055
        %v1379 = vpop.permute.xlu0 %1378
        %1382 = vset.pattern.permute.xlu0 0
        %1383 = vperm.xlu0 %1382, %v1056
        %v1384 = vpop.permute.xlu0 %1383
        %1387 = vset.pattern.permute.xlu0 0
        %1388 = vperm.xlu0 %1387, %v1057
        %v1389 = vpop.permute.xlu0 %1388
        %1392 = vset.pattern.permute.xlu0 0
        %1393 = vperm.xlu0 %1392, %v1058
        %v1394 = vpop.permute.xlu0 %1393
        %1397 = vset.pattern.permute.xlu0 0
        %1398 = vperm.xlu0 %1397, %v1059
        %v1399 = vpop.permute.xlu0 %1398
        %1402 = vset.pattern.permute.xlu0 0
        %1403 = vperm.xlu0 %1402, %v1060
        %v1404 = vpop.permute.xlu0 %1403
        %1407 = vset.pattern.permute.xlu0 0
        %1408 = vperm.xlu0 %1407, %v1061
        %v1409 = vpop.permute.xlu0 %1408
        %1412 = vset.pattern.permute.xlu0 0
        %1413 = vperm.xlu0 %1412, %v1062
        %v1414 = vpop.permute.xlu0 %1413
        %1417 = vset.pattern.permute.xlu0 0
        %1418 = vperm.xlu0 %1417, %v1063
        %v1419 = vpop.permute.xlu0 %1418
        %1422 = vset.pattern.permute.xlu0 0
        %1423 = vperm.xlu0 %1422, %v1064
        %v1424 = vpop.permute.xlu0 %1423
        %1427 = vset.pattern.permute.xlu0 0
        %1428 = vperm.xlu0 %1427, %v1065
        %v1429 = vpop.permute.xlu0 %1428
        %1432 = vset.pattern.permute.xlu0 0
        %1433 = vperm.xlu0 %1432, %v1066
        %v1434 = vpop.permute.xlu0 %1433
        %1437 = vset.pattern.permute.xlu0 0
        %1438 = vperm.xlu0 %1437, %v1067
        %v1439 = vpop.permute.xlu0 %1438
        %1442 = vset.pattern.permute.xlu0 0
        %1443 = vperm.xlu0 %1442, %v1068
        %v1444 = vpop.permute.xlu0 %1443
        %1447 = vset.pattern.permute.xlu0 0
        %1448 = vperm.xlu0 %1447, %v1069
        %v1449 = vpop.permute.xlu0 %1448
        %1452 = vset.pattern.permute.xlu0 0
        %1453 = vperm.xlu0 %1452, %v1070
        %v1454 = vpop.permute.xlu0 %1453
        %1457 = vset.pattern.permute.xlu0 0
        %1458 = vperm.xlu0 %1457, %v1071
        %v1459 = vpop.permute.xlu0 %1458
        %1462 = vset.pattern.permute.xlu0 0
        %1463 = vperm.xlu0 %1462, %v1072
        %v1464 = vpop.permute.xlu0 %1463
        %1467 = vset.pattern.permute.xlu0 0
        %1468 = vperm.xlu0 %1467, %v1073
        %v1469 = vpop.permute.xlu0 %1468
        %1472 = vset.pattern.permute.xlu0 0
        %1473 = vperm.xlu0 %1472, %v1074
        %v1474 = vpop.permute.xlu0 %1473
        %1477 = vset.pattern.permute.xlu0 0
        %1478 = vperm.xlu0 %1477, %v1075
        %v1479 = vpop.permute.xlu0 %1478
        %1482 = vset.pattern.permute.xlu0 0
        %1483 = vperm.xlu0 %1482, %v1076
        %v1484 = vpop.permute.xlu0 %1483
        %1487 = vset.pattern.permute.xlu0 0
        %1488 = vperm.xlu0 %1487, %v1077
        %v1489 = vpop.permute.xlu0 %1488
        %1492 = vset.pattern.permute.xlu0 0
        %1493 = vperm.xlu0 %1492, %v1078
        %v1494 = vpop.permute.xlu0 %1493
        %1497 = vset.pattern.permute.xlu0 0
        %1498 = vperm.xlu0 %1497, %v1079
        %v1499 = vpop.permute.xlu0 %1498
        %1502 = vset.pattern.permute.xlu0 0
        %1503 = vperm.xlu0 %1502, %v1080
        %v1504 = vpop.permute.xlu0 %1503
        %1507 = vset.pattern.permute.xlu0 0
        %1508 = vperm.xlu0 %1507, %v1081
        %v1509 = vpop.permute.xlu0 %1508
        %1512 = vset.pattern.permute.xlu0 0
        %1513 = vperm.xlu0 %1512, %v1082
        %v1514 = vpop.permute.xlu0 %1513
        %1517 = vset.pattern.permute.xlu0 0
        %1518 = vperm.xlu0 %1517, %v1083
        %v1519 = vpop.permute.xlu0 %1518
        %1522 = vset.pattern.permute.xlu0 0
        %1523 = vperm.xlu0 %1522, %v1084
        %v1524 = vpop.permute.xlu0 %1523
        %1527 = vset.pattern.permute.xlu0 0
        %1528 = vperm.xlu0 %1527, %v1085
        %v1529 = vpop.permute.xlu0 %1528
        %1532 = vset.pattern.permute.xlu0 0
        %1533 = vperm.xlu0 %1532, %v1086
        %v1534 = vpop.permute.xlu0 %1533
        %1537 = vset.pattern.permute.xlu0 0
        %1538 = vperm.xlu0 %1537, %v1087
        %v1539 = vpop.permute.xlu0 %1538
        %1542 = vset.pattern.permute.xlu0 0
        %1543 = vperm.xlu0 %1542, %v1088
        %v1544 = vpop.permute.xlu0 %1543
        %1547 = vset.pattern.permute.xlu0 0
        %1548 = vperm.xlu0 %1547, %v1089
        %v1549 = vpop.permute.xlu0 %1548
        %1552 = vset.pattern.permute.xlu0 0
        %1553 = vperm.xlu0 %1552, %v1090
        %v1554 = vpop.permute.xlu0 %1553
        %1557 = vset.pattern.permute.xlu0 0
        %1558 = vperm.xlu0 %1557, %v1091
        %v1559 = vpop.permute.xlu0 %1558
        %1562 = vset.pattern.permute.xlu0 0
        %1563 = vperm.xlu0 %1562, %v1092
        %v1564 = vpop.permute.xlu0 %1563
        %1567 = vset.pattern.permute.xlu0 0
        %1568 = vperm.xlu0 %1567, %v1093
        %v1569 = vpop.permute.xlu0 %1568
        %1572 = vset.pattern.permute.xlu0 0
        %1573 = vperm.xlu0 %1572, %v1094
        %v1574 = vpop.permute.xlu0 %1573
        %1577 = vset.pattern.permute.xlu0 0
        %1578 = vperm.xlu0 %1577, %v1095
        %v1579 = vpop.permute.xlu0 %1578
        %1582 = vset.pattern.permute.xlu0 0
        %1583 = vperm.xlu0 %1582, %v1096
        %v1584 = vpop.permute.xlu0 %1583
        %1587 = vset.pattern.permute.xlu0 0
        %1588 = vperm.xlu0 %1587, %v1097
        %v1589 = vpop.permute.xlu0 %1588
        %1592 = vset.pattern.permute.xlu0 0
        %1593 = vperm.xlu0 %1592, %v1098
        %v1594 = vpop.permute.xlu0 %1593
        %1597 = vset.pattern.permute.xlu0 0
        %1598 = vperm.xlu0 %1597, %v1099
        %v1599 = vpop.permute.xlu0 %1598
        %1602 = vset.pattern.permute.xlu0 0
        %1603 = vperm.xlu0 %1602, %v1100
        %v1604 = vpop.permute.xlu0 %1603
        %1607 = vset.pattern.permute.xlu0 0
        %1608 = vperm.xlu0 %1607, %v1101
        %v1609 = vpop.permute.xlu0 %1608
        %1612 = vset.pattern.permute.xlu0 0
        %1613 = vperm.xlu0 %1612, %v1102
        %v1614 = vpop.permute.xlu0 %1613
        %1617 = vset.pattern.permute.xlu0 0
        %1618 = vperm.xlu0 %1617, %v1103
        %v1619 = vpop.permute.xlu0 %1618
        %1622 = vset.pattern.permute.xlu0 0
        %1623 = vperm.xlu0 %1622, %v1104
        %v1624 = vpop.permute.xlu0 %1623
        %1627 = vset.pattern.permute.xlu0 0
        %1628 = vperm.xlu0 %1627, %v1105
        %v1629 = vpop.permute.xlu0 %1628
        %1632 = vset.pattern.permute.xlu0 0
        %1633 = vperm.xlu0 %1632, %v1106
        %v1634 = vpop.permute.xlu0 %1633
        %1637 = vset.pattern.permute.xlu0 0
        %1638 = vperm.xlu0 %1637, %v1107
        %v1639 = vpop.permute.xlu0 %1638
        %1642 = vset.pattern.permute.xlu0 0
        %1643 = vperm.xlu0 %1642, %v1108
        %v1644 = vpop.permute.xlu0 %1643
        %1647 = vset.pattern.permute.xlu0 0
        %1648 = vperm.xlu0 %1647, %v1109
        %v1649 = vpop.permute.xlu0 %1648
        %1652 = vset.pattern.permute.xlu0 0
        %1653 = vperm.xlu0 %1652, %v1110
        %v1654 = vpop.permute.xlu0 %1653
        %1657 = vset.pattern.permute.xlu0 0
        %1658 = vperm.xlu0 %1657, %v1111
        %v1659 = vpop.permute.xlu0 %1658
        %1662 = vset.pattern.permute.xlu0 0
        %1663 = vperm.xlu0 %1662, %v1112
        %v1664 = vpop.permute.xlu0 %1663
        %1667 = vset.pattern.permute.xlu0 0
        %1668 = vperm.xlu0 %1667, %v1113
        %v1669 = vpop.permute.xlu0 %1668
        %1672 = vset.pattern.permute.xlu0 0
        %1673 = vperm.xlu0 %1672, %v1114
        %v1674 = vpop.permute.xlu0 %1673
        %1677 = vset.pattern.permute.xlu0 0
        %1678 = vperm.xlu0 %1677, %v1115
        %v1679 = vpop.permute.xlu0 %1678
        %1682 = vset.pattern.permute.xlu0 0
        %1683 = vperm.xlu0 %1682, %v1116
        %v1684 = vpop.permute.xlu0 %1683
        %1687 = vset.pattern.permute.xlu0 0
        %1688 = vperm.xlu0 %1687, %v1117
        %v1689 = vpop.permute.xlu0 %1688
        %1692 = vset.pattern.permute.xlu0 0
        %1693 = vperm.xlu0 %1692, %v1118
        %v1694 = vpop.permute.xlu0 %1693
        %1697 = vset.pattern.permute.xlu0 0
        %1698 = vperm.xlu0 %1697, %v1119
        %v1699 = vpop.permute.xlu0 %1698
        %1702 = vset.pattern.permute.xlu0 0
        %1703 = vperm.xlu0 %1702, %v1120
        %v1704 = vpop.permute.xlu0 %1703
        %1707 = vset.pattern.permute.xlu0 0
        %1708 = vperm.xlu0 %1707, %v1121
        %v1709 = vpop.permute.xlu0 %1708
        %1712 = vset.pattern.permute.xlu0 0
        %1713 = vperm.xlu0 %1712, %v1122
        %v1714 = vpop.permute.xlu0 %1713
        %1717 = vset.pattern.permute.xlu0 0
        %1718 = vperm.xlu0 %1717, %v1123
        %v1719 = vpop.permute.xlu0 %1718
        %1722 = vset.pattern.permute.xlu0 0
        %1723 = vperm.xlu0 %1722, %v1124
        %v1724 = vpop.permute.xlu0 %1723
        %1727 = vset.pattern.permute.xlu0 0
        %1728 = vperm.xlu0 %1727, %v1125
        %v1729 = vpop.permute.xlu0 %1728
        %1732 = vset.pattern.permute.xlu0 0
        %1733 = vperm.xlu0 %1732, %v1126
        %v1734 = vpop.permute.xlu0 %1733
        %1737 = vset.pattern.permute.xlu0 0
        %1738 = vperm.xlu0 %1737, %v1127
        %v1739 = vpop.permute.xlu0 %1738
        %1742 = vset.pattern.permute.xlu0 0
        %1743 = vperm.xlu0 %1742, %v1128
        %v1744 = vpop.permute.xlu0 %1743
        %1747 = vset.pattern.permute.xlu0 0
        %1748 = vperm.xlu0 %1747, %v1129
        %v1749 = vpop.permute.xlu0 %1748
        %1752 = vset.pattern.permute.xlu0 0
        %1753 = vperm.xlu0 %1752, %v1130
        %v1754 = vpop.permute.xlu0 %1753
        %1757 = vset.pattern.permute.xlu0 0
        %1758 = vperm.xlu0 %1757, %v1131
        %v1759 = vpop.permute.xlu0 %1758
        %1762 = vset.pattern.permute.xlu0 0
        %1763 = vperm.xlu0 %1762, %v1132
        %v1764 = vpop.permute.xlu0 %1763
        %1767 = vset.pattern.permute.xlu0 0
        %1768 = vperm.xlu0 %1767, %v1133
        %v1769 = vpop.permute.xlu0 %1768
        %1772 = vset.pattern.permute.xlu0 0
        %1773 = vperm.xlu0 %1772, %v1134
        %v1774 = vpop.permute.xlu0 %1773
        %v1776 = vlaneseq
        %v1777 = vshrl.u32 %v1776, 7
        %v1778 = vsub.s32 0, %v1777
        %v1779 = vrot.slane %v1135, %v1778
        %v1780 = vmul.f32 %v1139, %v1779
        %v1781 = vmul.f32 %v1144, %v1779
        %v1782 = vmul.f32 %v1149, %v1779
        %v1783 = vmul.f32 %v1154, %v1779
        %v1784 = vmul.f32 %v1159, %v1779
        %v1785 = vmul.f32 %v1164, %v1779
        %v1786 = vmul.f32 %v1169, %v1779
        %v1787 = vmul.f32 %v1174, %v1779
        %v1788 = vmul.f32 %v1179, %v1779
        %v1789 = vmul.f32 %v1184, %v1779
        %v1790 = vmul.f32 %v1189, %v1779
        %v1791 = vmul.f32 %v1194, %v1779
        %v1792 = vmul.f32 %v1199, %v1779
        %v1793 = vmul.f32 %v1204, %v1779
        %v1794 = vmul.f32 %v1209, %v1779
        %v1795 = vmul.f32 %v1214, %v1779
        %v1796 = vmul.f32 %v1219, %v1779
        %v1797 = vmul.f32 %v1224, %v1779
        %v1798 = vmul.f32 %v1229, %v1779
        %v1799 = vmul.f32 %v1234, %v1779
        %v1800 = vmul.f32 %v1239, %v1779
        %v1801 = vmul.f32 %v1244, %v1779
        %v1802 = vmul.f32 %v1249, %v1779
        %v1803 = vmul.f32 %v1254, %v1779
        %v1804 = vmul.f32 %v1259, %v1779
        %v1805 = vmul.f32 %v1264, %v1779
        %v1806 = vmul.f32 %v1269, %v1779
        %v1807 = vmul.f32 %v1274, %v1779
        %v1808 = vmul.f32 %v1279, %v1779
        %v1809 = vmul.f32 %v1284, %v1779
        %v1810 = vmul.f32 %v1289, %v1779
        %v1811 = vmul.f32 %v1294, %v1779
        %v1812 = vmul.f32 %v1299, %v1779
        %v1813 = vmul.f32 %v1304, %v1779
        %v1814 = vmul.f32 %v1309, %v1779
        %v1815 = vmul.f32 %v1314, %v1779
        %v1816 = vmul.f32 %v1319, %v1779
        %v1817 = vmul.f32 %v1324, %v1779
        %v1818 = vmul.f32 %v1329, %v1779
        %v1819 = vmul.f32 %v1334, %v1779
        %v1820 = vmul.f32 %v1339, %v1779
        %v1821 = vmul.f32 %v1344, %v1779
        %v1822 = vmul.f32 %v1349, %v1779
        %v1823 = vmul.f32 %v1354, %v1779
        %v1824 = vmul.f32 %v1359, %v1779
        %v1825 = vmul.f32 %v1364, %v1779
        %v1826 = vmul.f32 %v1369, %v1779
        %v1827 = vmul.f32 %v1374, %v1779
        %v1828 = vmul.f32 %v1379, %v1779
        %v1829 = vmul.f32 %v1384, %v1779
        %v1830 = vmul.f32 %v1389, %v1779
        %v1831 = vmul.f32 %v1394, %v1779
        %v1832 = vmul.f32 %v1399, %v1779
        %v1833 = vmul.f32 %v1404, %v1779
        %v1834 = vmul.f32 %v1409, %v1779
        %v1835 = vmul.f32 %v1414, %v1779
        %v1836 = vmul.f32 %v1419, %v1779
        %v1837 = vmul.f32 %v1424, %v1779
        %v1838 = vmul.f32 %v1429, %v1779
        %v1839 = vmul.f32 %v1434, %v1779
        %v1840 = vmul.f32 %v1439, %v1779
        %v1841 = vmul.f32 %v1444, %v1779
        %v1842 = vmul.f32 %v1449, %v1779
        %v1843 = vmul.f32 %v1454, %v1779
        %v1844 = vmul.f32 %v1459, %v1779
        %v1845 = vmul.f32 %v1464, %v1779
        %v1846 = vmul.f32 %v1469, %v1779
        %v1847 = vmul.f32 %v1474, %v1779
        %v1848 = vmul.f32 %v1479, %v1779
        %v1849 = vmul.f32 %v1484, %v1779
        %v1850 = vmul.f32 %v1489, %v1779
        %v1851 = vmul.f32 %v1494, %v1779
        %v1852 = vmul.f32 %v1499, %v1779
        %v1853 = vmul.f32 %v1504, %v1779
        %v1854 = vmul.f32 %v1509, %v1779
        %v1855 = vmul.f32 %v1514, %v1779
        %v1856 = vmul.f32 %v1519, %v1779
        %v1857 = vmul.f32 %v1524, %v1779
        %v1858 = vmul.f32 %v1529, %v1779
        %v1859 = vmul.f32 %v1534, %v1779
        %v1860 = vmul.f32 %v1539, %v1779
        %v1861 = vmul.f32 %v1544, %v1779
        %v1862 = vmul.f32 %v1549, %v1779
        %v1863 = vmul.f32 %v1554, %v1779
        %v1864 = vmul.f32 %v1559, %v1779
        %v1865 = vmul.f32 %v1564, %v1779
        %v1866 = vmul.f32 %v1569, %v1779
        %v1867 = vmul.f32 %v1574, %v1779
        %v1868 = vmul.f32 %v1579, %v1779
        %v1869 = vmul.f32 %v1584, %v1779
        %v1870 = vmul.f32 %v1589, %v1779
        %v1871 = vmul.f32 %v1594, %v1779
        %v1872 = vmul.f32 %v1599, %v1779
        %v1873 = vmul.f32 %v1604, %v1779
        %v1874 = vmul.f32 %v1609, %v1779
        %v1875 = vmul.f32 %v1614, %v1779
        %v1876 = vmul.f32 %v1619, %v1779
        %v1877 = vmul.f32 %v1624, %v1779
        %v1878 = vmul.f32 %v1629, %v1779
        %v1879 = vmul.f32 %v1634, %v1779
        %v1880 = vmul.f32 %v1639, %v1779
        %v1881 = vmul.f32 %v1644, %v1779
        %v1882 = vmul.f32 %v1649, %v1779
        %v1883 = vmul.f32 %v1654, %v1779
        %v1884 = vmul.f32 %v1659, %v1779
        %v1885 = vmul.f32 %v1664, %v1779
        %v1886 = vmul.f32 %v1669, %v1779
        %v1887 = vmul.f32 %v1674, %v1779
        %v1888 = vmul.f32 %v1679, %v1779
        %v1889 = vmul.f32 %v1684, %v1779
        %v1890 = vmul.f32 %v1689, %v1779
        %v1891 = vmul.f32 %v1694, %v1779
        %v1892 = vmul.f32 %v1699, %v1779
        %v1893 = vmul.f32 %v1704, %v1779
        %v1894 = vmul.f32 %v1709, %v1779
        %v1895 = vmul.f32 %v1714, %v1779
        %v1896 = vmul.f32 %v1719, %v1779
        %v1897 = vmul.f32 %v1724, %v1779
        %v1898 = vmul.f32 %v1729, %v1779
        %v1899 = vmul.f32 %v1734, %v1779
        %v1900 = vmul.f32 %v1739, %v1779
        %v1901 = vmul.f32 %v1744, %v1779
        %v1902 = vmul.f32 %v1749, %v1779
        %v1903 = vmul.f32 %v1754, %v1779
        %v1904 = vmul.f32 %v1759, %v1779
        %v1905 = vmul.f32 %v1764, %v1779
        %v1906 = vmul.f32 %v1769, %v1779
        %v1907 = vmul.f32 %v1774, %v1779
        %v1908 = vld [vmem:[%s1 + $0x1] sm:$0x1]
        %1909 = vset.pattern.permute.xlu0 1
        %1910 = vperm.xlu0 %1909, %v1007
        %v1911 = vpop.permute.xlu0 %1910
        %1913 = vset.pattern.permute.xlu0 1
        %1914 = vperm.xlu0 %1913, %v1008
        %v1915 = vpop.permute.xlu0 %1914
        %1917 = vset.pattern.permute.xlu0 1
        %1918 = vperm.xlu0 %1917, %v1009
        %v1919 = vpop.permute.xlu0 %1918
        %1921 = vset.pattern.permute.xlu0 1
        %1922 = vperm.xlu0 %1921, %v1010
        %v1923 = vpop.permute.xlu0 %1922
        %1925 = vset.pattern.permute.xlu0 1
        %1926 = vperm.xlu0 %1925, %v1011
        %v1927 = vpop.permute.xlu0 %1926
        %1929 = vset.pattern.permute.xlu0 1
        %1930 = vperm.xlu0 %1929, %v1012
        %v1931 = vpop.permute.xlu0 %1930
        %1933 = vset.pattern.permute.xlu0 1
        %1934 = vperm.xlu0 %1933, %v1013
        %v1935 = vpop.permute.xlu0 %1934
        %1937 = vset.pattern.permute.xlu0 1
        %1938 = vperm.xlu0 %1937, %v1014
        %v1939 = vpop.permute.xlu0 %1938
        %1941 = vset.pattern.permute.xlu0 1
        %1942 = vperm.xlu0 %1941, %v1015
        %v1943 = vpop.permute.xlu0 %1942
        %1945 = vset.pattern.permute.xlu0 1
        %1946 = vperm.xlu0 %1945, %v1016
        %v1947 = vpop.permute.xlu0 %1946
        %1949 = vset.pattern.permute.xlu0 1
        %1950 = vperm.xlu0 %1949, %v1017
        %v1951 = vpop.permute.xlu0 %1950
        %1953 = vset.pattern.permute.xlu0 1
        %1954 = vperm.xlu0 %1953, %v1018
        %v1955 = vpop.permute.xlu0 %1954
        %1957 = vset.pattern.permute.xlu0 1
        %1958 = vperm.xlu0 %1957, %v1019
        %v1959 = vpop.permute.xlu0 %1958
        %1961 = vset.pattern.permute.xlu0 1
        %1962 = vperm.xlu0 %1961, %v1020
        %v1963 = vpop.permute.xlu0 %1962
        %1965 = vset.pattern.permute.xlu0 1
        %1966 = vperm.xlu0 %1965, %v1021
        %v1967 = vpop.permute.xlu0 %1966
        %1969 = vset.pattern.permute.xlu0 1
        %1970 = vperm.xlu0 %1969, %v1022
        %v1971 = vpop.permute.xlu0 %1970
        %1973 = vset.pattern.permute.xlu0 1
        %1974 = vperm.xlu0 %1973, %v1023
        %v1975 = vpop.permute.xlu0 %1974
        %1977 = vset.pattern.permute.xlu0 1
        %1978 = vperm.xlu0 %1977, %v1024
        %v1979 = vpop.permute.xlu0 %1978
        %1981 = vset.pattern.permute.xlu0 1
        %1982 = vperm.xlu0 %1981, %v1025
        %v1983 = vpop.permute.xlu0 %1982
        %1985 = vset.pattern.permute.xlu0 1
        %1986 = vperm.xlu0 %1985, %v1026
        %v1987 = vpop.permute.xlu0 %1986
        %1989 = vset.pattern.permute.xlu0 1
        %1990 = vperm.xlu0 %1989, %v1027
        %v1991 = vpop.permute.xlu0 %1990
        %1993 = vset.pattern.permute.xlu0 1
        %1994 = vperm.xlu0 %1993, %v1028
        %v1995 = vpop.permute.xlu0 %1994
        %1997 = vset.pattern.permute.xlu0 1
        %1998 = vperm.xlu0 %1997, %v1029
        %v1999 = vpop.permute.xlu0 %1998
        %2001 = vset.pattern.permute.xlu0 1
        %2002 = vperm.xlu0 %2001, %v1030
        %v2003 = vpop.permute.xlu0 %2002
        %2005 = vset.pattern.permute.xlu0 1
        %2006 = vperm.xlu0 %2005, %v1031
        %v2007 = vpop.permute.xlu0 %2006
        %2009 = vset.pattern.permute.xlu0 1
        %2010 = vperm.xlu0 %2009, %v1032
        %v2011 = vpop.permute.xlu0 %2010
        %2013 = vset.pattern.permute.xlu0 1
        %2014 = vperm.xlu0 %2013, %v1033
        %v2015 = vpop.permute.xlu0 %2014
        %2017 = vset.pattern.permute.xlu0 1
        %2018 = vperm.xlu0 %2017, %v1034
        %v2019 = vpop.permute.xlu0 %2018
        %2021 = vset.pattern.permute.xlu0 1
        %2022 = vperm.xlu0 %2021, %v1035
        %v2023 = vpop.permute.xlu0 %2022
        %2025 = vset.pattern.permute.xlu0 1
        %2026 = vperm.xlu0 %2025, %v1036
        %v2027 = vpop.permute.xlu0 %2026
        %2029 = vset.pattern.permute.xlu0 1
        %2030 = vperm.xlu0 %2029, %v1037
        %v2031 = vpop.permute.xlu0 %2030
        %2033 = vset.pattern.permute.xlu0 1
        %2034 = vperm.xlu0 %2033, %v1038
        %v2035 = vpop.permute.xlu0 %2034
        %2037 = vset.pattern.permute.xlu0 1
        %2038 = vperm.xlu0 %2037, %v1039
        %v2039 = vpop.permute.xlu0 %2038
        %2041 = vset.pattern.permute.xlu0 1
        %2042 = vperm.xlu0 %2041, %v1040
        %v2043 = vpop.permute.xlu0 %2042
        %2045 = vset.pattern.permute.xlu0 1
        %2046 = vperm.xlu0 %2045, %v1041
        %v2047 = vpop.permute.xlu0 %2046
        %2049 = vset.pattern.permute.xlu0 1
        %2050 = vperm.xlu0 %2049, %v1042
        %v2051 = vpop.permute.xlu0 %2050
        %2053 = vset.pattern.permute.xlu0 1
        %2054 = vperm.xlu0 %2053, %v1043
        %v2055 = vpop.permute.xlu0 %2054
        %2057 = vset.pattern.permute.xlu0 1
        %2058 = vperm.xlu0 %2057, %v1044
        %v2059 = vpop.permute.xlu0 %2058
        %2061 = vset.pattern.permute.xlu0 1
        %2062 = vperm.xlu0 %2061, %v1045
        %v2063 = vpop.permute.xlu0 %2062
        %2065 = vset.pattern.permute.xlu0 1
        %2066 = vperm.xlu0 %2065, %v1046
        %v2067 = vpop.permute.xlu0 %2066
        %2069 = vset.pattern.permute.xlu0 1
        %2070 = vperm.xlu0 %2069, %v1047
        %v2071 = vpop.permute.xlu0 %2070
        %2073 = vset.pattern.permute.xlu0 1
        %2074 = vperm.xlu0 %2073, %v1048
        %v2075 = vpop.permute.xlu0 %2074
        %2077 = vset.pattern.permute.xlu0 1
        %2078 = vperm.xlu0 %2077, %v1049
        %v2079 = vpop.permute.xlu0 %2078
        %2081 = vset.pattern.permute.xlu0 1
        %2082 = vperm.xlu0 %2081, %v1050
        %v2083 = vpop.permute.xlu0 %2082
        %2085 = vset.pattern.permute.xlu0 1
        %2086 = vperm.xlu0 %2085, %v1051
        %v2087 = vpop.permute.xlu0 %2086
        %2089 = vset.pattern.permute.xlu0 1
        %2090 = vperm.xlu0 %2089, %v1052
        %v2091 = vpop.permute.xlu0 %2090
        %2093 = vset.pattern.permute.xlu0 1
        %2094 = vperm.xlu0 %2093, %v1053
        %v2095 = vpop.permute.xlu0 %2094
        %2097 = vset.pattern.permute.xlu0 1
        %2098 = vperm.xlu0 %2097, %v1054
        %v2099 = vpop.permute.xlu0 %2098
        %2101 = vset.pattern.permute.xlu0 1
        %2102 = vperm.xlu0 %2101, %v1055
        %v2103 = vpop.permute.xlu0 %2102
        %2105 = vset.pattern.permute.xlu0 1
        %2106 = vperm.xlu0 %2105, %v1056
        %v2107 = vpop.permute.xlu0 %2106
        %2109 = vset.pattern.permute.xlu0 1
        %2110 = vperm.xlu0 %2109, %v1057
        %v2111 = vpop.permute.xlu0 %2110
        %2113 = vset.pattern.permute.xlu0 1
        %2114 = vperm.xlu0 %2113, %v1058
        %v2115 = vpop.permute.xlu0 %2114
        %2117 = vset.pattern.permute.xlu0 1
        %2118 = vperm.xlu0 %2117, %v1059
        %v2119 = vpop.permute.xlu0 %2118
        %2121 = vset.pattern.permute.xlu0 1
        %2122 = vperm.xlu0 %2121, %v1060
        %v2123 = vpop.permute.xlu0 %2122
        %2125 = vset.pattern.permute.xlu0 1
        %2126 = vperm.xlu0 %2125, %v1061
        %v2127 = vpop.permute.xlu0 %2126
        %2129 = vset.pattern.permute.xlu0 1
        %2130 = vperm.xlu0 %2129, %v1062
        %v2131 = vpop.permute.xlu0 %2130
        %2133 = vset.pattern.permute.xlu0 1
        %2134 = vperm.xlu0 %2133, %v1063
        %v2135 = vpop.permute.xlu0 %2134
        %2137 = vset.pattern.permute.xlu0 1
        %2138 = vperm.xlu0 %2137, %v1064
        %v2139 = vpop.permute.xlu0 %2138
        %2141 = vset.pattern.permute.xlu0 1
        %2142 = vperm.xlu0 %2141, %v1065
        %v2143 = vpop.permute.xlu0 %2142
        %2145 = vset.pattern.permute.xlu0 1
        %2146 = vperm.xlu0 %2145, %v1066
        %v2147 = vpop.permute.xlu0 %2146
        %2149 = vset.pattern.permute.xlu0 1
        %2150 = vperm.xlu0 %2149, %v1067
        %v2151 = vpop.permute.xlu0 %2150
        %2153 = vset.pattern.permute.xlu0 1
        %2154 = vperm.xlu0 %2153, %v1068
        %v2155 = vpop.permute.xlu0 %2154
        %2157 = vset.pattern.permute.xlu0 1
        %2158 = vperm.xlu0 %2157, %v1069
        %v2159 = vpop.permute.xlu0 %2158
        %2161 = vset.pattern.permute.xlu0 1
        %2162 = vperm.xlu0 %2161, %v1070
        %v2163 = vpop.permute.xlu0 %2162
        %2165 = vset.pattern.permute.xlu0 1
        %2166 = vperm.xlu0 %2165, %v1071
        %v2167 = vpop.permute.xlu0 %2166
        %2169 = vset.pattern.permute.xlu0 1
        %2170 = vperm.xlu0 %2169, %v1072
        %v2171 = vpop.permute.xlu0 %2170
        %2173 = vset.pattern.permute.xlu0 1
        %2174 = vperm.xlu0 %2173, %v1073
        %v2175 = vpop.permute.xlu0 %2174
        %2177 = vset.pattern.permute.xlu0 1
        %2178 = vperm.xlu0 %2177, %v1074
        %v2179 = vpop.permute.xlu0 %2178
        %2181 = vset.pattern.permute.xlu0 1
        %2182 = vperm.xlu0 %2181, %v1075
        %v2183 = vpop.permute.xlu0 %2182
        %2185 = vset.pattern.permute.xlu0 1
        %2186 = vperm.xlu0 %2185, %v1076
        %v2187 = vpop.permute.xlu0 %2186
        %2189 = vset.pattern.permute.xlu0 1
        %2190 = vperm.xlu0 %2189, %v1077
        %v2191 = vpop.permute.xlu0 %2190
        %2193 = vset.pattern.permute.xlu0 1
        %2194 = vperm.xlu0 %2193, %v1078
        %v2195 = vpop.permute.xlu0 %2194
        %2197 = vset.pattern.permute.xlu0 1
        %2198 = vperm.xlu0 %2197, %v1079
        %v2199 = vpop.permute.xlu0 %2198
        %2201 = vset.pattern.permute.xlu0 1
        %2202 = vperm.xlu0 %2201, %v1080
        %v2203 = vpop.permute.xlu0 %2202
        %2205 = vset.pattern.permute.xlu0 1
        %2206 = vperm.xlu0 %2205, %v1081
        %v2207 = vpop.permute.xlu0 %2206
        %2209 = vset.pattern.permute.xlu0 1
        %2210 = vperm.xlu0 %2209, %v1082
        %v2211 = vpop.permute.xlu0 %2210
        %2213 = vset.pattern.permute.xlu0 1
        %2214 = vperm.xlu0 %2213, %v1083
        %v2215 = vpop.permute.xlu0 %2214
        %2217 = vset.pattern.permute.xlu0 1
        %2218 = vperm.xlu0 %2217, %v1084
        %v2219 = vpop.permute.xlu0 %2218
        %2221 = vset.pattern.permute.xlu0 1
        %2222 = vperm.xlu0 %2221, %v1085
        %v2223 = vpop.permute.xlu0 %2222
        %2225 = vset.pattern.permute.xlu0 1
        %2226 = vperm.xlu0 %2225, %v1086
        %v2227 = vpop.permute.xlu0 %2226
        %2229 = vset.pattern.permute.xlu0 1
        %2230 = vperm.xlu0 %2229, %v1087
        %v2231 = vpop.permute.xlu0 %2230
        %2233 = vset.pattern.permute.xlu0 1
        %2234 = vperm.xlu0 %2233, %v1088
        %v2235 = vpop.permute.xlu0 %2234
        %2237 = vset.pattern.permute.xlu0 1
        %2238 = vperm.xlu0 %2237, %v1089
        %v2239 = vpop.permute.xlu0 %2238
        %2241 = vset.pattern.permute.xlu0 1
        %2242 = vperm.xlu0 %2241, %v1090
        %v2243 = vpop.permute.xlu0 %2242
        %2245 = vset.pattern.permute.xlu0 1
        %2246 = vperm.xlu0 %2245, %v1091
        %v2247 = vpop.permute.xlu0 %2246
        %2249 = vset.pattern.permute.xlu0 1
        %2250 = vperm.xlu0 %2249, %v1092
        %v2251 = vpop.permute.xlu0 %2250
        %2253 = vset.pattern.permute.xlu0 1
        %2254 = vperm.xlu0 %2253, %v1093
        %v2255 = vpop.permute.xlu0 %2254
        %2257 = vset.pattern.permute.xlu0 1
        %2258 = vperm.xlu0 %2257, %v1094
        %v2259 = vpop.permute.xlu0 %2258
        %2261 = vset.pattern.permute.xlu0 1
        %2262 = vperm.xlu0 %2261, %v1095
        %v2263 = vpop.permute.xlu0 %2262
        %2265 = vset.pattern.permute.xlu0 1
        %2266 = vperm.xlu0 %2265, %v1096
        %v2267 = vpop.permute.xlu0 %2266
        %2269 = vset.pattern.permute.xlu0 1
        %2270 = vperm.xlu0 %2269, %v1097
        %v2271 = vpop.permute.xlu0 %2270
        %2273 = vset.pattern.permute.xlu0 1
        %2274 = vperm.xlu0 %2273, %v1098
        %v2275 = vpop.permute.xlu0 %2274
        %2277 = vset.pattern.permute.xlu0 1
        %2278 = vperm.xlu0 %2277, %v1099
        %v2279 = vpop.permute.xlu0 %2278
        %2281 = vset.pattern.permute.xlu0 1
        %2282 = vperm.xlu0 %2281, %v1100
        %v2283 = vpop.permute.xlu0 %2282
        %2285 = vset.pattern.permute.xlu0 1
        %2286 = vperm.xlu0 %2285, %v1101
        %v2287 = vpop.permute.xlu0 %2286
        %2289 = vset.pattern.permute.xlu0 1
        %2290 = vperm.xlu0 %2289, %v1102
        %v2291 = vpop.permute.xlu0 %2290
        %2293 = vset.pattern.permute.xlu0 1
        %2294 = vperm.xlu0 %2293, %v1103
        %v2295 = vpop.permute.xlu0 %2294
        %2297 = vset.pattern.permute.xlu0 1
        %2298 = vperm.xlu0 %2297, %v1104
        %v2299 = vpop.permute.xlu0 %2298
        %2301 = vset.pattern.permute.xlu0 1
        %2302 = vperm.xlu0 %2301, %v1105
        %v2303 = vpop.permute.xlu0 %2302
        %2305 = vset.pattern.permute.xlu0 1
        %2306 = vperm.xlu0 %2305, %v1106
        %v2307 = vpop.permute.xlu0 %2306
        %2309 = vset.pattern.permute.xlu0 1
        %2310 = vperm.xlu0 %2309, %v1107
        %v2311 = vpop.permute.xlu0 %2310
        %2313 = vset.pattern.permute.xlu0 1
        %2314 = vperm.xlu0 %2313, %v1108
        %v2315 = vpop.permute.xlu0 %2314
        %2317 = vset.pattern.permute.xlu0 1
        %2318 = vperm.xlu0 %2317, %v1109
        %v2319 = vpop.permute.xlu0 %2318
        %2321 = vset.pattern.permute.xlu0 1
        %2322 = vperm.xlu0 %2321, %v1110
        %v2323 = vpop.permute.xlu0 %2322
        %2325 = vset.pattern.permute.xlu0 1
        %2326 = vperm.xlu0 %2325, %v1111
        %v2327 = vpop.permute.xlu0 %2326
        %2329 = vset.pattern.permute.xlu0 1
        %2330 = vperm.xlu0 %2329, %v1112
        %v2331 = vpop.permute.xlu0 %2330
        %2333 = vset.pattern.permute.xlu0 1
        %2334 = vperm.xlu0 %2333, %v1113
        %v2335 = vpop.permute.xlu0 %2334
        %2337 = vset.pattern.permute.xlu0 1
        %2338 = vperm.xlu0 %2337, %v1114
        %v2339 = vpop.permute.xlu0 %2338
        %2341 = vset.pattern.permute.xlu0 1
        %2342 = vperm.xlu0 %2341, %v1115
        %v2343 = vpop.permute.xlu0 %2342
        %2345 = vset.pattern.permute.xlu0 1
        %2346 = vperm.xlu0 %2345, %v1116
        %v2347 = vpop.permute.xlu0 %2346
        %2349 = vset.pattern.permute.xlu0 1
        %2350 = vperm.xlu0 %2349, %v1117
        %v2351 = vpop.permute.xlu0 %2350
        %2353 = vset.pattern.permute.xlu0 1
        %2354 = vperm.xlu0 %2353, %v1118
        %v2355 = vpop.permute.xlu0 %2354
        %2357 = vset.pattern.permute.xlu0 1
        %2358 = vperm.xlu0 %2357, %v1119
        %v2359 = vpop.permute.xlu0 %2358
        %2361 = vset.pattern.permute.xlu0 1
        %2362 = vperm.xlu0 %2361, %v1120
        %v2363 = vpop.permute.xlu0 %2362
        %2365 = vset.pattern.permute.xlu0 1
        %2366 = vperm.xlu0 %2365, %v1121
        %v2367 = vpop.permute.xlu0 %2366
        %2369 = vset.pattern.permute.xlu0 1
        %2370 = vperm.xlu0 %2369, %v1122
        %v2371 = vpop.permute.xlu0 %2370
        %2373 = vset.pattern.permute.xlu0 1
        %2374 = vperm.xlu0 %2373, %v1123
        %v2375 = vpop.permute.xlu0 %2374
        %2377 = vset.pattern.permute.xlu0 1
        %2378 = vperm.xlu0 %2377, %v1124
        %v2379 = vpop.permute.xlu0 %2378
        %2381 = vset.pattern.permute.xlu0 1
        %2382 = vperm.xlu0 %2381, %v1125
        %v2383 = vpop.permute.xlu0 %2382
        %2385 = vset.pattern.permute.xlu0 1
        %2386 = vperm.xlu0 %2385, %v1126
        %v2387 = vpop.permute.xlu0 %2386
        %2389 = vset.pattern.permute.xlu0 1
        %2390 = vperm.xlu0 %2389, %v1127
        %v2391 = vpop.permute.xlu0 %2390
        %2393 = vset.pattern.permute.xlu0 1
        %2394 = vperm.xlu0 %2393, %v1128
        %v2395 = vpop.permute.xlu0 %2394
        %2397 = vset.pattern.permute.xlu0 1
        %2398 = vperm.xlu0 %2397, %v1129
        %v2399 = vpop.permute.xlu0 %2398
        %2401 = vset.pattern.permute.xlu0 1
        %2402 = vperm.xlu0 %2401, %v1130
        %v2403 = vpop.permute.xlu0 %2402
        %2405 = vset.pattern.permute.xlu0 1
        %2406 = vperm.xlu0 %2405, %v1131
        %v2407 = vpop.permute.xlu0 %2406
        %2409 = vset.pattern.permute.xlu0 1
        %2410 = vperm.xlu0 %2409, %v1132
        %v2411 = vpop.permute.xlu0 %2410
        %2413 = vset.pattern.permute.xlu0 1
        %2414 = vperm.xlu0 %2413, %v1133
        %v2415 = vpop.permute.xlu0 %2414
        %2417 = vset.pattern.permute.xlu0 1
        %2418 = vperm.xlu0 %2417, %v1134
        %v2419 = vpop.permute.xlu0 %2418
        %v2421 = vlaneseq
        %v2422 = vshrl.u32 %v2421, 7
        %v2423 = vsub.s32 0, %v2422
        %v2424 = vrot.slane %v1908, %v2423
        %v2425 = vmul.f32 %v1911, %v2424
        %v2426 = vmul.f32 %v1915, %v2424
        %v2427 = vmul.f32 %v1919, %v2424
        %v2428 = vmul.f32 %v1923, %v2424
        %v2429 = vmul.f32 %v1927, %v2424
        %v2430 = vmul.f32 %v1931, %v2424
        %v2431 = vmul.f32 %v1935, %v2424
        %v2432 = vmul.f32 %v1939, %v2424
        %v2433 = vmul.f32 %v1943, %v2424
        %v2434 = vmul.f32 %v1947, %v2424
        %v2435 = vmul.f32 %v1951, %v2424
        %v2436 = vmul.f32 %v1955, %v2424
        %v2437 = vmul.f32 %v1959, %v2424
        %v2438 = vmul.f32 %v1963, %v2424
        %v2439 = vmul.f32 %v1967, %v2424
        %v2440 = vmul.f32 %v1971, %v2424
        %v2441 = vmul.f32 %v1975, %v2424
        %v2442 = vmul.f32 %v1979, %v2424
        %v2443 = vmul.f32 %v1983, %v2424
        %v2444 = vmul.f32 %v1987, %v2424
        %v2445 = vmul.f32 %v1991, %v2424
        %v2446 = vmul.f32 %v1995, %v2424
        %v2447 = vmul.f32 %v1999, %v2424
        %v2448 = vmul.f32 %v2003, %v2424
        %v2449 = vmul.f32 %v2007, %v2424
        %v2450 = vmul.f32 %v2011, %v2424
        %v2451 = vmul.f32 %v2015, %v2424
        %v2452 = vmul.f32 %v2019, %v2424
        %v2453 = vmul.f32 %v2023, %v2424
        %v2454 = vmul.f32 %v2027, %v2424
        %v2455 = vmul.f32 %v2031, %v2424
        %v2456 = vmul.f32 %v2035, %v2424
        %v2457 = vmul.f32 %v2039, %v2424
        %v2458 = vmul.f32 %v2043, %v2424
        %v2459 = vmul.f32 %v2047, %v2424
        %v2460 = vmul.f32 %v2051, %v2424
        %v2461 = vmul.f32 %v2055, %v2424
        %v2462 = vmul.f32 %v2059, %v2424
        %v2463 = vmul.f32 %v2063, %v2424
        %v2464 = vmul.f32 %v2067, %v2424
        %v2465 = vmul.f32 %v2071, %v2424
        %v2466 = vmul.f32 %v2075, %v2424
        %v2467 = vmul.f32 %v2079, %v2424
        %v2468 = vmul.f32 %v2083, %v2424
        %v2469 = vmul.f32 %v2087, %v2424
        %v2470 = vmul.f32 %v2091, %v2424
        %v2471 = vmul.f32 %v2095, %v2424
        %v2472 = vmul.f32 %v2099, %v2424
        %v2473 = vmul.f32 %v2103, %v2424
        %v2474 = vmul.f32 %v2107, %v2424
        %v2475 = vmul.f32 %v2111, %v2424
        %v2476 = vmul.f32 %v2115, %v2424
        %v2477 = vmul.f32 %v2119, %v2424
        %v2478 = vmul.f32 %v2123, %v2424
        %v2479 = vmul.f32 %v2127, %v2424
        %v2480 = vmul.f32 %v2131, %v2424
        %v2481 = vmul.f32 %v2135, %v2424
        %v2482 = vmul.f32 %v2139, %v2424
        %v2483 = vmul.f32 %v2143, %v2424
        %v2484 = vmul.f32 %v2147, %v2424
        %v2485 = vmul.f32 %v2151, %v2424
        %v2486 = vmul.f32 %v2155, %v2424
        %v2487 = vmul.f32 %v2159, %v2424
        %v2488 = vmul.f32 %v2163, %v2424
        %v2489 = vmul.f32 %v2167, %v2424
        %v2490 = vmul.f32 %v2171, %v2424
        %v2491 = vmul.f32 %v2175, %v2424
        %v2492 = vmul.f32 %v2179, %v2424
        %v2493 = vmul.f32 %v2183, %v2424
        %v2494 = vmul.f32 %v2187, %v2424
        %v2495 = vmul.f32 %v2191, %v2424
        %v2496 = vmul.f32 %v2195, %v2424
        %v2497 = vmul.f32 %v2199, %v2424
        %v2498 = vmul.f32 %v2203, %v2424
        %v2499 = vmul.f32 %v2207, %v2424
        %v2500 = vmul.f32 %v2211, %v2424
        %v2501 = vmul.f32 %v2215, %v2424
        %v2502 = vmul.f32 %v2219, %v2424
        %v2503 = vmul.f32 %v2223, %v2424
        %v2504 = vmul.f32 %v2227, %v2424
        %v2505 = vmul.f32 %v2231, %v2424
        %v2506 = vmul.f32 %v2235, %v2424
        %v2507 = vmul.f32 %v2239, %v2424
        %v2508 = vmul.f32 %v2243, %v2424
        %v2509 = vmul.f32 %v2247, %v2424
        %v2510 = vmul.f32 %v2251, %v2424
        %v2511 = vmul.f32 %v2255, %v2424
        %v2512 = vmul.f32 %v2259, %v2424
        %v2513 = vmul.f32 %v2263, %v2424
        %v2514 = vmul.f32 %v2267, %v2424
        %v2515 = vmul.f32 %v2271, %v2424
        %v2516 = vmul.f32 %v2275, %v2424
        %v2517 = vmul.f32 %v2279, %v2424
        %v2518 = vmul.f32 %v2283, %v2424
        %v2519 = vmul.f32 %v2287, %v2424
        %v2520 = vmul.f32 %v2291, %v2424
        %v2521 = vmul.f32 %v2295, %v2424
        %v2522 = vmul.f32 %v2299, %v2424
        %v2523 = vmul.f32 %v2303, %v2424
        %v2524 = vmul.f32 %v2307, %v2424
        %v2525 = vmul.f32 %v2311, %v2424
        %v2526 = vmul.f32 %v2315, %v2424
        %v2527 = vmul.f32 %v2319, %v2424
        %v2528 = vmul.f32 %v2323, %v2424
        %v2529 = vmul.f32 %v2327, %v2424
        %v2530 = vmul.f32 %v2331, %v2424
        %v2531 = vmul.f32 %v2335, %v2424
        %v2532 = vmul.f32 %v2339, %v2424
        %v2533 = vmul.f32 %v2343, %v2424
        %v2534 = vmul.f32 %v2347, %v2424
        %v2535 = vmul.f32 %v2351, %v2424
        %v2536 = vmul.f32 %v2355, %v2424
        %v2537 = vmul.f32 %v2359, %v2424
        %v2538 = vmul.f32 %v2363, %v2424
        %v2539 = vmul.f32 %v2367, %v2424
        %v2540 = vmul.f32 %v2371, %v2424
        %v2541 = vmul.f32 %v2375, %v2424
        %v2542 = vmul.f32 %v2379, %v2424
        %v2543 = vmul.f32 %v2383, %v2424
        %v2544 = vmul.f32 %v2387, %v2424
        %v2545 = vmul.f32 %v2391, %v2424
        %v2546 = vmul.f32 %v2395, %v2424
        %v2547 = vmul.f32 %v2399, %v2424
        %v2548 = vmul.f32 %v2403, %v2424
        %v2549 = vmul.f32 %v2407, %v2424
        %v2550 = vmul.f32 %v2411, %v2424
        %v2551 = vmul.f32 %v2415, %v2424
        %v2552 = vmul.f32 %v2419, %v2424
        %v2553 = vadd.f32 %v1780, %v2425
        %v2554 = vadd.f32 %v1781, %v2426
        %v2555 = vadd.f32 %v1782, %v2427
        %v2556 = vadd.f32 %v1783, %v2428
        %v2557 = vadd.f32 %v1784, %v2429
        %v2558 = vadd.f32 %v1785, %v2430
        %v2559 = vadd.f32 %v1786, %v2431
        %v2560 = vadd.f32 %v1787, %v2432
        %v2561 = vadd.f32 %v1788, %v2433
        %v2562 = vadd.f32 %v1789, %v2434
        %v2563 = vadd.f32 %v1790, %v2435
        %v2564 = vadd.f32 %v1791, %v2436
        %v2565 = vadd.f32 %v1792, %v2437
        %v2566 = vadd.f32 %v1793, %v2438
        %v2567 = vadd.f32 %v1794, %v2439
        %v2568 = vadd.f32 %v1795, %v2440
        %v2569 = vadd.f32 %v1796, %v2441
        %v2570 = vadd.f32 %v1797, %v2442
        %v2571 = vadd.f32 %v1798, %v2443
        %v2572 = vadd.f32 %v1799, %v2444
        %v2573 = vadd.f32 %v1800, %v2445
        %v2574 = vadd.f32 %v1801, %v2446
        %v2575 = vadd.f32 %v1802, %v2447
        %v2576 = vadd.f32 %v1803, %v2448
        %v2577 = vadd.f32 %v1804, %v2449
        %v2578 = vadd.f32 %v1805, %v2450
        %v2579 = vadd.f32 %v1806, %v2451
        %v2580 = vadd.f32 %v1807, %v2452
        %v2581 = vadd.f32 %v1808, %v2453
        %v2582 = vadd.f32 %v1809, %v2454
        %v2583 = vadd.f32 %v1810, %v2455
        %v2584 = vadd.f32 %v1811, %v2456
        %v2585 = vadd.f32 %v1812, %v2457
        %v2586 = vadd.f32 %v1813, %v2458
        %v2587 = vadd.f32 %v1814, %v2459
        %v2588 = vadd.f32 %v1815, %v2460
        %v2589 = vadd.f32 %v1816, %v2461
        %v2590 = vadd.f32 %v1817, %v2462
        %v2591 = vadd.f32 %v1818, %v2463
        %v2592 = vadd.f32 %v1819, %v2464
        %v2593 = vadd.f32 %v1820, %v2465
        %v2594 = vadd.f32 %v1821, %v2466
        %v2595 = vadd.f32 %v1822, %v2467
        %v2596 = vadd.f32 %v1823, %v2468
        %v2597 = vadd.f32 %v1824, %v2469
        %v2598 = vadd.f32 %v1825, %v2470
        %v2599 = vadd.f32 %v1826, %v2471
        %v2600 = vadd.f32 %v1827, %v2472
        %v2601 = vadd.f32 %v1828, %v2473
        %v2602 = vadd.f32 %v1829, %v2474
        %v2603 = vadd.f32 %v1830, %v2475
        %v2604 = vadd.f32 %v1831, %v2476
        %v2605 = vadd.f32 %v1832, %v2477
        %v2606 = vadd.f32 %v1833, %v2478
        %v2607 = vadd.f32 %v1834, %v2479
        %v2608 = vadd.f32 %v1835, %v2480
        %v2609 = vadd.f32 %v1836, %v2481
        %v2610 = vadd.f32 %v1837, %v2482
        %v2611 = vadd.f32 %v1838, %v2483
        %v2612 = vadd.f32 %v1839, %v2484
        %v2613 = vadd.f32 %v1840, %v2485
        %v2614 = vadd.f32 %v1841, %v2486
        %v2615 = vadd.f32 %v1842, %v2487
        %v2616 = vadd.f32 %v1843, %v2488
        %v2617 = vadd.f32 %v1844, %v2489
        %v2618 = vadd.f32 %v1845, %v2490
        %v2619 = vadd.f32 %v1846, %v2491
        %v2620 = vadd.f32 %v1847, %v2492
        %v2621 = vadd.f32 %v1848, %v2493
        %v2622 = vadd.f32 %v1849, %v2494
        %v2623 = vadd.f32 %v1850, %v2495
        %v2624 = vadd.f32 %v1851, %v2496
        %v2625 = vadd.f32 %v1852, %v2497
        %v2626 = vadd.f32 %v1853, %v2498
        %v2627 = vadd.f32 %v1854, %v2499
        %v2628 = vadd.f32 %v1855, %v2500
        %v2629 = vadd.f32 %v1856, %v2501
        %v2630 = vadd.f32 %v1857, %v2502
        %v2631 = vadd.f32 %v1858, %v2503
        %v2632 = vadd.f32 %v1859, %v2504
        %v2633 = vadd.f32 %v1860, %v2505
        %v2634 = vadd.f32 %v1861, %v2506
        %v2635 = vadd.f32 %v1862, %v2507
        %v2636 = vadd.f32 %v1863, %v2508
        %v2637 = vadd.f32 %v1864, %v2509
        %v2638 = vadd.f32 %v1865, %v2510
        %v2639 = vadd.f32 %v1866, %v2511
        %v2640 = vadd.f32 %v1867, %v2512
        %v2641 = vadd.f32 %v1868, %v2513
        %v2642 = vadd.f32 %v1869, %v2514
        %v2643 = vadd.f32 %v1870, %v2515
        %v2644 = vadd.f32 %v1871, %v2516
        %v2645 = vadd.f32 %v1872, %v2517
        %v2646 = vadd.f32 %v1873, %v2518
        %v2647 = vadd.f32 %v1874, %v2519
        %v2648 = vadd.f32 %v1875, %v2520
        %v2649 = vadd.f32 %v1876, %v2521
        %v2650 = vadd.f32 %v1877, %v2522
        %v2651 = vadd.f32 %v1878, %v2523
        %v2652 = vadd.f32 %v1879, %v2524
        %v2653 = vadd.f32 %v1880, %v2525
        %v2654 = vadd.f32 %v1881, %v2526
        %v2655 = vadd.f32 %v1882, %v2527
        %v2656 = vadd.f32 %v1883, %v2528
        %v2657 = vadd.f32 %v1884, %v2529
        %v2658 = vadd.f32 %v1885, %v2530
        %v2659 = vadd.f32 %v1886, %v2531
        %v2660 = vadd.f32 %v1887, %v2532
        %v2661 = vadd.f32 %v1888, %v2533
        %v2662 = vadd.f32 %v1889, %v2534
        %v2663 = vadd.f32 %v1890, %v2535
        %v2664 = vadd.f32 %v1891, %v2536
        %v2665 = vadd.f32 %v1892, %v2537
        %v2666 = vadd.f32 %v1893, %v2538
        %v2667 = vadd.f32 %v1894, %v2539
        %v2668 = vadd.f32 %v1895, %v2540
        %v2669 = vadd.f32 %v1896, %v2541
        %v2670 = vadd.f32 %v1897, %v2542
        %v2671 = vadd.f32 %v1898, %v2543
        %v2672 = vadd.f32 %v1899, %v2544
        %v2673 = vadd.f32 %v1900, %v2545
        %v2674 = vadd.f32 %v1901, %v2546
        %v2675 = vadd.f32 %v1902, %v2547
        %v2676 = vadd.f32 %v1903, %v2548
        %v2677 = vadd.f32 %v1904, %v2549
        %v2678 = vadd.f32 %v1905, %v2550
        %v2679 = vadd.f32 %v1906, %v2551
        %v2680 = vadd.f32 %v1907, %v2552
        %v2681 = vld [vmem:[%s1 + $0x2] sm:$0x1]
        %2682 = vset.pattern.permute.xlu0 2
        %2683 = vperm.xlu0 %2682, %v1007
        %v2684 = vpop.permute.xlu0 %2683
        %2686 = vset.pattern.permute.xlu0 2
        %2687 = vperm.xlu0 %2686, %v1008
        %v2688 = vpop.permute.xlu0 %2687
        %2690 = vset.pattern.permute.xlu0 2
        %2691 = vperm.xlu0 %2690, %v1009
        %v2692 = vpop.permute.xlu0 %2691
        %2694 = vset.pattern.permute.xlu0 2
        %2695 = vperm.xlu0 %2694, %v1010
        %v2696 = vpop.permute.xlu0 %2695
        %2698 = vset.pattern.permute.xlu0 2
        %2699 = vperm.xlu0 %2698, %v1011
        %v2700 = vpop.permute.xlu0 %2699
        %2702 = vset.pattern.permute.xlu0 2
        %2703 = vperm.xlu0 %2702, %v1012
        %v2704 = vpop.permute.xlu0 %2703
        %2706 = vset.pattern.permute.xlu0 2
        %2707 = vperm.xlu0 %2706, %v1013
        %v2708 = vpop.permute.xlu0 %2707
        %2710 = vset.pattern.permute.xlu0 2
        %2711 = vperm.xlu0 %2710, %v1014
        %v2712 = vpop.permute.xlu0 %2711
        %2714 = vset.pattern.permute.xlu0 2
        %2715 = vperm.xlu0 %2714, %v1015
        %v2716 = vpop.permute.xlu0 %2715
        %2718 = vset.pattern.permute.xlu0 2
        %2719 = vperm.xlu0 %2718, %v1016
        %v2720 = vpop.permute.xlu0 %2719
        %2722 = vset.pattern.permute.xlu0 2
        %2723 = vperm.xlu0 %2722, %v1017
        %v2724 = vpop.permute.xlu0 %2723
        %2726 = vset.pattern.permute.xlu0 2
        %2727 = vperm.xlu0 %2726, %v1018
        %v2728 = vpop.permute.xlu0 %2727
        %2730 = vset.pattern.permute.xlu0 2
        %2731 = vperm.xlu0 %2730, %v1019
        %v2732 = vpop.permute.xlu0 %2731
        %2734 = vset.pattern.permute.xlu0 2
        %2735 = vperm.xlu0 %2734, %v1020
        %v2736 = vpop.permute.xlu0 %2735
        %2738 = vset.pattern.permute.xlu0 2
        %2739 = vperm.xlu0 %2738, %v1021
        %v2740 = vpop.permute.xlu0 %2739
        %2742 = vset.pattern.permute.xlu0 2
        %2743 = vperm.xlu0 %2742, %v1022
        %v2744 = vpop.permute.xlu0 %2743
        %2746 = vset.pattern.permute.xlu0 2
        %2747 = vperm.xlu0 %2746, %v1023
        %v2748 = vpop.permute.xlu0 %2747
        %2750 = vset.pattern.permute.xlu0 2
        %2751 = vperm.xlu0 %2750, %v1024
        %v2752 = vpop.permute.xlu0 %2751
        %2754 = vset.pattern.permute.xlu0 2
        %2755 = vperm.xlu0 %2754, %v1025
        %v2756 = vpop.permute.xlu0 %2755
        %2758 = vset.pattern.permute.xlu0 2
        %2759 = vperm.xlu0 %2758, %v1026
        %v2760 = vpop.permute.xlu0 %2759
        %2762 = vset.pattern.permute.xlu0 2
        %2763 = vperm.xlu0 %2762, %v1027
        %v2764 = vpop.permute.xlu0 %2763
        %2766 = vset.pattern.permute.xlu0 2
        %2767 = vperm.xlu0 %2766, %v1028
        %v2768 = vpop.permute.xlu0 %2767
        %2770 = vset.pattern.permute.xlu0 2
        %2771 = vperm.xlu0 %2770, %v1029
        %v2772 = vpop.permute.xlu0 %2771
        %2774 = vset.pattern.permute.xlu0 2
        %2775 = vperm.xlu0 %2774, %v1030
        %v2776 = vpop.permute.xlu0 %2775
        %2778 = vset.pattern.permute.xlu0 2
        %2779 = vperm.xlu0 %2778, %v1031
        %v2780 = vpop.permute.xlu0 %2779
        %2782 = vset.pattern.permute.xlu0 2
        %2783 = vperm.xlu0 %2782, %v1032
        %v2784 = vpop.permute.xlu0 %2783
        %2786 = vset.pattern.permute.xlu0 2
        %2787 = vperm.xlu0 %2786, %v1033
        %v2788 = vpop.permute.xlu0 %2787
        %2790 = vset.pattern.permute.xlu0 2
        %2791 = vperm.xlu0 %2790, %v1034
        %v2792 = vpop.permute.xlu0 %2791
        %2794 = vset.pattern.permute.xlu0 2
        %2795 = vperm.xlu0 %2794, %v1035
        %v2796 = vpop.permute.xlu0 %2795
        %2798 = vset.pattern.permute.xlu0 2
        %2799 = vperm.xlu0 %2798, %v1036
        %v2800 = vpop.permute.xlu0 %2799
        %2802 = vset.pattern.permute.xlu0 2
        %2803 = vperm.xlu0 %2802, %v1037
        %v2804 = vpop.permute.xlu0 %2803
        %2806 = vset.pattern.permute.xlu0 2
        %2807 = vperm.xlu0 %2806, %v1038
        %v2808 = vpop.permute.xlu0 %2807
        %2810 = vset.pattern.permute.xlu0 2
        %2811 = vperm.xlu0 %2810, %v1039
        %v2812 = vpop.permute.xlu0 %2811
        %2814 = vset.pattern.permute.xlu0 2
        %2815 = vperm.xlu0 %2814, %v1040
        %v2816 = vpop.permute.xlu0 %2815
        %2818 = vset.pattern.permute.xlu0 2
        %2819 = vperm.xlu0 %2818, %v1041
        %v2820 = vpop.permute.xlu0 %2819
        %2822 = vset.pattern.permute.xlu0 2
        %2823 = vperm.xlu0 %2822, %v1042
        %v2824 = vpop.permute.xlu0 %2823
        %2826 = vset.pattern.permute.xlu0 2
        %2827 = vperm.xlu0 %2826, %v1043
        %v2828 = vpop.permute.xlu0 %2827
        %2830 = vset.pattern.permute.xlu0 2
        %2831 = vperm.xlu0 %2830, %v1044
        %v2832 = vpop.permute.xlu0 %2831
        %2834 = vset.pattern.permute.xlu0 2
        %2835 = vperm.xlu0 %2834, %v1045
        %v2836 = vpop.permute.xlu0 %2835
        %2838 = vset.pattern.permute.xlu0 2
        %2839 = vperm.xlu0 %2838, %v1046
        %v2840 = vpop.permute.xlu0 %2839
        %2842 = vset.pattern.permute.xlu0 2
        %2843 = vperm.xlu0 %2842, %v1047
        %v2844 = vpop.permute.xlu0 %2843
        %2846 = vset.pattern.permute.xlu0 2
        %2847 = vperm.xlu0 %2846, %v1048
        %v2848 = vpop.permute.xlu0 %2847
        %2850 = vset.pattern.permute.xlu0 2
        %2851 = vperm.xlu0 %2850, %v1049
        %v2852 = vpop.permute.xlu0 %2851
        %2854 = vset.pattern.permute.xlu0 2
        %2855 = vperm.xlu0 %2854, %v1050
        %v2856 = vpop.permute.xlu0 %2855
        %2858 = vset.pattern.permute.xlu0 2
        %2859 = vperm.xlu0 %2858, %v1051
        %v2860 = vpop.permute.xlu0 %2859
        %2862 = vset.pattern.permute.xlu0 2
        %2863 = vperm.xlu0 %2862, %v1052
        %v2864 = vpop.permute.xlu0 %2863
        %2866 = vset.pattern.permute.xlu0 2
        %2867 = vperm.xlu0 %2866, %v1053
        %v2868 = vpop.permute.xlu0 %2867
        %2870 = vset.pattern.permute.xlu0 2
        %2871 = vperm.xlu0 %2870, %v1054
        %v2872 = vpop.permute.xlu0 %2871
        %2874 = vset.pattern.permute.xlu0 2
        %2875 = vperm.xlu0 %2874, %v1055
        %v2876 = vpop.permute.xlu0 %2875
        %2878 = vset.pattern.permute.xlu0 2
        %2879 = vperm.xlu0 %2878, %v1056
        %v2880 = vpop.permute.xlu0 %2879
        %2882 = vset.pattern.permute.xlu0 2
        %2883 = vperm.xlu0 %2882, %v1057
        %v2884 = vpop.permute.xlu0 %2883
        %2886 = vset.pattern.permute.xlu0 2
        %2887 = vperm.xlu0 %2886, %v1058
        %v2888 = vpop.permute.xlu0 %2887
        %2890 = vset.pattern.permute.xlu0 2
        %2891 = vperm.xlu0 %2890, %v1059
        %v2892 = vpop.permute.xlu0 %2891
        %2894 = vset.pattern.permute.xlu0 2
        %2895 = vperm.xlu0 %2894, %v1060
        %v2896 = vpop.permute.xlu0 %2895
        %2898 = vset.pattern.permute.xlu0 2
        %2899 = vperm.xlu0 %2898, %v1061
        %v2900 = vpop.permute.xlu0 %2899
        %2902 = vset.pattern.permute.xlu0 2
        %2903 = vperm.xlu0 %2902, %v1062
        %v2904 = vpop.permute.xlu0 %2903
        %2906 = vset.pattern.permute.xlu0 2
        %2907 = vperm.xlu0 %2906, %v1063
        %v2908 = vpop.permute.xlu0 %2907
        %2910 = vset.pattern.permute.xlu0 2
        %2911 = vperm.xlu0 %2910, %v1064
        %v2912 = vpop.permute.xlu0 %2911
        %2914 = vset.pattern.permute.xlu0 2
        %2915 = vperm.xlu0 %2914, %v1065
        %v2916 = vpop.permute.xlu0 %2915
        %2918 = vset.pattern.permute.xlu0 2
        %2919 = vperm.xlu0 %2918, %v1066
        %v2920 = vpop.permute.xlu0 %2919
        %2922 = vset.pattern.permute.xlu0 2
        %2923 = vperm.xlu0 %2922, %v1067
        %v2924 = vpop.permute.xlu0 %2923
        %2926 = vset.pattern.permute.xlu0 2
        %2927 = vperm.xlu0 %2926, %v1068
        %v2928 = vpop.permute.xlu0 %2927
        %2930 = vset.pattern.permute.xlu0 2
        %2931 = vperm.xlu0 %2930, %v1069
        %v2932 = vpop.permute.xlu0 %2931
        %2934 = vset.pattern.permute.xlu0 2
        %2935 = vperm.xlu0 %2934, %v1070
        %v2936 = vpop.permute.xlu0 %2935
        %2938 = vset.pattern.permute.xlu0 2
        %2939 = vperm.xlu0 %2938, %v1071
        %v2940 = vpop.permute.xlu0 %2939
        %2942 = vset.pattern.permute.xlu0 2
        %2943 = vperm.xlu0 %2942, %v1072
        %v2944 = vpop.permute.xlu0 %2943
        %2946 = vset.pattern.permute.xlu0 2
        %2947 = vperm.xlu0 %2946, %v1073
        %v2948 = vpop.permute.xlu0 %2947
        %2950 = vset.pattern.permute.xlu0 2
        %2951 = vperm.xlu0 %2950, %v1074
        %v2952 = vpop.permute.xlu0 %2951
        %2954 = vset.pattern.permute.xlu0 2
        %2955 = vperm.xlu0 %2954, %v1075
        %v2956 = vpop.permute.xlu0 %2955
        %2958 = vset.pattern.permute.xlu0 2
        %2959 = vperm.xlu0 %2958, %v1076
        %v2960 = vpop.permute.xlu0 %2959
        %2962 = vset.pattern.permute.xlu0 2
        %2963 = vperm.xlu0 %2962, %v1077
        %v2964 = vpop.permute.xlu0 %2963
        %2966 = vset.pattern.permute.xlu0 2
        %2967 = vperm.xlu0 %2966, %v1078
        %v2968 = vpop.permute.xlu0 %2967
        %2970 = vset.pattern.permute.xlu0 2
        %2971 = vperm.xlu0 %2970, %v1079
        %v2972 = vpop.permute.xlu0 %2971
        %2974 = vset.pattern.permute.xlu0 2
        %2975 = vperm.xlu0 %2974, %v1080
        %v2976 = vpop.permute.xlu0 %2975
        %2978 = vset.pattern.permute.xlu0 2
        %2979 = vperm.xlu0 %2978, %v1081
        %v2980 = vpop.permute.xlu0 %2979
        %2982 = vset.pattern.permute.xlu0 2
        %2983 = vperm.xlu0 %2982, %v1082
        %v2984 = vpop.permute.xlu0 %2983
        %2986 = vset.pattern.permute.xlu0 2
        %2987 = vperm.xlu0 %2986, %v1083
        %v2988 = vpop.permute.xlu0 %2987
        %2990 = vset.pattern.permute.xlu0 2
        %2991 = vperm.xlu0 %2990, %v1084
        %v2992 = vpop.permute.xlu0 %2991
        %2994 = vset.pattern.permute.xlu0 2
        %2995 = vperm.xlu0 %2994, %v1085
        %v2996 = vpop.permute.xlu0 %2995
        %2998 = vset.pattern.permute.xlu0 2
        %2999 = vperm.xlu0 %2998, %v1086
        %v3000 = vpop.permute.xlu0 %2999
        %3002 = vset.pattern.permute.xlu0 2
        %3003 = vperm.xlu0 %3002, %v1087
        %v3004 = vpop.permute.xlu0 %3003
        %3006 = vset.pattern.permute.xlu0 2
        %3007 = vperm.xlu0 %3006, %v1088
        %v3008 = vpop.permute.xlu0 %3007
        %3010 = vset.pattern.permute.xlu0 2
        %3011 = vperm.xlu0 %3010, %v1089
        %v3012 = vpop.permute.xlu0 %3011
        %3014 = vset.pattern.permute.xlu0 2
        %3015 = vperm.xlu0 %3014, %v1090
        %v3016 = vpop.permute.xlu0 %3015
        %3018 = vset.pattern.permute.xlu0 2
        %3019 = vperm.xlu0 %3018, %v1091
        %v3020 = vpop.permute.xlu0 %3019
        %3022 = vset.pattern.permute.xlu0 2
        %3023 = vperm.xlu0 %3022, %v1092
        %v3024 = vpop.permute.xlu0 %3023
        %3026 = vset.pattern.permute.xlu0 2
        %3027 = vperm.xlu0 %3026, %v1093
        %v3028 = vpop.permute.xlu0 %3027
        %3030 = vset.pattern.permute.xlu0 2
        %3031 = vperm.xlu0 %3030, %v1094
        %v3032 = vpop.permute.xlu0 %3031
        %3034 = vset.pattern.permute.xlu0 2
        %3035 = vperm.xlu0 %3034, %v1095
        %v3036 = vpop.permute.xlu0 %3035
        %3038 = vset.pattern.permute.xlu0 2
        %3039 = vperm.xlu0 %3038, %v1096
        %v3040 = vpop.permute.xlu0 %3039
        %3042 = vset.pattern.permute.xlu0 2
        %3043 = vperm.xlu0 %3042, %v1097
        %v3044 = vpop.permute.xlu0 %3043
        %3046 = vset.pattern.permute.xlu0 2
        %3047 = vperm.xlu0 %3046, %v1098
        %v3048 = vpop.permute.xlu0 %3047
        %3050 = vset.pattern.permute.xlu0 2
        %3051 = vperm.xlu0 %3050, %v1099
        %v3052 = vpop.permute.xlu0 %3051
        %3054 = vset.pattern.permute.xlu0 2
        %3055 = vperm.xlu0 %3054, %v1100
        %v3056 = vpop.permute.xlu0 %3055
        %3058 = vset.pattern.permute.xlu0 2
        %3059 = vperm.xlu0 %3058, %v1101
        %v3060 = vpop.permute.xlu0 %3059
        %3062 = vset.pattern.permute.xlu0 2
        %3063 = vperm.xlu0 %3062, %v1102
        %v3064 = vpop.permute.xlu0 %3063
        %3066 = vset.pattern.permute.xlu0 2
        %3067 = vperm.xlu0 %3066, %v1103
        %v3068 = vpop.permute.xlu0 %3067
        %3070 = vset.pattern.permute.xlu0 2
        %3071 = vperm.xlu0 %3070, %v1104
        %v3072 = vpop.permute.xlu0 %3071
        %3074 = vset.pattern.permute.xlu0 2
        %3075 = vperm.xlu0 %3074, %v1105
        %v3076 = vpop.permute.xlu0 %3075
        %3078 = vset.pattern.permute.xlu0 2
        %3079 = vperm.xlu0 %3078, %v1106
        %v3080 = vpop.permute.xlu0 %3079
        %3082 = vset.pattern.permute.xlu0 2
        %3083 = vperm.xlu0 %3082, %v1107
        %v3084 = vpop.permute.xlu0 %3083
        %3086 = vset.pattern.permute.xlu0 2
        %3087 = vperm.xlu0 %3086, %v1108
        %v3088 = vpop.permute.xlu0 %3087
        %3090 = vset.pattern.permute.xlu0 2
        %3091 = vperm.xlu0 %3090, %v1109
        %v3092 = vpop.permute.xlu0 %3091
        %3094 = vset.pattern.permute.xlu0 2
        %3095 = vperm.xlu0 %3094, %v1110
        %v3096 = vpop.permute.xlu0 %3095
        %3098 = vset.pattern.permute.xlu0 2
        %3099 = vperm.xlu0 %3098, %v1111
        %v3100 = vpop.permute.xlu0 %3099
        %3102 = vset.pattern.permute.xlu0 2
        %3103 = vperm.xlu0 %3102, %v1112
        %v3104 = vpop.permute.xlu0 %3103
        %3106 = vset.pattern.permute.xlu0 2
        %3107 = vperm.xlu0 %3106, %v1113
        %v3108 = vpop.permute.xlu0 %3107
        %3110 = vset.pattern.permute.xlu0 2
        %3111 = vperm.xlu0 %3110, %v1114
        %v3112 = vpop.permute.xlu0 %3111
        %3114 = vset.pattern.permute.xlu0 2
        %3115 = vperm.xlu0 %3114, %v1115
        %v3116 = vpop.permute.xlu0 %3115
        %3118 = vset.pattern.permute.xlu0 2
        %3119 = vperm.xlu0 %3118, %v1116
        %v3120 = vpop.permute.xlu0 %3119
        %3122 = vset.pattern.permute.xlu0 2
        %3123 = vperm.xlu0 %3122, %v1117
        %v3124 = vpop.permute.xlu0 %3123
        %3126 = vset.pattern.permute.xlu0 2
        %3127 = vperm.xlu0 %3126, %v1118
        %v3128 = vpop.permute.xlu0 %3127
        %3130 = vset.pattern.permute.xlu0 2
        %3131 = vperm.xlu0 %3130, %v1119
        %v3132 = vpop.permute.xlu0 %3131
        %3134 = vset.pattern.permute.xlu0 2
        %3135 = vperm.xlu0 %3134, %v1120
        %v3136 = vpop.permute.xlu0 %3135
        %3138 = vset.pattern.permute.xlu0 2
        %3139 = vperm.xlu0 %3138, %v1121
        %v3140 = vpop.permute.xlu0 %3139
        %3142 = vset.pattern.permute.xlu0 2
        %3143 = vperm.xlu0 %3142, %v1122
        %v3144 = vpop.permute.xlu0 %3143
        %3146 = vset.pattern.permute.xlu0 2
        %3147 = vperm.xlu0 %3146, %v1123
        %v3148 = vpop.permute.xlu0 %3147
        %3150 = vset.pattern.permute.xlu0 2
        %3151 = vperm.xlu0 %3150, %v1124
        %v3152 = vpop.permute.xlu0 %3151
        %3154 = vset.pattern.permute.xlu0 2
        %3155 = vperm.xlu0 %3154, %v1125
        %v3156 = vpop.permute.xlu0 %3155
        %3158 = vset.pattern.permute.xlu0 2
        %3159 = vperm.xlu0 %3158, %v1126
        %v3160 = vpop.permute.xlu0 %3159
        %3162 = vset.pattern.permute.xlu0 2
        %3163 = vperm.xlu0 %3162, %v1127
        %v3164 = vpop.permute.xlu0 %3163
        %3166 = vset.pattern.permute.xlu0 2
        %3167 = vperm.xlu0 %3166, %v1128
        %v3168 = vpop.permute.xlu0 %3167
        %3170 = vset.pattern.permute.xlu0 2
        %3171 = vperm.xlu0 %3170, %v1129
        %v3172 = vpop.permute.xlu0 %3171
        %3174 = vset.pattern.permute.xlu0 2
        %3175 = vperm.xlu0 %3174, %v1130
        %v3176 = vpop.permute.xlu0 %3175
        %3178 = vset.pattern.permute.xlu0 2
        %3179 = vperm.xlu0 %3178, %v1131
        %v3180 = vpop.permute.xlu0 %3179
        %3182 = vset.pattern.permute.xlu0 2
        %3183 = vperm.xlu0 %3182, %v1132
        %v3184 = vpop.permute.xlu0 %3183
        %3186 = vset.pattern.permute.xlu0 2
        %3187 = vperm.xlu0 %3186, %v1133
        %v3188 = vpop.permute.xlu0 %3187
        %3190 = vset.pattern.permute.xlu0 2
        %3191 = vperm.xlu0 %3190, %v1134
        %v3192 = vpop.permute.xlu0 %3191
        %v3194 = vlaneseq
        %v3195 = vshrl.u32 %v3194, 7
        %v3196 = vsub.s32 0, %v3195
        %v3197 = vrot.slane %v2681, %v3196
        %v3198 = vmul.f32 %v2684, %v3197
        %v3199 = vmul.f32 %v2688, %v3197
        %v3200 = vmul.f32 %v2692, %v3197
        %v3201 = vmul.f32 %v2696, %v3197
        %v3202 = vmul.f32 %v2700, %v3197
        %v3203 = vmul.f32 %v2704, %v3197
        %v3204 = vmul.f32 %v2708, %v3197
        %v3205 = vmul.f32 %v2712, %v3197
        %v3206 = vmul.f32 %v2716, %v3197
        %v3207 = vmul.f32 %v2720, %v3197
        %v3208 = vmul.f32 %v2724, %v3197
        %v3209 = vmul.f32 %v2728, %v3197
        %v3210 = vmul.f32 %v2732, %v3197
        %v3211 = vmul.f32 %v2736, %v3197
        %v3212 = vmul.f32 %v2740, %v3197
        %v3213 = vmul.f32 %v2744, %v3197
        %v3214 = vmul.f32 %v2748, %v3197
        %v3215 = vmul.f32 %v2752, %v3197
        %v3216 = vmul.f32 %v2756, %v3197
        %v3217 = vmul.f32 %v2760, %v3197
        %v3218 = vmul.f32 %v2764, %v3197
        %v3219 = vmul.f32 %v2768, %v3197
        %v3220 = vmul.f32 %v2772, %v3197
        %v3221 = vmul.f32 %v2776, %v3197
        %v3222 = vmul.f32 %v2780, %v3197
        %v3223 = vmul.f32 %v2784, %v3197
        %v3224 = vmul.f32 %v2788, %v3197
        %v3225 = vmul.f32 %v2792, %v3197
        %v3226 = vmul.f32 %v2796, %v3197
        %v3227 = vmul.f32 %v2800, %v3197
        %v3228 = vmul.f32 %v2804, %v3197
        %v3229 = vmul.f32 %v2808, %v3197
        %v3230 = vmul.f32 %v2812, %v3197
        %v3231 = vmul.f32 %v2816, %v3197
        %v3232 = vmul.f32 %v2820, %v3197
        %v3233 = vmul.f32 %v2824, %v3197
        %v3234 = vmul.f32 %v2828, %v3197
        %v3235 = vmul.f32 %v2832, %v3197
        %v3236 = vmul.f32 %v2836, %v3197
        %v3237 = vmul.f32 %v2840, %v3197
        %v3238 = vmul.f32 %v2844, %v3197
        %v3239 = vmul.f32 %v2848, %v3197
        %v3240 = vmul.f32 %v2852, %v3197
        %v3241 = vmul.f32 %v2856, %v3197
        %v3242 = vmul.f32 %v2860, %v3197
        %v3243 = vmul.f32 %v2864, %v3197
        %v3244 = vmul.f32 %v2868, %v3197
        %v3245 = vmul.f32 %v2872, %v3197
        %v3246 = vmul.f32 %v2876, %v3197
        %v3247 = vmul.f32 %v2880, %v3197
        %v3248 = vmul.f32 %v2884, %v3197
        %v3249 = vmul.f32 %v2888, %v3197
        %v3250 = vmul.f32 %v2892, %v3197
        %v3251 = vmul.f32 %v2896, %v3197
        %v3252 = vmul.f32 %v2900, %v3197
        %v3253 = vmul.f32 %v2904, %v3197
        %v3254 = vmul.f32 %v2908, %v3197
        %v3255 = vmul.f32 %v2912, %v3197
        %v3256 = vmul.f32 %v2916, %v3197
        %v3257 = vmul.f32 %v2920, %v3197
        %v3258 = vmul.f32 %v2924, %v3197
        %v3259 = vmul.f32 %v2928, %v3197
        %v3260 = vmul.f32 %v2932, %v3197
        %v3261 = vmul.f32 %v2936, %v3197
        %v3262 = vmul.f32 %v2940, %v3197
        %v3263 = vmul.f32 %v2944, %v3197
        %v3264 = vmul.f32 %v2948, %v3197
        %v3265 = vmul.f32 %v2952, %v3197
        %v3266 = vmul.f32 %v2956, %v3197
        %v3267 = vmul.f32 %v2960, %v3197
        %v3268 = vmul.f32 %v2964, %v3197
        %v3269 = vmul.f32 %v2968, %v3197
        %v3270 = vmul.f32 %v2972, %v3197
        %v3271 = vmul.f32 %v2976, %v3197
        %v3272 = vmul.f32 %v2980, %v3197
        %v3273 = vmul.f32 %v2984, %v3197
        %v3274 = vmul.f32 %v2988, %v3197
        %v3275 = vmul.f32 %v2992, %v3197
        %v3276 = vmul.f32 %v2996, %v3197
        %v3277 = vmul.f32 %v3000, %v3197
        %v3278 = vmul.f32 %v3004, %v3197
        %v3279 = vmul.f32 %v3008, %v3197
        %v3280 = vmul.f32 %v3012, %v3197
        %v3281 = vmul.f32 %v3016, %v3197
        %v3282 = vmul.f32 %v3020, %v3197
        %v3283 = vmul.f32 %v3024, %v3197
        %v3284 = vmul.f32 %v3028, %v3197
        %v3285 = vmul.f32 %v3032, %v3197
        %v3286 = vmul.f32 %v3036, %v3197
        %v3287 = vmul.f32 %v3040, %v3197
        %v3288 = vmul.f32 %v3044, %v3197
        %v3289 = vmul.f32 %v3048, %v3197
        %v3290 = vmul.f32 %v3052, %v3197
        %v3291 = vmul.f32 %v3056, %v3197
        %v3292 = vmul.f32 %v3060, %v3197
        %v3293 = vmul.f32 %v3064, %v3197
        %v3294 = vmul.f32 %v3068, %v3197
        %v3295 = vmul.f32 %v3072, %v3197
        %v3296 = vmul.f32 %v3076, %v3197
        %v3297 = vmul.f32 %v3080, %v3197
        %v3298 = vmul.f32 %v3084, %v3197
        %v3299 = vmul.f32 %v3088, %v3197
        %v3300 = vmul.f32 %v3092, %v3197
        %v3301 = vmul.f32 %v3096, %v3197
        %v3302 = vmul.f32 %v3100, %v3197
        %v3303 = vmul.f32 %v3104, %v3197
        %v3304 = vmul.f32 %v3108, %v3197
        %v3305 = vmul.f32 %v3112, %v3197
        %v3306 = vmul.f32 %v3116, %v3197
        %v3307 = vmul.f32 %v3120, %v3197
        %v3308 = vmul.f32 %v3124, %v3197
        %v3309 = vmul.f32 %v3128, %v3197
        %v3310 = vmul.f32 %v3132, %v3197
        %v3311 = vmul.f32 %v3136, %v3197
        %v3312 = vmul.f32 %v3140, %v3197
        %v3313 = vmul.f32 %v3144, %v3197
        %v3314 = vmul.f32 %v3148, %v3197
        %v3315 = vmul.f32 %v3152, %v3197
        %v3316 = vmul.f32 %v3156, %v3197
        %v3317 = vmul.f32 %v3160, %v3197
        %v3318 = vmul.f32 %v3164, %v3197
        %v3319 = vmul.f32 %v3168, %v3197
        %v3320 = vmul.f32 %v3172, %v3197
        %v3321 = vmul.f32 %v3176, %v3197
        %v3322 = vmul.f32 %v3180, %v3197
        %v3323 = vmul.f32 %v3184, %v3197
        %v3324 = vmul.f32 %v3188, %v3197
        %v3325 = vmul.f32 %v3192, %v3197
        %v3326 = vadd.f32 %v2553, %v3198
        %v3327 = vadd.f32 %v2554, %v3199
        %v3328 = vadd.f32 %v2555, %v3200
        %v3329 = vadd.f32 %v2556, %v3201
        %v3330 = vadd.f32 %v2557, %v3202
        %v3331 = vadd.f32 %v2558, %v3203
        %v3332 = vadd.f32 %v2559, %v3204
        %v3333 = vadd.f32 %v2560, %v3205
        %v3334 = vadd.f32 %v2561, %v3206
        %v3335 = vadd.f32 %v2562, %v3207
        %v3336 = vadd.f32 %v2563, %v3208
        %v3337 = vadd.f32 %v2564, %v3209
        %v3338 = vadd.f32 %v2565, %v3210
        %v3339 = vadd.f32 %v2566, %v3211
        %v3340 = vadd.f32 %v2567, %v3212
        %v3341 = vadd.f32 %v2568, %v3213
        %v3342 = vadd.f32 %v2569, %v3214
        %v3343 = vadd.f32 %v2570, %v3215
        %v3344 = vadd.f32 %v2571, %v3216
        %v3345 = vadd.f32 %v2572, %v3217
        %v3346 = vadd.f32 %v2573, %v3218
        %v3347 = vadd.f32 %v2574, %v3219
        %v3348 = vadd.f32 %v2575, %v3220
        %v3349 = vadd.f32 %v2576, %v3221
        %v3350 = vadd.f32 %v2577, %v3222
        %v3351 = vadd.f32 %v2578, %v3223
        %v3352 = vadd.f32 %v2579, %v3224
        %v3353 = vadd.f32 %v2580, %v3225
        %v3354 = vadd.f32 %v2581, %v3226
        %v3355 = vadd.f32 %v2582, %v3227
        %v3356 = vadd.f32 %v2583, %v3228
        %v3357 = vadd.f32 %v2584, %v3229
        %v3358 = vadd.f32 %v2585, %v3230
        %v3359 = vadd.f32 %v2586, %v3231
        %v3360 = vadd.f32 %v2587, %v3232
        %v3361 = vadd.f32 %v2588, %v3233
        %v3362 = vadd.f32 %v2589, %v3234
        %v3363 = vadd.f32 %v2590, %v3235
        %v3364 = vadd.f32 %v2591, %v3236
        %v3365 = vadd.f32 %v2592, %v3237
        %v3366 = vadd.f32 %v2593, %v3238
        %v3367 = vadd.f32 %v2594, %v3239
        %v3368 = vadd.f32 %v2595, %v3240
        %v3369 = vadd.f32 %v2596, %v3241
        %v3370 = vadd.f32 %v2597, %v3242
        %v3371 = vadd.f32 %v2598, %v3243
        %v3372 = vadd.f32 %v2599, %v3244
        %v3373 = vadd.f32 %v2600, %v3245
        %v3374 = vadd.f32 %v2601, %v3246
        %v3375 = vadd.f32 %v2602, %v3247
        %v3376 = vadd.f32 %v2603, %v3248
        %v3377 = vadd.f32 %v2604, %v3249
        %v3378 = vadd.f32 %v2605, %v3250
        %v3379 = vadd.f32 %v2606, %v3251
        %v3380 = vadd.f32 %v2607, %v3252
        %v3381 = vadd.f32 %v2608, %v3253
        %v3382 = vadd.f32 %v2609, %v3254
        %v3383 = vadd.f32 %v2610, %v3255
        %v3384 = vadd.f32 %v2611, %v3256
        %v3385 = vadd.f32 %v2612, %v3257
        %v3386 = vadd.f32 %v2613, %v3258
        %v3387 = vadd.f32 %v2614, %v3259
        %v3388 = vadd.f32 %v2615, %v3260
        %v3389 = vadd.f32 %v2616, %v3261
        %v3390 = vadd.f32 %v2617, %v3262
        %v3391 = vadd.f32 %v2618, %v3263
        %v3392 = vadd.f32 %v2619, %v3264
        %v3393 = vadd.f32 %v2620, %v3265
        %v3394 = vadd.f32 %v2621, %v3266
        %v3395 = vadd.f32 %v2622, %v3267
        %v3396 = vadd.f32 %v2623, %v3268
        %v3397 = vadd.f32 %v2624, %v3269
        %v3398 = vadd.f32 %v2625, %v3270
        %v3399 = vadd.f32 %v2626, %v3271
        %v3400 = vadd.f32 %v2627, %v3272
        %v3401 = vadd.f32 %v2628, %v3273
        %v3402 = vadd.f32 %v2629, %v3274
        %v3403 = vadd.f32 %v2630, %v3275
        %v3404 = vadd.f32 %v2631, %v3276
        %v3405 = vadd.f32 %v2632, %v3277
        %v3406 = vadd.f32 %v2633, %v3278
        %v3407 = vadd.f32 %v2634, %v3279
        %v3408 = vadd.f32 %v2635, %v3280
        %v3409 = vadd.f32 %v2636, %v3281
        %v3410 = vadd.f32 %v2637, %v3282
        %v3411 = vadd.f32 %v2638, %v3283
        %v3412 = vadd.f32 %v2639, %v3284
        %v3413 = vadd.f32 %v2640, %v3285
        %v3414 = vadd.f32 %v2641, %v3286
        %v3415 = vadd.f32 %v2642, %v3287
        %v3416 = vadd.f32 %v2643, %v3288
        %v3417 = vadd.f32 %v2644, %v3289
        %v3418 = vadd.f32 %v2645, %v3290
        %v3419 = vadd.f32 %v2646, %v3291
        %v3420 = vadd.f32 %v2647, %v3292
        %v3421 = vadd.f32 %v2648, %v3293
        %v3422 = vadd.f32 %v2649, %v3294
        %v3423 = vadd.f32 %v2650, %v3295
        %v3424 = vadd.f32 %v2651, %v3296
        %v3425 = vadd.f32 %v2652, %v3297
        %v3426 = vadd.f32 %v2653, %v3298
        %v3427 = vadd.f32 %v2654, %v3299
        %v3428 = vadd.f32 %v2655, %v3300
        %v3429 = vadd.f32 %v2656, %v3301
        %v3430 = vadd.f32 %v2657, %v3302
        %v3431 = vadd.f32 %v2658, %v3303
        %v3432 = vadd.f32 %v2659, %v3304
        %v3433 = vadd.f32 %v2660, %v3305
        %v3434 = vadd.f32 %v2661, %v3306
        %v3435 = vadd.f32 %v2662, %v3307
        %v3436 = vadd.f32 %v2663, %v3308
        %v3437 = vadd.f32 %v2664, %v3309
        %v3438 = vadd.f32 %v2665, %v3310
        %v3439 = vadd.f32 %v2666, %v3311
        %v3440 = vadd.f32 %v2667, %v3312
        %v3441 = vadd.f32 %v2668, %v3313
        %v3442 = vadd.f32 %v2669, %v3314
        %v3443 = vadd.f32 %v2670, %v3315
        %v3444 = vadd.f32 %v2671, %v3316
        %v3445 = vadd.f32 %v2672, %v3317
        %v3446 = vadd.f32 %v2673, %v3318
        %v3447 = vadd.f32 %v2674, %v3319
        %v3448 = vadd.f32 %v2675, %v3320
        %v3449 = vadd.f32 %v2676, %v3321
        %v3450 = vadd.f32 %v2677, %v3322
        %v3451 = vadd.f32 %v2678, %v3323
        %v3452 = vadd.f32 %v2679, %v3324
        %v3453 = vadd.f32 %v2680, %v3325
        %v3454 = vld [vmem:[%s2] sm:$0x1]
        %v3456 = vlaneseq
        %v3457 = vshrl.u32 %v3456, 7
        %v3458 = vsub.s32 0, %v3457
        %v3459 = vrot.slane %v3454, %v3458
        %v3461 = vadd.f32 %v3326, %v3459
        %v3462 = vadd.f32 %v3327, %v3459
        %v3463 = vadd.f32 %v3328, %v3459
        %v3464 = vadd.f32 %v3329, %v3459
        %v3465 = vadd.f32 %v3330, %v3459
        %v3466 = vadd.f32 %v3331, %v3459
        %v3467 = vadd.f32 %v3332, %v3459
        %v3468 = vadd.f32 %v3333, %v3459
        %v3469 = vadd.f32 %v3334, %v3459
        %v3470 = vadd.f32 %v3335, %v3459
        %v3471 = vadd.f32 %v3336, %v3459
        %v3472 = vadd.f32 %v3337, %v3459
        %v3473 = vadd.f32 %v3338, %v3459
        %v3474 = vadd.f32 %v3339, %v3459
        %v3475 = vadd.f32 %v3340, %v3459
        %v3476 = vadd.f32 %v3341, %v3459
        %v3477 = vadd.f32 %v3342, %v3459
        %v3478 = vadd.f32 %v3343, %v3459
        %v3479 = vadd.f32 %v3344, %v3459
        %v3480 = vadd.f32 %v3345, %v3459
        %v3481 = vadd.f32 %v3346, %v3459
        %v3482 = vadd.f32 %v3347, %v3459
        %v3483 = vadd.f32 %v3348, %v3459
        %v3484 = vadd.f32 %v3349, %v3459
        %v3485 = vadd.f32 %v3350, %v3459
        %v3486 = vadd.f32 %v3351, %v3459
        %v3487 = vadd.f32 %v3352, %v3459
        %v3488 = vadd.f32 %v3353, %v3459
        %v3489 = vadd.f32 %v3354, %v3459
        %v3490 = vadd.f32 %v3355, %v3459
        %v3491 = vadd.f32 %v3356, %v3459
        %v3492 = vadd.f32 %v3357, %v3459
        %v3493 = vadd.f32 %v3358, %v3459
        %v3494 = vadd.f32 %v3359, %v3459
        %v3495 = vadd.f32 %v3360, %v3459
        %v3496 = vadd.f32 %v3361, %v3459
        %v3497 = vadd.f32 %v3362, %v3459
        %v3498 = vadd.f32 %v3363, %v3459
        %v3499 = vadd.f32 %v3364, %v3459
        %v3500 = vadd.f32 %v3365, %v3459
        %v3501 = vadd.f32 %v3366, %v3459
        %v3502 = vadd.f32 %v3367, %v3459
        %v3503 = vadd.f32 %v3368, %v3459
        %v3504 = vadd.f32 %v3369, %v3459
        %v3505 = vadd.f32 %v3370, %v3459
        %v3506 = vadd.f32 %v3371, %v3459
        %v3507 = vadd.f32 %v3372, %v3459
        %v3508 = vadd.f32 %v3373, %v3459
        %v3509 = vadd.f32 %v3374, %v3459
        %v3510 = vadd.f32 %v3375, %v3459
        %v3511 = vadd.f32 %v3376, %v3459
        %v3512 = vadd.f32 %v3377, %v3459
        %v3513 = vadd.f32 %v3378, %v3459
        %v3514 = vadd.f32 %v3379, %v3459
        %v3515 = vadd.f32 %v3380, %v3459
        %v3516 = vadd.f32 %v3381, %v3459
        %v3517 = vadd.f32 %v3382, %v3459
        %v3518 = vadd.f32 %v3383, %v3459
        %v3519 = vadd.f32 %v3384, %v3459
        %v3520 = vadd.f32 %v3385, %v3459
        %v3521 = vadd.f32 %v3386, %v3459
        %v3522 = vadd.f32 %v3387, %v3459
        %v3523 = vadd.f32 %v3388, %v3459
        %v3524 = vadd.f32 %v3389, %v3459
        %v3525 = vadd.f32 %v3390, %v3459
        %v3526 = vadd.f32 %v3391, %v3459
        %v3527 = vadd.f32 %v3392, %v3459
        %v3528 = vadd.f32 %v3393, %v3459
        %v3529 = vadd.f32 %v3394, %v3459
        %v3530 = vadd.f32 %v3395, %v3459
        %v3531 = vadd.f32 %v3396, %v3459
        %v3532 = vadd.f32 %v3397, %v3459
        %v3533 = vadd.f32 %v3398, %v3459
        %v3534 = vadd.f32 %v3399, %v3459
        %v3535 = vadd.f32 %v3400, %v3459
        %v3536 = vadd.f32 %v3401, %v3459
        %v3537 = vadd.f32 %v3402, %v3459
        %v3538 = vadd.f32 %v3403, %v3459
        %v3539 = vadd.f32 %v3404, %v3459
        %v3540 = vadd.f32 %v3405, %v3459
        %v3541 = vadd.f32 %v3406, %v3459
        %v3542 = vadd.f32 %v3407, %v3459
        %v3543 = vadd.f32 %v3408, %v3459
        %v3544 = vadd.f32 %v3409, %v3459
        %v3545 = vadd.f32 %v3410, %v3459
        %v3546 = vadd.f32 %v3411, %v3459
        %v3547 = vadd.f32 %v3412, %v3459
        %v3548 = vadd.f32 %v3413, %v3459
        %v3549 = vadd.f32 %v3414, %v3459
        %v3550 = vadd.f32 %v3415, %v3459
        %v3551 = vadd.f32 %v3416, %v3459
        %v3552 = vadd.f32 %v3417, %v3459
        %v3553 = vadd.f32 %v3418, %v3459
        %v3554 = vadd.f32 %v3419, %v3459
        %v3555 = vadd.f32 %v3420, %v3459
        %v3556 = vadd.f32 %v3421, %v3459
        %v3557 = vadd.f32 %v3422, %v3459
        %v3558 = vadd.f32 %v3423, %v3459
        %v3559 = vadd.f32 %v3424, %v3459
        %v3560 = vadd.f32 %v3425, %v3459
        %v3561 = vadd.f32 %v3426, %v3459
        %v3562 = vadd.f32 %v3427, %v3459
        %v3563 = vadd.f32 %v3428, %v3459
        %v3564 = vadd.f32 %v3429, %v3459
        %v3565 = vadd.f32 %v3430, %v3459
        %v3566 = vadd.f32 %v3431, %v3459
        %v3567 = vadd.f32 %v3432, %v3459
        %v3568 = vadd.f32 %v3433, %v3459
        %v3569 = vadd.f32 %v3434, %v3459
        %v3570 = vadd.f32 %v3435, %v3459
        %v3571 = vadd.f32 %v3436, %v3459
        %v3572 = vadd.f32 %v3437, %v3459
        %v3573 = vadd.f32 %v3438, %v3459
        %v3574 = vadd.f32 %v3439, %v3459
        %v3575 = vadd.f32 %v3440, %v3459
        %v3576 = vadd.f32 %v3441, %v3459
        %v3577 = vadd.f32 %v3442, %v3459
        %v3578 = vadd.f32 %v3443, %v3459
        %v3579 = vadd.f32 %v3444, %v3459
        %v3580 = vadd.f32 %v3445, %v3459
        %v3581 = vadd.f32 %v3446, %v3459
        %v3582 = vadd.f32 %v3447, %v3459
        %v3583 = vadd.f32 %v3448, %v3459
        %v3584 = vadd.f32 %v3449, %v3459
        %v3585 = vadd.f32 %v3450, %v3459
        %v3586 = vadd.f32 %v3451, %v3459
        %v3587 = vadd.f32 %v3452, %v3459
        %v3588 = vadd.f32 %v3453, %v3459
        %v3589 = vmax.f32 %v3461, 0.0
        %v3590 = vmax.f32 %v3462, 0.0
        %v3591 = vmax.f32 %v3463, 0.0
        %v3592 = vmax.f32 %v3464, 0.0
        %v3593 = vmax.f32 %v3465, 0.0
        %v3594 = vmax.f32 %v3466, 0.0
        %v3595 = vmax.f32 %v3467, 0.0
        %v3596 = vmax.f32 %v3468, 0.0
        %v3597 = vmax.f32 %v3469, 0.0
        %v3598 = vmax.f32 %v3470, 0.0
        %v3599 = vmax.f32 %v3471, 0.0
        %v3600 = vmax.f32 %v3472, 0.0
        %v3601 = vmax.f32 %v3473, 0.0
        %v3602 = vmax.f32 %v3474, 0.0
        %v3603 = vmax.f32 %v3475, 0.0
        %v3604 = vmax.f32 %v3476, 0.0
        %v3605 = vmax.f32 %v3477, 0.0
        %v3606 = vmax.f32 %v3478, 0.0
        %v3607 = vmax.f32 %v3479, 0.0
        %v3608 = vmax.f32 %v3480, 0.0
        %v3609 = vmax.f32 %v3481, 0.0
        %v3610 = vmax.f32 %v3482, 0.0
        %v3611 = vmax.f32 %v3483, 0.0
        %v3612 = vmax.f32 %v3484, 0.0
        %v3613 = vmax.f32 %v3485, 0.0
        %v3614 = vmax.f32 %v3486, 0.0
        %v3615 = vmax.f32 %v3487, 0.0
        %v3616 = vmax.f32 %v3488, 0.0
        %v3617 = vmax.f32 %v3489, 0.0
        %v3618 = vmax.f32 %v3490, 0.0
        %v3619 = vmax.f32 %v3491, 0.0
        %v3620 = vmax.f32 %v3492, 0.0
        %v3621 = vmax.f32 %v3493, 0.0
        %v3622 = vmax.f32 %v3494, 0.0
        %v3623 = vmax.f32 %v3495, 0.0
        %v3624 = vmax.f32 %v3496, 0.0
        %v3625 = vmax.f32 %v3497, 0.0
        %v3626 = vmax.f32 %v3498, 0.0
        %v3627 = vmax.f32 %v3499, 0.0
        %v3628 = vmax.f32 %v3500, 0.0
        %v3629 = vmax.f32 %v3501, 0.0
        %v3630 = vmax.f32 %v3502, 0.0
        %v3631 = vmax.f32 %v3503, 0.0
        %v3632 = vmax.f32 %v3504, 0.0
        %v3633 = vmax.f32 %v3505, 0.0
        %v3634 = vmax.f32 %v3506, 0.0
        %v3635 = vmax.f32 %v3507, 0.0
        %v3636 = vmax.f32 %v3508, 0.0
        %v3637 = vmax.f32 %v3509, 0.0
        %v3638 = vmax.f32 %v3510, 0.0
        %v3639 = vmax.f32 %v3511, 0.0
        %v3640 = vmax.f32 %v3512, 0.0
        %v3641 = vmax.f32 %v3513, 0.0
        %v3642 = vmax.f32 %v3514, 0.0
        %v3643 = vmax.f32 %v3515, 0.0
        %v3644 = vmax.f32 %v3516, 0.0
        %v3645 = vmax.f32 %v3517, 0.0
        %v3646 = vmax.f32 %v3518, 0.0
        %v3647 = vmax.f32 %v3519, 0.0
        %v3648 = vmax.f32 %v3520, 0.0
        %v3649 = vmax.f32 %v3521, 0.0
        %v3650 = vmax.f32 %v3522, 0.0
        %v3651 = vmax.f32 %v3523, 0.0
        %v3652 = vmax.f32 %v3524, 0.0
        %v3653 = vmax.f32 %v3525, 0.0
        %v3654 = vmax.f32 %v3526, 0.0
        %v3655 = vmax.f32 %v3527, 0.0
        %v3656 = vmax.f32 %v3528, 0.0
        %v3657 = vmax.f32 %v3529, 0.0
        %v3658 = vmax.f32 %v3530, 0.0
        %v3659 = vmax.f32 %v3531, 0.0
        %v3660 = vmax.f32 %v3532, 0.0
        %v3661 = vmax.f32 %v3533, 0.0
        %v3662 = vmax.f32 %v3534, 0.0
        %v3663 = vmax.f32 %v3535, 0.0
        %v3664 = vmax.f32 %v3536, 0.0
        %v3665 = vmax.f32 %v3537, 0.0
        %v3666 = vmax.f32 %v3538, 0.0
        %v3667 = vmax.f32 %v3539, 0.0
        %v3668 = vmax.f32 %v3540, 0.0
        %v3669 = vmax.f32 %v3541, 0.0
        %v3670 = vmax.f32 %v3542, 0.0
        %v3671 = vmax.f32 %v3543, 0.0
        %v3672 = vmax.f32 %v3544, 0.0
        %v3673 = vmax.f32 %v3545, 0.0
        %v3674 = vmax.f32 %v3546, 0.0
        %v3675 = vmax.f32 %v3547, 0.0
        %v3676 = vmax.f32 %v3548, 0.0
        %v3677 = vmax.f32 %v3549, 0.0
        %v3678 = vmax.f32 %v3550, 0.0
        %v3679 = vmax.f32 %v3551, 0.0
        %v3680 = vmax.f32 %v3552, 0.0
        %v3681 = vmax.f32 %v3553, 0.0
        %v3682 = vmax.f32 %v3554, 0.0
        %v3683 = vmax.f32 %v3555, 0.0
        %v3684 = vmax.f32 %v3556, 0.0
        %v3685 = vmax.f32 %v3557, 0.0
        %v3686 = vmax.f32 %v3558, 0.0
        %v3687 = vmax.f32 %v3559, 0.0
        %v3688 = vmax.f32 %v3560, 0.0
        %v3689 = vmax.f32 %v3561, 0.0
        %v3690 = vmax.f32 %v3562, 0.0
        %v3691 = vmax.f32 %v3563, 0.0
        %v3692 = vmax.f32 %v3564, 0.0
        %v3693 = vmax.f32 %v3565, 0.0
        %v3694 = vmax.f32 %v3566, 0.0
        %v3695 = vmax.f32 %v3567, 0.0
        %v3696 = vmax.f32 %v3568, 0.0
        %v3697 = vmax.f32 %v3569, 0.0
        %v3698 = vmax.f32 %v3570, 0.0
        %v3699 = vmax.f32 %v3571, 0.0
        %v3700 = vmax.f32 %v3572, 0.0
        %v3701 = vmax.f32 %v3573, 0.0
        %v3702 = vmax.f32 %v3574, 0.0
        %v3703 = vmax.f32 %v3575, 0.0
        %v3704 = vmax.f32 %v3576, 0.0
        %v3705 = vmax.f32 %v3577, 0.0
        %v3706 = vmax.f32 %v3578, 0.0
        %v3707 = vmax.f32 %v3579, 0.0
        %v3708 = vmax.f32 %v3580, 0.0
        %v3709 = vmax.f32 %v3581, 0.0
        %v3710 = vmax.f32 %v3582, 0.0
        %v3711 = vmax.f32 %v3583, 0.0
        %v3712 = vmax.f32 %v3584, 0.0
        %v3713 = vmax.f32 %v3585, 0.0
        %v3714 = vmax.f32 %v3586, 0.0
        %v3715 = vmax.f32 %v3587, 0.0
        %v3716 = vmax.f32 %v3588, 0.0
        %v3717 = vpack.c.bf16 %v3590, %v3589
        %v3718 = vpack.c.bf16 %v3592, %v3591
        %v3719 = vpack.c.bf16 %v3594, %v3593
        %v3720 = vpack.c.bf16 %v3596, %v3595
        %v3721 = vpack.c.bf16 %v3598, %v3597
        %v3722 = vpack.c.bf16 %v3600, %v3599
        %v3723 = vpack.c.bf16 %v3602, %v3601
        %v3724 = vpack.c.bf16 %v3604, %v3603
        %v3725 = vpack.c.bf16 %v3606, %v3605
        %v3726 = vpack.c.bf16 %v3608, %v3607
        %v3727 = vpack.c.bf16 %v3610, %v3609
        %v3728 = vpack.c.bf16 %v3612, %v3611
        %v3729 = vpack.c.bf16 %v3614, %v3613
        %v3730 = vpack.c.bf16 %v3616, %v3615
        %v3731 = vpack.c.bf16 %v3618, %v3617
        %v3732 = vpack.c.bf16 %v3620, %v3619
        %v3733 = vpack.c.bf16 %v3622, %v3621
        %v3734 = vpack.c.bf16 %v3624, %v3623
        %v3735 = vpack.c.bf16 %v3626, %v3625
        %v3736 = vpack.c.bf16 %v3628, %v3627
        %v3737 = vpack.c.bf16 %v3630, %v3629
        %v3738 = vpack.c.bf16 %v3632, %v3631
        %v3739 = vpack.c.bf16 %v3634, %v3633
        %v3740 = vpack.c.bf16 %v3636, %v3635
        %v3741 = vpack.c.bf16 %v3638, %v3637
        %v3742 = vpack.c.bf16 %v3640, %v3639
        %v3743 = vpack.c.bf16 %v3642, %v3641
        %v3744 = vpack.c.bf16 %v3644, %v3643
        %v3745 = vpack.c.bf16 %v3646, %v3645
        %v3746 = vpack.c.bf16 %v3648, %v3647
        %v3747 = vpack.c.bf16 %v3650, %v3649
        %v3748 = vpack.c.bf16 %v3652, %v3651
        %v3749 = vpack.c.bf16 %v3654, %v3653
        %v3750 = vpack.c.bf16 %v3656, %v3655
        %v3751 = vpack.c.bf16 %v3658, %v3657
        %v3752 = vpack.c.bf16 %v3660, %v3659
        %v3753 = vpack.c.bf16 %v3662, %v3661
        %v3754 = vpack.c.bf16 %v3664, %v3663
        %v3755 = vpack.c.bf16 %v3666, %v3665
        %v3756 = vpack.c.bf16 %v3668, %v3667
        %v3757 = vpack.c.bf16 %v3670, %v3669
        %v3758 = vpack.c.bf16 %v3672, %v3671
        %v3759 = vpack.c.bf16 %v3674, %v3673
        %v3760 = vpack.c.bf16 %v3676, %v3675
        %v3761 = vpack.c.bf16 %v3678, %v3677
        %v3762 = vpack.c.bf16 %v3680, %v3679
        %v3763 = vpack.c.bf16 %v3682, %v3681
        %v3764 = vpack.c.bf16 %v3684, %v3683
        %v3765 = vpack.c.bf16 %v3686, %v3685
        %v3766 = vpack.c.bf16 %v3688, %v3687
        %v3767 = vpack.c.bf16 %v3690, %v3689
        %v3768 = vpack.c.bf16 %v3692, %v3691
        %v3769 = vpack.c.bf16 %v3694, %v3693
        %v3770 = vpack.c.bf16 %v3696, %v3695
        %v3771 = vpack.c.bf16 %v3698, %v3697
        %v3772 = vpack.c.bf16 %v3700, %v3699
        %v3773 = vpack.c.bf16 %v3702, %v3701
        %v3774 = vpack.c.bf16 %v3704, %v3703
        %v3775 = vpack.c.bf16 %v3706, %v3705
        %v3776 = vpack.c.bf16 %v3708, %v3707
        %v3777 = vpack.c.bf16 %v3710, %v3709
        %v3778 = vpack.c.bf16 %v3712, %v3711
        %v3779 = vpack.c.bf16 %v3714, %v3713
        %v3780 = vpack.c.bf16 %v3716, %v3715
        %v3781 = vld [vmem:[%s3] sm:$0xf]
        %v3782 = vld [vmem:[%s3 + $0x4] sm:$0xf]
        %v3783 = vld [vmem:[%s3 + $0x8] sm:$0xf]
        %v3784 = vld [vmem:[%s3 + $0xc] sm:$0xf]
        %v3785 = vld [vmem:[%s3 + $0x10] sm:$0xf]
        %v3786 = vld [vmem:[%s3 + $0x14] sm:$0xf]
        %v3787 = vld [vmem:[%s3 + $0x18] sm:$0xf]
        %v3788 = vld [vmem:[%s3 + $0x1c] sm:$0xf]
        %v3789 = vld [vmem:[%s4] sm:$0x1]
        %v3791 = vlaneseq
        %v3792 = vshrl.u32 %v3791, 7
        %v3793 = vsub.s32 0, %v3792
        %v3794 = vrot.slane %v3789, %v3793
        %v3804 = vunpack.c.l.b16 %v3781
        %v3805 = vunpack.c.l.b16 %v3782
        %v3806 = vunpack.c.l.b16 %v3783
        %v3807 = vunpack.c.l.b16 %v3784
        %v3808 = vunpack.c.l.b16 %v3785
        %v3809 = vunpack.c.l.b16 %v3786
        %v3810 = vunpack.c.l.b16 %v3787
        %v3811 = vunpack.c.l.b16 %v3788
        %v3812 = vpack.c.b16 %v3805, %v3804
        %v3813 = vpack.c.b16 %v3807, %v3806
        %v3814 = vpack.c.b16 %v3809, %v3808
        %v3815 = vpack.c.b16 %v3811, %v3810
        %vm3820 = vcmask 523264
        %v3822 = vsel %vm3820, %v3717, 0
        %v3825 = vsel %vm3820, %v3718, 0
        %v3828 = vsel %vm3820, %v3719, 0
        %v3831 = vsel %vm3820, %v3720, 0
        %v3834 = vsel %vm3820, %v3721, 0
        %v3837 = vsel %vm3820, %v3722, 0
        %v3840 = vsel %vm3820, %v3723, 0
        %v3843 = vsel %vm3820, %v3724, 0
        %v3846 = vsel %vm3820, %v3725, 0
        %v3849 = vsel %vm3820, %v3726, 0
        %v3852 = vsel %vm3820, %v3727, 0
        %v3855 = vsel %vm3820, %v3728, 0
        %v3858 = vsel %vm3820, %v3729, 0
        %v3861 = vsel %vm3820, %v3730, 0
        %v3864 = vsel %vm3820, %v3731, 0
        %v3867 = vsel %vm3820, %v3732, 0
        %v3870 = vsel %vm3820, %v3733, 0
        %v3873 = vsel %vm3820, %v3734, 0
        %v3876 = vsel %vm3820, %v3735, 0
        %v3879 = vsel %vm3820, %v3736, 0
        %v3882 = vsel %vm3820, %v3737, 0
        %v3885 = vsel %vm3820, %v3738, 0
        %v3888 = vsel %vm3820, %v3739, 0
        %v3891 = vsel %vm3820, %v3740, 0
        %v3894 = vsel %vm3820, %v3741, 0
        %v3897 = vsel %vm3820, %v3742, 0
        %v3900 = vsel %vm3820, %v3743, 0
        %v3903 = vsel %vm3820, %v3744, 0
        %v3906 = vsel %vm3820, %v3745, 0
        %v3909 = vsel %vm3820, %v3746, 0
        %v3912 = vsel %vm3820, %v3747, 0
        %v3915 = vsel %vm3820, %v3748, 0
        %v3918 = vsel %vm3820, %v3749, 0
        %v3921 = vsel %vm3820, %v3750, 0
        %v3924 = vsel %vm3820, %v3751, 0
        %v3927 = vsel %vm3820, %v3752, 0
        %v3930 = vsel %vm3820, %v3753, 0
        %v3933 = vsel %vm3820, %v3754, 0
        %v3936 = vsel %vm3820, %v3755, 0
        %v3939 = vsel %vm3820, %v3756, 0
        %v3942 = vsel %vm3820, %v3757, 0
        %v3945 = vsel %vm3820, %v3758, 0
        %v3948 = vsel %vm3820, %v3759, 0
        %v3951 = vsel %vm3820, %v3760, 0
        %v3954 = vsel %vm3820, %v3761, 0
        %v3957 = vsel %vm3820, %v3762, 0
        %v3960 = vsel %vm3820, %v3763, 0
        %v3963 = vsel %vm3820, %v3764, 0
        %v3966 = vsel %vm3820, %v3765, 0
        %v3969 = vsel %vm3820, %v3766, 0
        %v3972 = vsel %vm3820, %v3767, 0
        %v3975 = vsel %vm3820, %v3768, 0
        %v3978 = vsel %vm3820, %v3769, 0
        %v3981 = vsel %vm3820, %v3770, 0
        %v3984 = vsel %vm3820, %v3771, 0
        %v3987 = vsel %vm3820, %v3772, 0
        %v3990 = vsel %vm3820, %v3773, 0
        %v3993 = vsel %vm3820, %v3774, 0
        %v3996 = vsel %vm3820, %v3775, 0
        %v3999 = vsel %vm3820, %v3776, 0
        %v4002 = vsel %vm3820, %v3777, 0
        %v4005 = vsel %vm3820, %v3778, 0
        %v4008 = vsel %vm3820, %v3779, 0
        %v4011 = vsel %vm3820, %v3780, 0
        %4013 = vmatprep.subr.bf16.mxu0 0
        %4014 = vmatpush1.bf16.msra.mxu0 %v3812
        %4015 = vmatprep.subr.bf16.mxu0 0
        %4016 = vmatpush1.bf16.msra.mxu0 %v3813
        %4017 = vmatprep.subr.bf16.mxu0 0
        %4018 = vmatpush1.bf16.msra.mxu0 %v3814
        %4019 = vmatprep.subr.bf16.mxu0 0
        %4020 = vmatpush1.bf16.msra.mxu0 %v3815
        %4021 = vmatprep.subr.bf16.mxu0 0
        %4022 = vmatpush1.bf16.msra.mxu0 0
        %4023 = vmatprep.subr.bf16.mxu0 0
        %4024 = vmatpush1.bf16.msra.mxu0 0
        %4025 = vmatprep.subr.bf16.mxu0 0
        %4026 = vmatpush1.bf16.msra.mxu0 0
        %4027 = vmatprep.subr.bf16.mxu0 0
        %4028 = vmatpush1.bf16.msra.mxu0 0
        %4029 = vmatprep.subr.bf16.mxu0 0
        %4030 = vmatpush1.bf16.msra.mxu0 0
        %4031 = vmatprep.subr.bf16.mxu0 0
        %4032 = vmatpush1.bf16.msra.mxu0 0
        %4033 = vmatprep.subr.bf16.mxu0 0
        %4034 = vmatpush1.bf16.msra.mxu0 0
        %4035 = vmatprep.subr.bf16.mxu0 0
        %4036 = vmatpush1.bf16.msra.mxu0 0
        %4037 = vmatprep.subr.bf16.mxu0 0
        %4038 = vmatpush1.bf16.msra.mxu0 0
        %4039 = vmatprep.subr.bf16.mxu0 0
        %4040 = vmatpush1.bf16.msra.mxu0 0
        %4041 = vmatprep.subr.bf16.mxu0 0
        %4042 = vmatpush1.bf16.msra.mxu0 0
        %4043 = vmatprep.subr.bf16.mxu0 0
        %4044 = vmatpush1.bf16.msra.mxu0 0
        %4045 = vmatprep.mubr.bf16.mxu0 0
        %4046 = vmatmul.mubr.bf16.gmra.mrb[0].mxu0 %v3822
        %v4047 = vpop.f32.mrb[0].mxu0
        %v4048 = vadd.f32 %v3794, %v4047
        %v4049 = vpop.f32.mrb[0].mxu0
        %v4050 = vpop.f32.mrb[0].mxu0
        %v4051 = vadd.f32 %v3794, %v4050
        %v4052 = vpop.f32.mrb[0].mxu0
        %4053 = vmatprep.mubr.bf16.mxu0 0
        %4054 = vmatmul.mubr.bf16.gmra.mrb[0].mxu0 %v3825
        %v4055 = vpop.f32.mrb[0].mxu0
        %v4056 = vadd.f32 %v3794, %v4055
        %v4057 = vpop.f32.mrb[0].mxu0
        %v4058 = vpop.f32.mrb[0].mxu0
        %v4059 = vadd.f32 %v3794, %v4058
        %v4060 = vpop.f32.mrb[0].mxu0
        %4061 = vmatprep.mubr.bf16.mxu0 0
        %4062 = vmatmul.mubr.bf16.gmra.mrb[0].mxu0 %v3828
        %v4063 = vpop.f32.mrb[0].mxu0
        %v4064 = vadd.f32 %v3794, %v4063
        %v4065 = vpop.f32.mrb[0].mxu0
        %v4066 = vpop.f32.mrb[0].mxu0
        %v4067 = vadd.f32 %v3794, %v4066
        %v4068 = vpop.f32.mrb[0].mxu0
        %4069 = vmatprep.mubr.bf16.mxu0 0
        %4070 = vmatmul.mubr.bf16.gmra.mrb[0].mxu0 %v3831
        %v4071 = vpop.f32.mrb[0].mxu0
        %v4072 = vadd.f32 %v3794, %v4071
        %v4073 = vpop.f32.mrb[0].mxu0
        %v4074 = vpop.f32.mrb[0].mxu0
        %v4075 = vadd.f32 %v3794, %v4074
        %v4076 = vpop.f32.mrb[0].mxu0
        %4077 = vmatprep.mubr.bf16.mxu0 0
        %4078 = vmatmul.mubr.bf16.gmra.mrb[0].mxu0 %v3834
        %v4079 = vpop.f32.mrb[0].mxu0
        %v4080 = vadd.f32 %v3794, %v4079
        %v4081 = vpop.f32.mrb[0].mxu0
        %v4082 = vpop.f32.mrb[0].mxu0
        %v4083 = vadd.f32 %v3794, %v4082
        %v4084 = vpop.f32.mrb[0].mxu0
        %4085 = vmatprep.mubr.bf16.mxu0 0
        %4086 = vmatmul.mubr.bf16.gmra.mrb[0].mxu0 %v3837
        %v4087 = vpop.f32.mrb[0].mxu0
        %v4088 = vadd.f32 %v3794, %v4087
        %v4089 = vpop.f32.mrb[0].mxu0
        %v4090 = vpop.f32.mrb[0].mxu0
        %v4091 = vadd.f32 %v3794, %v4090
        %v4092 = vpop.f32.mrb[0].mxu0
        %4093 = vmatprep.mubr.bf16.mxu0 0
        %4094 = vmatmul.mubr.bf16.gmra.mrb[0].mxu0 %v3840
        %v4095 = vpop.f32.mrb[0].mxu0
        %v4096 = vadd.f32 %v3794, %v4095
        %v4097 = vpop.f32.mrb[0].mxu0
        %v4098 = vpop.f32.mrb[0].mxu0
        %v4099 = vadd.f32 %v3794, %v4098
        %v4100 = vpop.f32.mrb[0].mxu0
        %4101 = vmatprep.mubr.bf16.mxu0 0
        %4102 = vmatmul.mubr.bf16.gmra.mrb[0].mxu0 %v3843
        %v4103 = vpop.f32.mrb[0].mxu0
        %v4104 = vadd.f32 %v3794, %v4103
        %v4105 = vpop.f32.mrb[0].mxu0
        %v4106 = vpop.f32.mrb[0].mxu0
        %v4107 = vadd.f32 %v3794, %v4106
        %v4108 = vpop.f32.mrb[0].mxu0
        %4109 = vmatprep.mubr.bf16.mxu0 0
        %4110 = vmatmul.mubr.bf16.gmra.mrb[0].mxu0 %v3846
        %v4111 = vpop.f32.mrb[0].mxu0
        %v4112 = vadd.f32 %v3794, %v4111
        %v4113 = vpop.f32.mrb[0].mxu0
        %v4114 = vpop.f32.mrb[0].mxu0
        %v4115 = vadd.f32 %v3794, %v4114
        %v4116 = vpop.f32.mrb[0].mxu0
        %4117 = vmatprep.mubr.bf16.mxu0 0
        %4118 = vmatmul.mubr.bf16.gmra.mrb[0].mxu0 %v3849
        %v4119 = vpop.f32.mrb[0].mxu0
        %v4120 = vadd.f32 %v3794, %v4119
        %v4121 = vpop.f32.mrb[0].mxu0
        %v4122 = vpop.f32.mrb[0].mxu0
        %v4123 = vadd.f32 %v3794, %v4122
        %v4124 = vpop.f32.mrb[0].mxu0
        %4125 = vmatprep.mubr.bf16.mxu0 0
        %4126 = vmatmul.mubr.bf16.gmra.mrb[0].mxu0 %v3852
        %v4127 = vpop.f32.mrb[0].mxu0
        %v4128 = vadd.f32 %v3794, %v4127
        %v4129 = vpop.f32.mrb[0].mxu0
        %v4130 = vpop.f32.mrb[0].mxu0
        %v4131 = vadd.f32 %v3794, %v4130
        %v4132 = vpop.f32.mrb[0].mxu0
        %4133 = vmatprep.mubr.bf16.mxu0 0
        %4134 = vmatmul.mubr.bf16.gmra.mrb[0].mxu0 %v3855
        %v4135 = vpop.f32.mrb[0].mxu0
        %v4136 = vadd.f32 %v3794, %v4135
        %v4137 = vpop.f32.mrb[0].mxu0
        %v4138 = vpop.f32.mrb[0].mxu0
        %v4139 = vadd.f32 %v3794, %v4138
        %v4140 = vpop.f32.mrb[0].mxu0
        %4141 = vmatprep.mubr.bf16.mxu0 0
        %4142 = vmatmul.mubr.bf16.gmra.mrb[0].mxu0 %v3858
        %v4143 = vpop.f32.mrb[0].mxu0
        %v4144 = vadd.f32 %v3794, %v4143
        %v4145 = vpop.f32.mrb[0].mxu0
        %v4146 = vpop.f32.mrb[0].mxu0
        %v4147 = vadd.f32 %v3794, %v4146
        %v4148 = vpop.f32.mrb[0].mxu0
        %4149 = vmatprep.mubr.bf16.mxu0 0
        %4150 = vmatmul.mubr.bf16.gmra.mrb[0].mxu0 %v3861
        %v4151 = vpop.f32.mrb[0].mxu0
        %v4152 = vadd.f32 %v3794, %v4151
        %v4153 = vpop.f32.mrb[0].mxu0
        %v4154 = vpop.f32.mrb[0].mxu0
        %v4155 = vadd.f32 %v3794, %v4154
        %v4156 = vpop.f32.mrb[0].mxu0
        %4157 = vmatprep.mubr.bf16.mxu0 0
        %4158 = vmatmul.mubr.bf16.gmra.mrb[0].mxu0 %v3864
        %v4159 = vpop.f32.mrb[0].mxu0
        %v4160 = vadd.f32 %v3794, %v4159
        %v4161 = vpop.f32.mrb[0].mxu0
        %v4162 = vpop.f32.mrb[0].mxu0
        %v4163 = vadd.f32 %v3794, %v4162
        %v4164 = vpop.f32.mrb[0].mxu0
        %4165 = vmatprep.mubr.bf16.mxu0 0
        %4166 = vmatmul.mubr.bf16.gmra.mrb[0].mxu0 %v3867
        %v4167 = vpop.f32.mrb[0].mxu0
        %v4168 = vadd.f32 %v3794, %v4167
        %v4169 = vpop.f32.mrb[0].mxu0
        %v4170 = vpop.f32.mrb[0].mxu0
        %v4171 = vadd.f32 %v3794, %v4170
        %v4172 = vpop.f32.mrb[0].mxu0
        %4173 = vmatprep.mubr.bf16.mxu0 0
        %4174 = vmatmul.mubr.bf16.gmra.mrb[0].mxu0 %v3870
        %v4175 = vpop.f32.mrb[0].mxu0
        %v4176 = vadd.f32 %v3794, %v4175
        %v4177 = vpop.f32.mrb[0].mxu0
        %v4178 = vpop.f32.mrb[0].mxu0
        %v4179 = vadd.f32 %v3794, %v4178
        %v4180 = vpop.f32.mrb[0].mxu0
        %4181 = vmatprep.mubr.bf16.mxu0 0
        %4182 = vmatmul.mubr.bf16.gmra.mrb[0].mxu0 %v3873
        %v4183 = vpop.f32.mrb[0].mxu0
        %v4184 = vadd.f32 %v3794, %v4183
        %v4185 = vpop.f32.mrb[0].mxu0
        %v4186 = vpop.f32.mrb[0].mxu0
        %v4187 = vadd.f32 %v3794, %v4186
        %v4188 = vpop.f32.mrb[0].mxu0
        %4189 = vmatprep.mubr.bf16.mxu0 0
        %4190 = vmatmul.mubr.bf16.gmra.mrb[0].mxu0 %v3876
        %v4191 = vpop.f32.mrb[0].mxu0
        %v4192 = vadd.f32 %v3794, %v4191
        %v4193 = vpop.f32.mrb[0].mxu0
        %v4194 = vpop.f32.mrb[0].mxu0
        %v4195 = vadd.f32 %v3794, %v4194
        %v4196 = vpop.f32.mrb[0].mxu0
        %4197 = vmatprep.mubr.bf16.mxu0 0
        %4198 = vmatmul.mubr.bf16.gmra.mrb[0].mxu0 %v3879
        %v4199 = vpop.f32.mrb[0].mxu0
        %v4200 = vadd.f32 %v3794, %v4199
        %v4201 = vpop.f32.mrb[0].mxu0
        %v4202 = vpop.f32.mrb[0].mxu0
        %v4203 = vadd.f32 %v3794, %v4202
        %v4204 = vpop.f32.mrb[0].mxu0
        %4205 = vmatprep.mubr.bf16.mxu0 0
        %4206 = vmatmul.mubr.bf16.gmra.mrb[0].mxu0 %v3882
        %v4207 = vpop.f32.mrb[0].mxu0
        %v4208 = vadd.f32 %v3794, %v4207
        %v4209 = vpop.f32.mrb[0].mxu0
        %v4210 = vpop.f32.mrb[0].mxu0
        %v4211 = vadd.f32 %v3794, %v4210
        %v4212 = vpop.f32.mrb[0].mxu0
        %4213 = vmatprep.mubr.bf16.mxu0 0
        %4214 = vmatmul.mubr.bf16.gmra.mrb[0].mxu0 %v3885
        %v4215 = vpop.f32.mrb[0].mxu0
        %v4216 = vadd.f32 %v3794, %v4215
        %v4217 = vpop.f32.mrb[0].mxu0
        %v4218 = vpop.f32.mrb[0].mxu0
        %v4219 = vadd.f32 %v3794, %v4218
        %v4220 = vpop.f32.mrb[0].mxu0
        %4221 = vmatprep.mubr.bf16.mxu0 0
        %4222 = vmatmul.mubr.bf16.gmra.mrb[0].mxu0 %v3888
        %v4223 = vpop.f32.mrb[0].mxu0
        %v4224 = vadd.f32 %v3794, %v4223
        %v4225 = vpop.f32.mrb[0].mxu0
        %v4226 = vpop.f32.mrb[0].mxu0
        %v4227 = vadd.f32 %v3794, %v4226
        %v4228 = vpop.f32.mrb[0].mxu0
        %4229 = vmatprep.mubr.bf16.mxu0 0
        %4230 = vmatmul.mubr.bf16.gmra.mrb[0].mxu0 %v3891
        %v4231 = vpop.f32.mrb[0].mxu0
        %v4232 = vadd.f32 %v3794, %v4231
        %v4233 = vpop.f32.mrb[0].mxu0
        %v4234 = vpop.f32.mrb[0].mxu0
        %v4235 = vadd.f32 %v3794, %v4234
        %v4236 = vpop.f32.mrb[0].mxu0
        %4237 = vmatprep.mubr.bf16.mxu0 0
        %4238 = vmatmul.mubr.bf16.gmra.mrb[0].mxu0 %v3894
        %v4239 = vpop.f32.mrb[0].mxu0
        %v4240 = vadd.f32 %v3794, %v4239
        %v4241 = vpop.f32.mrb[0].mxu0
        %v4242 = vpop.f32.mrb[0].mxu0
        %v4243 = vadd.f32 %v3794, %v4242
        %v4244 = vpop.f32.mrb[0].mxu0
        %4245 = vmatprep.mubr.bf16.mxu0 0
        %4246 = vmatmul.mubr.bf16.gmra.mrb[0].mxu0 %v3897
        %v4247 = vpop.f32.mrb[0].mxu0
        %v4248 = vadd.f32 %v3794, %v4247
        %v4249 = vpop.f32.mrb[0].mxu0
        %v4250 = vpop.f32.mrb[0].mxu0
        %v4251 = vadd.f32 %v3794, %v4250
        %v4252 = vpop.f32.mrb[0].mxu0
        %4253 = vmatprep.mubr.bf16.mxu0 0
        %4254 = vmatmul.mubr.bf16.gmra.mrb[0].mxu0 %v3900
        %v4255 = vpop.f32.mrb[0].mxu0
        %v4256 = vadd.f32 %v3794, %v4255
        %v4257 = vpop.f32.mrb[0].mxu0
        %v4258 = vpop.f32.mrb[0].mxu0
        %v4259 = vadd.f32 %v3794, %v4258
        %v4260 = vpop.f32.mrb[0].mxu0
        %4261 = vmatprep.mubr.bf16.mxu0 0
        %4262 = vmatmul.mubr.bf16.gmra.mrb[0].mxu0 %v3903
        %v4263 = vpop.f32.mrb[0].mxu0
        %v4264 = vadd.f32 %v3794, %v4263
        %v4265 = vpop.f32.mrb[0].mxu0
        %v4266 = vpop.f32.mrb[0].mxu0
        %v4267 = vadd.f32 %v3794, %v4266
        %v4268 = vpop.f32.mrb[0].mxu0
        %4269 = vmatprep.mubr.bf16.mxu0 0
        %4270 = vmatmul.mubr.bf16.gmra.mrb[0].mxu0 %v3906
        %v4271 = vpop.f32.mrb[0].mxu0
        %v4272 = vadd.f32 %v3794, %v4271
        %v4273 = vpop.f32.mrb[0].mxu0
        %v4274 = vpop.f32.mrb[0].mxu0
        %v4275 = vadd.f32 %v3794, %v4274
        %v4276 = vpop.f32.mrb[0].mxu0
        %4277 = vmatprep.mubr.bf16.mxu0 0
        %4278 = vmatmul.mubr.bf16.gmra.mrb[0].mxu0 %v3909
        %v4279 = vpop.f32.mrb[0].mxu0
        %v4280 = vadd.f32 %v3794, %v4279
        %v4281 = vpop.f32.mrb[0].mxu0
        %v4282 = vpop.f32.mrb[0].mxu0
        %v4283 = vadd.f32 %v3794, %v4282
        %v4284 = vpop.f32.mrb[0].mxu0
        %4285 = vmatprep.mubr.bf16.mxu0 0
        %4286 = vmatmul.mubr.bf16.gmra.mrb[0].mxu0 %v3912
        %v4287 = vpop.f32.mrb[0].mxu0
        %v4288 = vadd.f32 %v3794, %v4287
        %v4289 = vpop.f32.mrb[0].mxu0
        %v4290 = vpop.f32.mrb[0].mxu0
        %v4291 = vadd.f32 %v3794, %v4290
        %v4292 = vpop.f32.mrb[0].mxu0
        %4293 = vmatprep.mubr.bf16.mxu0 0
        %4294 = vmatmul.mubr.bf16.gmra.mrb[0].mxu0 %v3915
        %v4295 = vpop.f32.mrb[0].mxu0
        %v4296 = vadd.f32 %v3794, %v4295
        %v4297 = vpop.f32.mrb[0].mxu0
        %v4298 = vpop.f32.mrb[0].mxu0
        %v4299 = vadd.f32 %v3794, %v4298
        %v4300 = vpop.f32.mrb[0].mxu0
        %4301 = vmatprep.mubr.bf16.mxu0 0
        %4302 = vmatmul.mubr.bf16.gmra.mrb[0].mxu0 %v3918
        %v4303 = vpop.f32.mrb[0].mxu0
        %v4304 = vadd.f32 %v3794, %v4303
        %v4305 = vpop.f32.mrb[0].mxu0
        %v4306 = vpop.f32.mrb[0].mxu0
        %v4307 = vadd.f32 %v3794, %v4306
        %v4308 = vpop.f32.mrb[0].mxu0
        %4309 = vmatprep.mubr.bf16.mxu0 0
        %4310 = vmatmul.mubr.bf16.gmra.mrb[0].mxu0 %v3921
        %v4311 = vpop.f32.mrb[0].mxu0
        %v4312 = vadd.f32 %v3794, %v4311
        %v4313 = vpop.f32.mrb[0].mxu0
        %v4314 = vpop.f32.mrb[0].mxu0
        %v4315 = vadd.f32 %v3794, %v4314
        %v4316 = vpop.f32.mrb[0].mxu0
        %4317 = vmatprep.mubr.bf16.mxu0 0
        %4318 = vmatmul.mubr.bf16.gmra.mrb[0].mxu0 %v3924
        %v4319 = vpop.f32.mrb[0].mxu0
        %v4320 = vadd.f32 %v3794, %v4319
        %v4321 = vpop.f32.mrb[0].mxu0
        %v4322 = vpop.f32.mrb[0].mxu0
        %v4323 = vadd.f32 %v3794, %v4322
        %v4324 = vpop.f32.mrb[0].mxu0
        %4325 = vmatprep.mubr.bf16.mxu0 0
        %4326 = vmatmul.mubr.bf16.gmra.mrb[0].mxu0 %v3927
        %v4327 = vpop.f32.mrb[0].mxu0
        %v4328 = vadd.f32 %v3794, %v4327
        %v4329 = vpop.f32.mrb[0].mxu0
        %v4330 = vpop.f32.mrb[0].mxu0
        %v4331 = vadd.f32 %v3794, %v4330
        %v4332 = vpop.f32.mrb[0].mxu0
        %4333 = vmatprep.mubr.bf16.mxu0 0
        %4334 = vmatmul.mubr.bf16.gmra.mrb[0].mxu0 %v3930
        %v4335 = vpop.f32.mrb[0].mxu0
        %v4336 = vadd.f32 %v3794, %v4335
        %v4337 = vpop.f32.mrb[0].mxu0
        %v4338 = vpop.f32.mrb[0].mxu0
        %v4339 = vadd.f32 %v3794, %v4338
        %v4340 = vpop.f32.mrb[0].mxu0
        %4341 = vmatprep.mubr.bf16.mxu0 0
        %4342 = vmatmul.mubr.bf16.gmra.mrb[0].mxu0 %v3933
        %v4343 = vpop.f32.mrb[0].mxu0
        %v4344 = vadd.f32 %v3794, %v4343
        %v4345 = vpop.f32.mrb[0].mxu0
        %v4346 = vpop.f32.mrb[0].mxu0
        %v4347 = vadd.f32 %v3794, %v4346
        %v4348 = vpop.f32.mrb[0].mxu0
        %4349 = vmatprep.mubr.bf16.mxu0 0
        %4350 = vmatmul.mubr.bf16.gmra.mrb[0].mxu0 %v3936
        %v4351 = vpop.f32.mrb[0].mxu0
        %v4352 = vadd.f32 %v3794, %v4351
        %v4353 = vpop.f32.mrb[0].mxu0
        %v4354 = vpop.f32.mrb[0].mxu0
        %v4355 = vadd.f32 %v3794, %v4354
        %v4356 = vpop.f32.mrb[0].mxu0
        %4357 = vmatprep.mubr.bf16.mxu0 0
        %4358 = vmatmul.mubr.bf16.gmra.mrb[0].mxu0 %v3939
        %v4359 = vpop.f32.mrb[0].mxu0
        %v4360 = vadd.f32 %v3794, %v4359
        %v4361 = vpop.f32.mrb[0].mxu0
        %v4362 = vpop.f32.mrb[0].mxu0
        %v4363 = vadd.f32 %v3794, %v4362
        %v4364 = vpop.f32.mrb[0].mxu0
        %4365 = vmatprep.mubr.bf16.mxu0 0
        %4366 = vmatmul.mubr.bf16.gmra.mrb[0].mxu0 %v3942
        %v4367 = vpop.f32.mrb[0].mxu0
        %v4368 = vadd.f32 %v3794, %v4367
        %v4369 = vpop.f32.mrb[0].mxu0
        %v4370 = vpop.f32.mrb[0].mxu0
        %v4371 = vadd.f32 %v3794, %v4370
        %v4372 = vpop.f32.mrb[0].mxu0
        %4373 = vmatprep.mubr.bf16.mxu0 0
        %4374 = vmatmul.mubr.bf16.gmra.mrb[0].mxu0 %v3945
        %v4375 = vpop.f32.mrb[0].mxu0
        %v4376 = vadd.f32 %v3794, %v4375
        %v4377 = vpop.f32.mrb[0].mxu0
        %v4378 = vpop.f32.mrb[0].mxu0
        %v4379 = vadd.f32 %v3794, %v4378
        %v4380 = vpop.f32.mrb[0].mxu0
        %4381 = vmatprep.mubr.bf16.mxu0 0
        %4382 = vmatmul.mubr.bf16.gmra.mrb[0].mxu0 %v3948
        %v4383 = vpop.f32.mrb[0].mxu0
        %v4384 = vadd.f32 %v3794, %v4383
        %v4385 = vpop.f32.mrb[0].mxu0
        %v4386 = vpop.f32.mrb[0].mxu0
        %v4387 = vadd.f32 %v3794, %v4386
        %v4388 = vpop.f32.mrb[0].mxu0
        %4389 = vmatprep.mubr.bf16.mxu0 0
        %4390 = vmatmul.mubr.bf16.gmra.mrb[0].mxu0 %v3951
        %v4391 = vpop.f32.mrb[0].mxu0
        %v4392 = vadd.f32 %v3794, %v4391
        %v4393 = vpop.f32.mrb[0].mxu0
        %v4394 = vpop.f32.mrb[0].mxu0
        %v4395 = vadd.f32 %v3794, %v4394
        %v4396 = vpop.f32.mrb[0].mxu0
        %4397 = vmatprep.mubr.bf16.mxu0 0
        %4398 = vmatmul.mubr.bf16.gmra.mrb[0].mxu0 %v3954
        %v4399 = vpop.f32.mrb[0].mxu0
        %v4400 = vadd.f32 %v3794, %v4399
        %v4401 = vpop.f32.mrb[0].mxu0
        %v4402 = vpop.f32.mrb[0].mxu0
        %v4403 = vadd.f32 %v3794, %v4402
        %v4404 = vpop.f32.mrb[0].mxu0
        %4405 = vmatprep.mubr.bf16.mxu0 0
        %4406 = vmatmul.mubr.bf16.gmra.mrb[0].mxu0 %v3957
        %v4407 = vpop.f32.mrb[0].mxu0
        %v4408 = vadd.f32 %v3794, %v4407
        %v4409 = vpop.f32.mrb[0].mxu0
        %v4410 = vpop.f32.mrb[0].mxu0
        %v4411 = vadd.f32 %v3794, %v4410
        %v4412 = vpop.f32.mrb[0].mxu0
        %4413 = vmatprep.mubr.bf16.mxu0 0
        %4414 = vmatmul.mubr.bf16.gmra.mrb[0].mxu0 %v3960
        %v4415 = vpop.f32.mrb[0].mxu0
        %v4416 = vadd.f32 %v3794, %v4415
        %v4417 = vpop.f32.mrb[0].mxu0
        %v4418 = vpop.f32.mrb[0].mxu0
        %v4419 = vadd.f32 %v3794, %v4418
        %v4420 = vpop.f32.mrb[0].mxu0
        %4421 = vmatprep.mubr.bf16.mxu0 0
        %4422 = vmatmul.mubr.bf16.gmra.mrb[0].mxu0 %v3963
        %v4423 = vpop.f32.mrb[0].mxu0
        %v4424 = vadd.f32 %v3794, %v4423
        %v4425 = vpop.f32.mrb[0].mxu0
        %v4426 = vpop.f32.mrb[0].mxu0
        %v4427 = vadd.f32 %v3794, %v4426
        %v4428 = vpop.f32.mrb[0].mxu0
        %4429 = vmatprep.mubr.bf16.mxu0 0
        %4430 = vmatmul.mubr.bf16.gmra.mrb[0].mxu0 %v3966
        %v4431 = vpop.f32.mrb[0].mxu0
        %v4432 = vadd.f32 %v3794, %v4431
        %v4433 = vpop.f32.mrb[0].mxu0
        %v4434 = vpop.f32.mrb[0].mxu0
        %v4435 = vadd.f32 %v3794, %v4434
        %v4436 = vpop.f32.mrb[0].mxu0
        %4437 = vmatprep.mubr.bf16.mxu0 0
        %4438 = vmatmul.mubr.bf16.gmra.mrb[0].mxu0 %v3969
        %v4439 = vpop.f32.mrb[0].mxu0
        %v4440 = vadd.f32 %v3794, %v4439
        %v4441 = vpop.f32.mrb[0].mxu0
        %v4442 = vpop.f32.mrb[0].mxu0
        %v4443 = vadd.f32 %v3794, %v4442
        %v4444 = vpop.f32.mrb[0].mxu0
        %4445 = vmatprep.mubr.bf16.mxu0 0
        %4446 = vmatmul.mubr.bf16.gmra.mrb[0].mxu0 %v3972
        %v4447 = vpop.f32.mrb[0].mxu0
        %v4448 = vadd.f32 %v3794, %v4447
        %v4449 = vpop.f32.mrb[0].mxu0
        %v4450 = vpop.f32.mrb[0].mxu0
        %v4451 = vadd.f32 %v3794, %v4450
        %v4452 = vpop.f32.mrb[0].mxu0
        %4453 = vmatprep.mubr.bf16.mxu0 0
        %4454 = vmatmul.mubr.bf16.gmra.mrb[0].mxu0 %v3975
        %v4455 = vpop.f32.mrb[0].mxu0
        %v4456 = vadd.f32 %v3794, %v4455
        %v4457 = vpop.f32.mrb[0].mxu0
        %v4458 = vpop.f32.mrb[0].mxu0
        %v4459 = vadd.f32 %v3794, %v4458
        %v4460 = vpop.f32.mrb[0].mxu0
        %4461 = vmatprep.mubr.bf16.mxu0 0
        %4462 = vmatmul.mubr.bf16.gmra.mrb[0].mxu0 %v3978
        %v4463 = vpop.f32.mrb[0].mxu0
        %v4464 = vadd.f32 %v3794, %v4463
        %v4465 = vpop.f32.mrb[0].mxu0
        %v4466 = vpop.f32.mrb[0].mxu0
        %v4467 = vadd.f32 %v3794, %v4466
        %v4468 = vpop.f32.mrb[0].mxu0
        %4469 = vmatprep.mubr.bf16.mxu0 0
        %4470 = vmatmul.mubr.bf16.gmra.mrb[0].mxu0 %v3981
        %v4471 = vpop.f32.mrb[0].mxu0
        %v4472 = vadd.f32 %v3794, %v4471
        %v4473 = vpop.f32.mrb[0].mxu0
        %v4474 = vpop.f32.mrb[0].mxu0
        %v4475 = vadd.f32 %v3794, %v4474
        %v4476 = vpop.f32.mrb[0].mxu0
        %4477 = vmatprep.mubr.bf16.mxu0 0
        %4478 = vmatmul.mubr.bf16.gmra.mrb[0].mxu0 %v3984
        %v4479 = vpop.f32.mrb[0].mxu0
        %v4480 = vadd.f32 %v3794, %v4479
        %v4481 = vpop.f32.mrb[0].mxu0
        %v4482 = vpop.f32.mrb[0].mxu0
        %v4483 = vadd.f32 %v3794, %v4482
        %v4484 = vpop.f32.mrb[0].mxu0
        %4485 = vmatprep.mubr.bf16.mxu0 0
        %4486 = vmatmul.mubr.bf16.gmra.mrb[0].mxu0 %v3987
        %v4487 = vpop.f32.mrb[0].mxu0
        %v4488 = vadd.f32 %v3794, %v4487
        %v4489 = vpop.f32.mrb[0].mxu0
        %v4490 = vpop.f32.mrb[0].mxu0
        %v4491 = vadd.f32 %v3794, %v4490
        %v4492 = vpop.f32.mrb[0].mxu0
        %4493 = vmatprep.mubr.bf16.mxu0 0
        %4494 = vmatmul.mubr.bf16.gmra.mrb[0].mxu0 %v3990
        %v4495 = vpop.f32.mrb[0].mxu0
        %v4496 = vadd.f32 %v3794, %v4495
        %v4497 = vpop.f32.mrb[0].mxu0
        %v4498 = vpop.f32.mrb[0].mxu0
        %v4499 = vadd.f32 %v3794, %v4498
        %v4500 = vpop.f32.mrb[0].mxu0
        %4501 = vmatprep.mubr.bf16.mxu0 0
        %4502 = vmatmul.mubr.bf16.gmra.mrb[0].mxu0 %v3993
        %v4503 = vpop.f32.mrb[0].mxu0
        %v4504 = vadd.f32 %v3794, %v4503
        %v4505 = vpop.f32.mrb[0].mxu0
        %v4506 = vpop.f32.mrb[0].mxu0
        %v4507 = vadd.f32 %v3794, %v4506
        %v4508 = vpop.f32.mrb[0].mxu0
        %4509 = vmatprep.mubr.bf16.mxu0 0
        %4510 = vmatmul.mubr.bf16.gmra.mrb[0].mxu0 %v3996
        %v4511 = vpop.f32.mrb[0].mxu0
        %v4512 = vadd.f32 %v3794, %v4511
        %v4513 = vpop.f32.mrb[0].mxu0
        %v4514 = vpop.f32.mrb[0].mxu0
        %v4515 = vadd.f32 %v3794, %v4514
        %v4516 = vpop.f32.mrb[0].mxu0
        %4517 = vmatprep.mubr.bf16.mxu0 0
        %4518 = vmatmul.mubr.bf16.gmra.mrb[0].mxu0 %v3999
        %v4519 = vpop.f32.mrb[0].mxu0
        %v4520 = vadd.f32 %v3794, %v4519
        %v4521 = vpop.f32.mrb[0].mxu0
        %v4522 = vpop.f32.mrb[0].mxu0
        %v4523 = vadd.f32 %v3794, %v4522
        %v4524 = vpop.f32.mrb[0].mxu0
        %4525 = vmatprep.mubr.bf16.mxu0 0
        %4526 = vmatmul.mubr.bf16.gmra.mrb[0].mxu0 %v4002
        %v4527 = vpop.f32.mrb[0].mxu0
        %v4528 = vadd.f32 %v3794, %v4527
        %v4529 = vpop.f32.mrb[0].mxu0
        %v4530 = vpop.f32.mrb[0].mxu0
        %v4531 = vadd.f32 %v3794, %v4530
        %v4532 = vpop.f32.mrb[0].mxu0
        %4533 = vmatprep.mubr.bf16.mxu0 0
        %4534 = vmatmul.mubr.bf16.gmra.mrb[0].mxu0 %v4005
        %v4535 = vpop.f32.mrb[0].mxu0
        %v4536 = vadd.f32 %v3794, %v4535
        %v4537 = vpop.f32.mrb[0].mxu0
        %v4538 = vpop.f32.mrb[0].mxu0
        %v4539 = vadd.f32 %v3794, %v4538
        %v4540 = vpop.f32.mrb[0].mxu0
        %4541 = vmatprep.mubr.bf16.mxu0 0
        %4542 = vmatmul.mubr.bf16.gmra.mrb[0].mxu0 %v4008
        %v4543 = vpop.f32.mrb[0].mxu0
        %v4544 = vadd.f32 %v3794, %v4543
        %v4545 = vpop.f32.mrb[0].mxu0
        %v4546 = vpop.f32.mrb[0].mxu0
        %v4547 = vadd.f32 %v3794, %v4546
        %v4548 = vpop.f32.mrb[0].mxu0
        %4549 = vmatprep.mubr.bf16.mxu0 0
        %4550 = vmatmul.mubr.bf16.gmra.mrb[0].mxu0 %v4011
        %v4551 = vpop.f32.mrb[0].mxu0
        %v4552 = vadd.f32 %v3794, %v4551
        %v4553 = vpop.f32.mrb[0].mxu0
        %v4554 = vpop.f32.mrb[0].mxu0
        %v4555 = vadd.f32 %v3794, %v4554
        %v4556 = vpop.f32.mrb[0].mxu0
        %4557 = vdwg.mxu0
        %v4558 = vmax.f32 %v4048, 0.0
        %v4559 = vmax.f32 %v4051, 0.0
        %v4560 = vmax.f32 %v4056, 0.0
        %v4561 = vmax.f32 %v4059, 0.0
        %v4562 = vmax.f32 %v4064, 0.0
        %v4563 = vmax.f32 %v4067, 0.0
        %v4564 = vmax.f32 %v4072, 0.0
        %v4565 = vmax.f32 %v4075, 0.0
        %v4566 = vmax.f32 %v4080, 0.0
        %v4567 = vmax.f32 %v4083, 0.0
        %v4568 = vmax.f32 %v4088, 0.0
        %v4569 = vmax.f32 %v4091, 0.0
        %v4570 = vmax.f32 %v4096, 0.0
        %v4571 = vmax.f32 %v4099, 0.0
        %v4572 = vmax.f32 %v4104, 0.0
        %v4573 = vmax.f32 %v4107, 0.0
        %v4574 = vmax.f32 %v4112, 0.0
        %v4575 = vmax.f32 %v4115, 0.0
        %v4576 = vmax.f32 %v4120, 0.0
        %v4577 = vmax.f32 %v4123, 0.0
        %v4578 = vmax.f32 %v4128, 0.0
        %v4579 = vmax.f32 %v4131, 0.0
        %v4580 = vmax.f32 %v4136, 0.0
        %v4581 = vmax.f32 %v4139, 0.0
        %v4582 = vmax.f32 %v4144, 0.0
        %v4583 = vmax.f32 %v4147, 0.0
        %v4584 = vmax.f32 %v4152, 0.0
        %v4585 = vmax.f32 %v4155, 0.0
        %v4586 = vmax.f32 %v4160, 0.0
        %v4587 = vmax.f32 %v4163, 0.0
        %v4588 = vmax.f32 %v4168, 0.0
        %v4589 = vmax.f32 %v4171, 0.0
        %v4590 = vmax.f32 %v4176, 0.0
        %v4591 = vmax.f32 %v4179, 0.0
        %v4592 = vmax.f32 %v4184, 0.0
        %v4593 = vmax.f32 %v4187, 0.0
        %v4594 = vmax.f32 %v4192, 0.0
        %v4595 = vmax.f32 %v4195, 0.0
        %v4596 = vmax.f32 %v4200, 0.0
        %v4597 = vmax.f32 %v4203, 0.0
        %v4598 = vmax.f32 %v4208, 0.0
        %v4599 = vmax.f32 %v4211, 0.0
        %v4600 = vmax.f32 %v4216, 0.0
        %v4601 = vmax.f32 %v4219, 0.0
        %v4602 = vmax.f32 %v4224, 0.0
        %v4603 = vmax.f32 %v4227, 0.0
        %v4604 = vmax.f32 %v4232, 0.0
        %v4605 = vmax.f32 %v4235, 0.0
        %v4606 = vmax.f32 %v4240, 0.0
        %v4607 = vmax.f32 %v4243, 0.0
        %v4608 = vmax.f32 %v4248, 0.0
        %v4609 = vmax.f32 %v4251, 0.0
        %v4610 = vmax.f32 %v4256, 0.0
        %v4611 = vmax.f32 %v4259, 0.0
        %v4612 = vmax.f32 %v4264, 0.0
        %v4613 = vmax.f32 %v4267, 0.0
        %v4614 = vmax.f32 %v4272, 0.0
        %v4615 = vmax.f32 %v4275, 0.0
        %v4616 = vmax.f32 %v4280, 0.0
        %v4617 = vmax.f32 %v4283, 0.0
        %v4618 = vmax.f32 %v4288, 0.0
        %v4619 = vmax.f32 %v4291, 0.0
        %v4620 = vmax.f32 %v4296, 0.0
        %v4621 = vmax.f32 %v4299, 0.0
        %v4622 = vmax.f32 %v4304, 0.0
        %v4623 = vmax.f32 %v4307, 0.0
        %v4624 = vmax.f32 %v4312, 0.0
        %v4625 = vmax.f32 %v4315, 0.0
        %v4626 = vmax.f32 %v4320, 0.0
        %v4627 = vmax.f32 %v4323, 0.0
        %v4628 = vmax.f32 %v4328, 0.0
        %v4629 = vmax.f32 %v4331, 0.0
        %v4630 = vmax.f32 %v4336, 0.0
        %v4631 = vmax.f32 %v4339, 0.0
        %v4632 = vmax.f32 %v4344, 0.0
        %v4633 = vmax.f32 %v4347, 0.0
        %v4634 = vmax.f32 %v4352, 0.0
        %v4635 = vmax.f32 %v4355, 0.0
        %v4636 = vmax.f32 %v4360, 0.0
        %v4637 = vmax.f32 %v4363, 0.0
        %v4638 = vmax.f32 %v4368, 0.0
        %v4639 = vmax.f32 %v4371, 0.0
        %v4640 = vmax.f32 %v4376, 0.0
        %v4641 = vmax.f32 %v4379, 0.0
        %v4642 = vmax.f32 %v4384, 0.0
        %v4643 = vmax.f32 %v4387, 0.0
        %v4644 = vmax.f32 %v4392, 0.0
        %v4645 = vmax.f32 %v4395, 0.0
        %v4646 = vmax.f32 %v4400, 0.0
        %v4647 = vmax.f32 %v4403, 0.0
        %v4648 = vmax.f32 %v4408, 0.0
        %v4649 = vmax.f32 %v4411, 0.0
        %v4650 = vmax.f32 %v4416, 0.0
        %v4651 = vmax.f32 %v4419, 0.0
        %v4652 = vmax.f32 %v4424, 0.0
        %v4653 = vmax.f32 %v4427, 0.0
        %v4654 = vmax.f32 %v4432, 0.0
        %v4655 = vmax.f32 %v4435, 0.0
        %v4656 = vmax.f32 %v4440, 0.0
        %v4657 = vmax.f32 %v4443, 0.0
        %v4658 = vmax.f32 %v4448, 0.0
        %v4659 = vmax.f32 %v4451, 0.0
        %v4660 = vmax.f32 %v4456, 0.0
        %v4661 = vmax.f32 %v4459, 0.0
        %v4662 = vmax.f32 %v4464, 0.0
        %v4663 = vmax.f32 %v4467, 0.0
        %v4664 = vmax.f32 %v4472, 0.0
        %v4665 = vmax.f32 %v4475, 0.0
        %v4666 = vmax.f32 %v4480, 0.0
        %v4667 = vmax.f32 %v4483, 0.0
        %v4668 = vmax.f32 %v4488, 0.0
        %v4669 = vmax.f32 %v4491, 0.0
        %v4670 = vmax.f32 %v4496, 0.0
        %v4671 = vmax.f32 %v4499, 0.0
        %v4672 = vmax.f32 %v4504, 0.0
        %v4673 = vmax.f32 %v4507, 0.0
        %v4674 = vmax.f32 %v4512, 0.0
        %v4675 = vmax.f32 %v4515, 0.0
        %v4676 = vmax.f32 %v4520, 0.0
        %v4677 = vmax.f32 %v4523, 0.0
        %v4678 = vmax.f32 %v4528, 0.0
        %v4679 = vmax.f32 %v4531, 0.0
        %v4680 = vmax.f32 %v4536, 0.0
        %v4681 = vmax.f32 %v4539, 0.0
        %v4682 = vmax.f32 %v4544, 0.0
        %v4683 = vmax.f32 %v4547, 0.0
        %v4684 = vmax.f32 %v4552, 0.0
        %v4685 = vmax.f32 %v4555, 0.0
        %v4686 = vpack.c.bf16 %v4559, %v4558
        %v4687 = vpack.c.bf16 %v4561, %v4560
        %v4688 = vpack.c.bf16 %v4563, %v4562
        %v4689 = vpack.c.bf16 %v4565, %v4564
        %v4690 = vpack.c.bf16 %v4567, %v4566
        %v4691 = vpack.c.bf16 %v4569, %v4568
        %v4692 = vpack.c.bf16 %v4571, %v4570
        %v4693 = vpack.c.bf16 %v4573, %v4572
        %v4694 = vpack.c.bf16 %v4575, %v4574
        %v4695 = vpack.c.bf16 %v4577, %v4576
        %v4696 = vpack.c.bf16 %v4579, %v4578
        %v4697 = vpack.c.bf16 %v4581, %v4580
        %v4698 = vpack.c.bf16 %v4583, %v4582
        %v4699 = vpack.c.bf16 %v4585, %v4584
        %v4700 = vpack.c.bf16 %v4587, %v4586
        %v4701 = vpack.c.bf16 %v4589, %v4588
        %v4702 = vpack.c.bf16 %v4591, %v4590
        %v4703 = vpack.c.bf16 %v4593, %v4592
        %v4704 = vpack.c.bf16 %v4595, %v4594
        %v4705 = vpack.c.bf16 %v4597, %v4596
        %v4706 = vpack.c.bf16 %v4599, %v4598
        %v4707 = vpack.c.bf16 %v4601, %v4600
        %v4708 = vpack.c.bf16 %v4603, %v4602
        %v4709 = vpack.c.bf16 %v4605, %v4604
        %v4710 = vpack.c.bf16 %v4607, %v4606
        %v4711 = vpack.c.bf16 %v4609, %v4608
        %v4712 = vpack.c.bf16 %v4611, %v4610
        %v4713 = vpack.c.bf16 %v4613, %v4612
        %v4714 = vpack.c.bf16 %v4615, %v4614
        %v4715 = vpack.c.bf16 %v4617, %v4616
        %v4716 = vpack.c.bf16 %v4619, %v4618
        %v4717 = vpack.c.bf16 %v4621, %v4620
        %v4718 = vpack.c.bf16 %v4623, %v4622
        %v4719 = vpack.c.bf16 %v4625, %v4624
        %v4720 = vpack.c.bf16 %v4627, %v4626
        %v4721 = vpack.c.bf16 %v4629, %v4628
        %v4722 = vpack.c.bf16 %v4631, %v4630
        %v4723 = vpack.c.bf16 %v4633, %v4632
        %v4724 = vpack.c.bf16 %v4635, %v4634
        %v4725 = vpack.c.bf16 %v4637, %v4636
        %v4726 = vpack.c.bf16 %v4639, %v4638
        %v4727 = vpack.c.bf16 %v4641, %v4640
        %v4728 = vpack.c.bf16 %v4643, %v4642
        %v4729 = vpack.c.bf16 %v4645, %v4644
        %v4730 = vpack.c.bf16 %v4647, %v4646
        %v4731 = vpack.c.bf16 %v4649, %v4648
        %v4732 = vpack.c.bf16 %v4651, %v4650
        %v4733 = vpack.c.bf16 %v4653, %v4652
        %v4734 = vpack.c.bf16 %v4655, %v4654
        %v4735 = vpack.c.bf16 %v4657, %v4656
        %v4736 = vpack.c.bf16 %v4659, %v4658
        %v4737 = vpack.c.bf16 %v4661, %v4660
        %v4738 = vpack.c.bf16 %v4663, %v4662
        %v4739 = vpack.c.bf16 %v4665, %v4664
        %v4740 = vpack.c.bf16 %v4667, %v4666
        %v4741 = vpack.c.bf16 %v4669, %v4668
        %v4742 = vpack.c.bf16 %v4671, %v4670
        %v4743 = vpack.c.bf16 %v4673, %v4672
        %v4744 = vpack.c.bf16 %v4675, %v4674
        %v4745 = vpack.c.bf16 %v4677, %v4676
        %v4746 = vpack.c.bf16 %v4679, %v4678
        %v4747 = vpack.c.bf16 %v4681, %v4680
        %v4748 = vpack.c.bf16 %v4683, %v4682
        %v4749 = vpack.c.bf16 %v4685, %v4684
        %v4750 = vld [vmem:[%s5] sm:$0xf]
        %v4751 = vld [vmem:[%s5 + $0x4] sm:$0xf]
        %v4752 = vld [vmem:[%s5 + $0x8] sm:$0xf]
        %v4753 = vld [vmem:[%s5 + $0xc] sm:$0xf]
        %v4754 = vld [vmem:[%s5 + $0x10] sm:$0xf]
        %v4755 = vld [vmem:[%s5 + $0x14] sm:$0xf]
        %v4756 = vld [vmem:[%s5 + $0x18] sm:$0xf]
        %v4757 = vld [vmem:[%s5 + $0x1c] sm:$0xf]
        %v4758 = vld [vmem:[%s5 + $0x20] sm:$0xf]
        %v4759 = vld [vmem:[%s5 + $0x24] sm:$0xf]
        %v4760 = vld [vmem:[%s5 + $0x28] sm:$0xf]
        %v4761 = vld [vmem:[%s5 + $0x2c] sm:$0xf]
        %v4762 = vld [vmem:[%s5 + $0x30] sm:$0xf]
        %v4763 = vld [vmem:[%s5 + $0x34] sm:$0xf]
        %v4764 = vld [vmem:[%s5 + $0x38] sm:$0xf]
        %v4765 = vld [vmem:[%s5 + $0x3c] sm:$0xf]
        %v4782 = vunpack.c.l.b16 %v4750
        %v4783 = vunpack.c.l.b16 %v4751
        %v4784 = vunpack.c.l.b16 %v4752
        %v4785 = vunpack.c.l.b16 %v4753
        %v4786 = vunpack.c.l.b16 %v4754
        %v4787 = vunpack.c.l.b16 %v4755
        %v4788 = vunpack.c.l.b16 %v4756
        %v4789 = vunpack.c.l.b16 %v4757
        %v4790 = vunpack.c.l.b16 %v4758
        %v4791 = vunpack.c.l.b16 %v4759
        %v4792 = vunpack.c.l.b16 %v4760
        %v4793 = vunpack.c.l.b16 %v4761
        %v4794 = vunpack.c.l.b16 %v4762
        %v4795 = vunpack.c.l.b16 %v4763
        %v4796 = vunpack.c.l.b16 %v4764
        %v4797 = vunpack.c.l.b16 %v4765
        %v4798 = vpack.c.b16 %v4783, %v4782
        %v4799 = vpack.c.b16 %v4785, %v4784
        %v4800 = vpack.c.b16 %v4787, %v4786
        %v4801 = vpack.c.b16 %v4789, %v4788
        %v4802 = vpack.c.b16 %v4791, %v4790
        %v4803 = vpack.c.b16 %v4793, %v4792
        %v4804 = vpack.c.b16 %v4795, %v4794
        %v4805 = vpack.c.b16 %v4797, %v4796
        %4814 = vmatprep.subr.bf16.mxu0 0
        %4815 = vmatpush1.bf16.msra.mxu0 %v4798
        %4816 = vmatprep.subr.bf16.mxu0 0
        %4817 = vmatpush1.bf16.msra.mxu0 %v4799
        %4818 = vmatprep.subr.bf16.mxu0 0
        %4819 = vmatpush1.bf16.msra.mxu0 %v4800
        %4820 = vmatprep.subr.bf16.mxu0 0
        %4821 = vmatpush1.bf16.msra.mxu0 %v4801
        %4822 = vmatprep.subr.bf16.mxu0 0
        %4823 = vmatpush1.bf16.msra.mxu0 %v4802
        %4824 = vmatprep.subr.bf16.mxu0 0
        %4825 = vmatpush1.bf16.msra.mxu0 %v4803
        %4826 = vmatprep.subr.bf16.mxu0 0
        %4827 = vmatpush1.bf16.msra.mxu0 %v4804
        %4828 = vmatprep.subr.bf16.mxu0 0
        %4829 = vmatpush1.bf16.msra.mxu0 %v4805
        %4830 = vmatprep.subr.bf16.mxu0 0
        %4831 = vmatpush1.bf16.msra.mxu0 0
        %4832 = vmatprep.subr.bf16.mxu0 0
        %4833 = vmatpush1.bf16.msra.mxu0 0
        %4834 = vmatprep.subr.bf16.mxu0 0
        %4835 = vmatpush1.bf16.msra.mxu0 0
        %4836 = vmatprep.subr.bf16.mxu0 0
        %4837 = vmatpush1.bf16.msra.mxu0 0
        %4838 = vmatprep.subr.bf16.mxu0 0
        %4839 = vmatpush1.bf16.msra.mxu0 0
        %4840 = vmatprep.subr.bf16.mxu0 0
        %4841 = vmatpush1.bf16.msra.mxu0 0
        %4842 = vmatprep.subr.bf16.mxu0 0
        %4843 = vmatpush1.bf16.msra.mxu0 0
        %4844 = vmatprep.subr.bf16.mxu0 0
        %4845 = vmatpush1.bf16.msra.mxu0 0
        %4846 = vmatprep.mubr.bf16.mxu0 0
        %4847 = vmatmul.mubr.bf16.gmra.mrb[0].mxu0 %v4686
        %v4848 = vpop.f32.mrb[0].mxu0
        %v4849 = vadd.f32 0.0, %v4848
        %v4850 = vpop.f32.mrb[0].mxu0
        %v4851 = vpop.f32.mrb[0].mxu0
        %v4852 = vadd.f32 0.0, %v4851
        %v4853 = vpop.f32.mrb[0].mxu0
        %4854 = vmatprep.mubr.bf16.mxu0 0
        %4855 = vmatmul.mubr.bf16.gmra.mrb[0].mxu0 %v4687
        %v4856 = vpop.f32.mrb[0].mxu0
        %v4857 = vadd.f32 0.0, %v4856
        %v4858 = vpop.f32.mrb[0].mxu0
        %v4859 = vpop.f32.mrb[0].mxu0
        %v4860 = vadd.f32 0.0, %v4859
        %v4861 = vpop.f32.mrb[0].mxu0
        %4862 = vmatprep.mubr.bf16.mxu0 0
        %4863 = vmatmul.mubr.bf16.gmra.mrb[0].mxu0 %v4688
        %v4864 = vpop.f32.mrb[0].mxu0
        %v4865 = vadd.f32 0.0, %v4864
        %v4866 = vpop.f32.mrb[0].mxu0
        %v4867 = vpop.f32.mrb[0].mxu0
        %v4868 = vadd.f32 0.0, %v4867
        %v4869 = vpop.f32.mrb[0].mxu0
        %4870 = vmatprep.mubr.bf16.mxu0 0
        %4871 = vmatmul.mubr.bf16.gmra.mrb[0].mxu0 %v4689
        %v4872 = vpop.f32.mrb[0].mxu0
        %v4873 = vadd.f32 0.0, %v4872
        %v4874 = vpop.f32.mrb[0].mxu0
        %v4875 = vpop.f32.mrb[0].mxu0
        %v4876 = vadd.f32 0.0, %v4875
        %v4877 = vpop.f32.mrb[0].mxu0
        %4878 = vmatprep.mubr.bf16.mxu0 0
        %4879 = vmatmul.mubr.bf16.gmra.mrb[0].mxu0 %v4690
        %v4880 = vpop.f32.mrb[0].mxu0
        %v4881 = vadd.f32 0.0, %v4880
        %v4882 = vpop.f32.mrb[0].mxu0
        %v4883 = vpop.f32.mrb[0].mxu0
        %v4884 = vadd.f32 0.0, %v4883
        %v4885 = vpop.f32.mrb[0].mxu0
        %4886 = vmatprep.mubr.bf16.mxu0 0
        %4887 = vmatmul.mubr.bf16.gmra.mrb[0].mxu0 %v4691
        %v4888 = vpop.f32.mrb[0].mxu0
        %v4889 = vadd.f32 0.0, %v4888
        %v4890 = vpop.f32.mrb[0].mxu0
        %v4891 = vpop.f32.mrb[0].mxu0
        %v4892 = vadd.f32 0.0, %v4891
        %v4893 = vpop.f32.mrb[0].mxu0
        %4894 = vmatprep.mubr.bf16.mxu0 0
        %4895 = vmatmul.mubr.bf16.gmra.mrb[0].mxu0 %v4692
        %v4896 = vpop.f32.mrb[0].mxu0
        %v4897 = vadd.f32 0.0, %v4896
        %v4898 = vpop.f32.mrb[0].mxu0
        %v4899 = vpop.f32.mrb[0].mxu0
        %v4900 = vadd.f32 0.0, %v4899
        %v4901 = vpop.f32.mrb[0].mxu0
        %4902 = vmatprep.mubr.bf16.mxu0 0
        %4903 = vmatmul.mubr.bf16.gmra.mrb[0].mxu0 %v4693
        %v4904 = vpop.f32.mrb[0].mxu0
        %v4905 = vadd.f32 0.0, %v4904
        %v4906 = vpop.f32.mrb[0].mxu0
        %v4907 = vpop.f32.mrb[0].mxu0
        %v4908 = vadd.f32 0.0, %v4907
        %v4909 = vpop.f32.mrb[0].mxu0
        %4910 = vmatprep.mubr.bf16.mxu0 0
        %4911 = vmatmul.mubr.bf16.gmra.mrb[0].mxu0 %v4694
        %v4912 = vpop.f32.mrb[0].mxu0
        %v4913 = vadd.f32 0.0, %v4912
        %v4914 = vpop.f32.mrb[0].mxu0
        %v4915 = vpop.f32.mrb[0].mxu0
        %v4916 = vadd.f32 0.0, %v4915
        %v4917 = vpop.f32.mrb[0].mxu0
        %4918 = vmatprep.mubr.bf16.mxu0 0
        %4919 = vmatmul.mubr.bf16.gmra.mrb[0].mxu0 %v4695
        %v4920 = vpop.f32.mrb[0].mxu0
        %v4921 = vadd.f32 0.0, %v4920
        %v4922 = vpop.f32.mrb[0].mxu0
        %v4923 = vpop.f32.mrb[0].mxu0
        %v4924 = vadd.f32 0.0, %v4923
        %v4925 = vpop.f32.mrb[0].mxu0
        %4926 = vmatprep.mubr.bf16.mxu0 0
        %4927 = vmatmul.mubr.bf16.gmra.mrb[0].mxu0 %v4696
        %v4928 = vpop.f32.mrb[0].mxu0
        %v4929 = vadd.f32 0.0, %v4928
        %v4930 = vpop.f32.mrb[0].mxu0
        %v4931 = vpop.f32.mrb[0].mxu0
        %v4932 = vadd.f32 0.0, %v4931
        %v4933 = vpop.f32.mrb[0].mxu0
        %4934 = vmatprep.mubr.bf16.mxu0 0
        %4935 = vmatmul.mubr.bf16.gmra.mrb[0].mxu0 %v4697
        %v4936 = vpop.f32.mrb[0].mxu0
        %v4937 = vadd.f32 0.0, %v4936
        %v4938 = vpop.f32.mrb[0].mxu0
        %v4939 = vpop.f32.mrb[0].mxu0
        %v4940 = vadd.f32 0.0, %v4939
        %v4941 = vpop.f32.mrb[0].mxu0
        %4942 = vmatprep.mubr.bf16.mxu0 0
        %4943 = vmatmul.mubr.bf16.gmra.mrb[0].mxu0 %v4698
        %v4944 = vpop.f32.mrb[0].mxu0
        %v4945 = vadd.f32 0.0, %v4944
        %v4946 = vpop.f32.mrb[0].mxu0
        %v4947 = vpop.f32.mrb[0].mxu0
        %v4948 = vadd.f32 0.0, %v4947
        %v4949 = vpop.f32.mrb[0].mxu0
        %4950 = vmatprep.mubr.bf16.mxu0 0
        %4951 = vmatmul.mubr.bf16.gmra.mrb[0].mxu0 %v4699
        %v4952 = vpop.f32.mrb[0].mxu0
        %v4953 = vadd.f32 0.0, %v4952
        %v4954 = vpop.f32.mrb[0].mxu0
        %v4955 = vpop.f32.mrb[0].mxu0
        %v4956 = vadd.f32 0.0, %v4955
        %v4957 = vpop.f32.mrb[0].mxu0
        %4958 = vmatprep.mubr.bf16.mxu0 0
        %4959 = vmatmul.mubr.bf16.gmra.mrb[0].mxu0 %v4700
        %v4960 = vpop.f32.mrb[0].mxu0
        %v4961 = vadd.f32 0.0, %v4960
        %v4962 = vpop.f32.mrb[0].mxu0
        %v4963 = vpop.f32.mrb[0].mxu0
        %v4964 = vadd.f32 0.0, %v4963
        %v4965 = vpop.f32.mrb[0].mxu0
        %4966 = vmatprep.mubr.bf16.mxu0 0
        %4967 = vmatmul.mubr.bf16.gmra.mrb[0].mxu0 %v4701
        %v4968 = vpop.f32.mrb[0].mxu0
        %v4969 = vadd.f32 0.0, %v4968
        %v4970 = vpop.f32.mrb[0].mxu0
        %v4971 = vpop.f32.mrb[0].mxu0
        %v4972 = vadd.f32 0.0, %v4971
        %v4973 = vpop.f32.mrb[0].mxu0
        %4974 = vmatprep.mubr.bf16.mxu0 0
        %4975 = vmatmul.mubr.bf16.gmra.mrb[0].mxu0 %v4702
        %v4976 = vpop.f32.mrb[0].mxu0
        %v4977 = vadd.f32 0.0, %v4976
        %v4978 = vpop.f32.mrb[0].mxu0
        %v4979 = vpop.f32.mrb[0].mxu0
        %v4980 = vadd.f32 0.0, %v4979
        %v4981 = vpop.f32.mrb[0].mxu0
        %4982 = vmatprep.mubr.bf16.mxu0 0
        %4983 = vmatmul.mubr.bf16.gmra.mrb[0].mxu0 %v4703
        %v4984 = vpop.f32.mrb[0].mxu0
        %v4985 = vadd.f32 0.0, %v4984
        %v4986 = vpop.f32.mrb[0].mxu0
        %v4987 = vpop.f32.mrb[0].mxu0
        %v4988 = vadd.f32 0.0, %v4987
        %v4989 = vpop.f32.mrb[0].mxu0
        %4990 = vmatprep.mubr.bf16.mxu0 0
        %4991 = vmatmul.mubr.bf16.gmra.mrb[0].mxu0 %v4704
        %v4992 = vpop.f32.mrb[0].mxu0
        %v4993 = vadd.f32 0.0, %v4992
        %v4994 = vpop.f32.mrb[0].mxu0
        %v4995 = vpop.f32.mrb[0].mxu0
        %v4996 = vadd.f32 0.0, %v4995
        %v4997 = vpop.f32.mrb[0].mxu0
        %4998 = vmatprep.mubr.bf16.mxu0 0
        %4999 = vmatmul.mubr.bf16.gmra.mrb[0].mxu0 %v4705
        %v5000 = vpop.f32.mrb[0].mxu0
        %v5001 = vadd.f32 0.0, %v5000
        %v5002 = vpop.f32.mrb[0].mxu0
        %v5003 = vpop.f32.mrb[0].mxu0
        %v5004 = vadd.f32 0.0, %v5003
        %v5005 = vpop.f32.mrb[0].mxu0
        %5006 = vmatprep.mubr.bf16.mxu0 0
        %5007 = vmatmul.mubr.bf16.gmra.mrb[0].mxu0 %v4706
        %v5008 = vpop.f32.mrb[0].mxu0
        %v5009 = vadd.f32 0.0, %v5008
        %v5010 = vpop.f32.mrb[0].mxu0
        %v5011 = vpop.f32.mrb[0].mxu0
        %v5012 = vadd.f32 0.0, %v5011
        %v5013 = vpop.f32.mrb[0].mxu0
        %5014 = vmatprep.mubr.bf16.mxu0 0
        %5015 = vmatmul.mubr.bf16.gmra.mrb[0].mxu0 %v4707
        %v5016 = vpop.f32.mrb[0].mxu0
        %v5017 = vadd.f32 0.0, %v5016
        %v5018 = vpop.f32.mrb[0].mxu0
        %v5019 = vpop.f32.mrb[0].mxu0
        %v5020 = vadd.f32 0.0, %v5019
        %v5021 = vpop.f32.mrb[0].mxu0
        %5022 = vmatprep.mubr.bf16.mxu0 0
        %5023 = vmatmul.mubr.bf16.gmra.mrb[0].mxu0 %v4708
        %v5024 = vpop.f32.mrb[0].mxu0
        %v5025 = vadd.f32 0.0, %v5024
        %v5026 = vpop.f32.mrb[0].mxu0
        %v5027 = vpop.f32.mrb[0].mxu0
        %v5028 = vadd.f32 0.0, %v5027
        %v5029 = vpop.f32.mrb[0].mxu0
        %5030 = vmatprep.mubr.bf16.mxu0 0
        %5031 = vmatmul.mubr.bf16.gmra.mrb[0].mxu0 %v4709
        %v5032 = vpop.f32.mrb[0].mxu0
        %v5033 = vadd.f32 0.0, %v5032
        %v5034 = vpop.f32.mrb[0].mxu0
        %v5035 = vpop.f32.mrb[0].mxu0
        %v5036 = vadd.f32 0.0, %v5035
        %v5037 = vpop.f32.mrb[0].mxu0
        %5038 = vmatprep.mubr.bf16.mxu0 0
        %5039 = vmatmul.mubr.bf16.gmra.mrb[0].mxu0 %v4710
        %v5040 = vpop.f32.mrb[0].mxu0
        %v5041 = vadd.f32 0.0, %v5040
        %v5042 = vpop.f32.mrb[0].mxu0
        %v5043 = vpop.f32.mrb[0].mxu0
        %v5044 = vadd.f32 0.0, %v5043
        %v5045 = vpop.f32.mrb[0].mxu0
        %5046 = vmatprep.mubr.bf16.mxu0 0
        %5047 = vmatmul.mubr.bf16.gmra.mrb[0].mxu0 %v4711
        %v5048 = vpop.f32.mrb[0].mxu0
        %v5049 = vadd.f32 0.0, %v5048
        %v5050 = vpop.f32.mrb[0].mxu0
        %v5051 = vpop.f32.mrb[0].mxu0
        %v5052 = vadd.f32 0.0, %v5051
        %v5053 = vpop.f32.mrb[0].mxu0
        %5054 = vmatprep.mubr.bf16.mxu0 0
        %5055 = vmatmul.mubr.bf16.gmra.mrb[0].mxu0 %v4712
        %v5056 = vpop.f32.mrb[0].mxu0
        %v5057 = vadd.f32 0.0, %v5056
        %v5058 = vpop.f32.mrb[0].mxu0
        %v5059 = vpop.f32.mrb[0].mxu0
        %v5060 = vadd.f32 0.0, %v5059
        %v5061 = vpop.f32.mrb[0].mxu0
        %5062 = vmatprep.mubr.bf16.mxu0 0
        %5063 = vmatmul.mubr.bf16.gmra.mrb[0].mxu0 %v4713
        %v5064 = vpop.f32.mrb[0].mxu0
        %v5065 = vadd.f32 0.0, %v5064
        %v5066 = vpop.f32.mrb[0].mxu0
        %v5067 = vpop.f32.mrb[0].mxu0
        %v5068 = vadd.f32 0.0, %v5067
        %v5069 = vpop.f32.mrb[0].mxu0
        %5070 = vmatprep.mubr.bf16.mxu0 0
        %5071 = vmatmul.mubr.bf16.gmra.mrb[0].mxu0 %v4714
        %v5072 = vpop.f32.mrb[0].mxu0
        %v5073 = vadd.f32 0.0, %v5072
        %v5074 = vpop.f32.mrb[0].mxu0
        %v5075 = vpop.f32.mrb[0].mxu0
        %v5076 = vadd.f32 0.0, %v5075
        %v5077 = vpop.f32.mrb[0].mxu0
        %5078 = vmatprep.mubr.bf16.mxu0 0
        %5079 = vmatmul.mubr.bf16.gmra.mrb[0].mxu0 %v4715
        %v5080 = vpop.f32.mrb[0].mxu0
        %v5081 = vadd.f32 0.0, %v5080
        %v5082 = vpop.f32.mrb[0].mxu0
        %v5083 = vpop.f32.mrb[0].mxu0
        %v5084 = vadd.f32 0.0, %v5083
        %v5085 = vpop.f32.mrb[0].mxu0
        %5086 = vmatprep.mubr.bf16.mxu0 0
        %5087 = vmatmul.mubr.bf16.gmra.mrb[0].mxu0 %v4716
        %v5088 = vpop.f32.mrb[0].mxu0
        %v5089 = vadd.f32 0.0, %v5088
        %v5090 = vpop.f32.mrb[0].mxu0
        %v5091 = vpop.f32.mrb[0].mxu0
        %v5092 = vadd.f32 0.0, %v5091
        %v5093 = vpop.f32.mrb[0].mxu0
        %5094 = vmatprep.mubr.bf16.mxu0 0
        %5095 = vmatmul.mubr.bf16.gmra.mrb[0].mxu0 %v4717
        %v5096 = vpop.f32.mrb[0].mxu0
        %v5097 = vadd.f32 0.0, %v5096
        %v5098 = vpop.f32.mrb[0].mxu0
        %v5099 = vpop.f32.mrb[0].mxu0
        %v5100 = vadd.f32 0.0, %v5099
        %v5101 = vpop.f32.mrb[0].mxu0
        %5102 = vmatprep.mubr.bf16.mxu0 0
        %5103 = vmatmul.mubr.bf16.gmra.mrb[0].mxu0 %v4718
        %v5104 = vpop.f32.mrb[0].mxu0
        %v5105 = vadd.f32 0.0, %v5104
        %v5106 = vpop.f32.mrb[0].mxu0
        %v5107 = vpop.f32.mrb[0].mxu0
        %v5108 = vadd.f32 0.0, %v5107
        %v5109 = vpop.f32.mrb[0].mxu0
        %5110 = vmatprep.mubr.bf16.mxu0 0
        %5111 = vmatmul.mubr.bf16.gmra.mrb[0].mxu0 %v4719
        %v5112 = vpop.f32.mrb[0].mxu0
        %v5113 = vadd.f32 0.0, %v5112
        %v5114 = vpop.f32.mrb[0].mxu0
        %v5115 = vpop.f32.mrb[0].mxu0
        %v5116 = vadd.f32 0.0, %v5115
        %v5117 = vpop.f32.mrb[0].mxu0
        %5118 = vmatprep.mubr.bf16.mxu0 0
        %5119 = vmatmul.mubr.bf16.gmra.mrb[0].mxu0 %v4720
        %v5120 = vpop.f32.mrb[0].mxu0
        %v5121 = vadd.f32 0.0, %v5120
        %v5122 = vpop.f32.mrb[0].mxu0
        %v5123 = vpop.f32.mrb[0].mxu0
        %v5124 = vadd.f32 0.0, %v5123
        %v5125 = vpop.f32.mrb[0].mxu0
        %5126 = vmatprep.mubr.bf16.mxu0 0
        %5127 = vmatmul.mubr.bf16.gmra.mrb[0].mxu0 %v4721
        %v5128 = vpop.f32.mrb[0].mxu0
        %v5129 = vadd.f32 0.0, %v5128
        %v5130 = vpop.f32.mrb[0].mxu0
        %v5131 = vpop.f32.mrb[0].mxu0
        %v5132 = vadd.f32 0.0, %v5131
        %v5133 = vpop.f32.mrb[0].mxu0
        %5134 = vmatprep.mubr.bf16.mxu0 0
        %5135 = vmatmul.mubr.bf16.gmra.mrb[0].mxu0 %v4722
        %v5136 = vpop.f32.mrb[0].mxu0
        %v5137 = vadd.f32 0.0, %v5136
        %v5138 = vpop.f32.mrb[0].mxu0
        %v5139 = vpop.f32.mrb[0].mxu0
        %v5140 = vadd.f32 0.0, %v5139
        %v5141 = vpop.f32.mrb[0].mxu0
        %5142 = vmatprep.mubr.bf16.mxu0 0
        %5143 = vmatmul.mubr.bf16.gmra.mrb[0].mxu0 %v4723
        %v5144 = vpop.f32.mrb[0].mxu0
        %v5145 = vadd.f32 0.0, %v5144
        %v5146 = vpop.f32.mrb[0].mxu0
        %v5147 = vpop.f32.mrb[0].mxu0
        %v5148 = vadd.f32 0.0, %v5147
        %v5149 = vpop.f32.mrb[0].mxu0
        %5150 = vmatprep.mubr.bf16.mxu0 0
        %5151 = vmatmul.mubr.bf16.gmra.mrb[0].mxu0 %v4724
        %v5152 = vpop.f32.mrb[0].mxu0
        %v5153 = vadd.f32 0.0, %v5152
        %v5154 = vpop.f32.mrb[0].mxu0
        %v5155 = vpop.f32.mrb[0].mxu0
        %v5156 = vadd.f32 0.0, %v5155
        %v5157 = vpop.f32.mrb[0].mxu0
        %5158 = vmatprep.mubr.bf16.mxu0 0
        %5159 = vmatmul.mubr.bf16.gmra.mrb[0].mxu0 %v4725
        %v5160 = vpop.f32.mrb[0].mxu0
        %v5161 = vadd.f32 0.0, %v5160
        %v5162 = vpop.f32.mrb[0].mxu0
        %v5163 = vpop.f32.mrb[0].mxu0
        %v5164 = vadd.f32 0.0, %v5163
        %v5165 = vpop.f32.mrb[0].mxu0
        %5166 = vmatprep.mubr.bf16.mxu0 0
        %5167 = vmatmul.mubr.bf16.gmra.mrb[0].mxu0 %v4726
        %v5168 = vpop.f32.mrb[0].mxu0
        %v5169 = vadd.f32 0.0, %v5168
        %v5170 = vpop.f32.mrb[0].mxu0
        %v5171 = vpop.f32.mrb[0].mxu0
        %v5172 = vadd.f32 0.0, %v5171
        %v5173 = vpop.f32.mrb[0].mxu0
        %5174 = vmatprep.mubr.bf16.mxu0 0
        %5175 = vmatmul.mubr.bf16.gmra.mrb[0].mxu0 %v4727
        %v5176 = vpop.f32.mrb[0].mxu0
        %v5177 = vadd.f32 0.0, %v5176
        %v5178 = vpop.f32.mrb[0].mxu0
        %v5179 = vpop.f32.mrb[0].mxu0
        %v5180 = vadd.f32 0.0, %v5179
        %v5181 = vpop.f32.mrb[0].mxu0
        %5182 = vmatprep.mubr.bf16.mxu0 0
        %5183 = vmatmul.mubr.bf16.gmra.mrb[0].mxu0 %v4728
        %v5184 = vpop.f32.mrb[0].mxu0
        %v5185 = vadd.f32 0.0, %v5184
        %v5186 = vpop.f32.mrb[0].mxu0
        %v5187 = vpop.f32.mrb[0].mxu0
        %v5188 = vadd.f32 0.0, %v5187
        %v5189 = vpop.f32.mrb[0].mxu0
        %5190 = vmatprep.mubr.bf16.mxu0 0
        %5191 = vmatmul.mubr.bf16.gmra.mrb[0].mxu0 %v4729
        %v5192 = vpop.f32.mrb[0].mxu0
        %v5193 = vadd.f32 0.0, %v5192
        %v5194 = vpop.f32.mrb[0].mxu0
        %v5195 = vpop.f32.mrb[0].mxu0
        %v5196 = vadd.f32 0.0, %v5195
        %v5197 = vpop.f32.mrb[0].mxu0
        %5198 = vmatprep.mubr.bf16.mxu0 0
        %5199 = vmatmul.mubr.bf16.gmra.mrb[0].mxu0 %v4730
        %v5200 = vpop.f32.mrb[0].mxu0
        %v5201 = vadd.f32 0.0, %v5200
        %v5202 = vpop.f32.mrb[0].mxu0
        %v5203 = vpop.f32.mrb[0].mxu0
        %v5204 = vadd.f32 0.0, %v5203
        %v5205 = vpop.f32.mrb[0].mxu0
        %5206 = vmatprep.mubr.bf16.mxu0 0
        %5207 = vmatmul.mubr.bf16.gmra.mrb[0].mxu0 %v4731
        %v5208 = vpop.f32.mrb[0].mxu0
        %v5209 = vadd.f32 0.0, %v5208
        %v5210 = vpop.f32.mrb[0].mxu0
        %v5211 = vpop.f32.mrb[0].mxu0
        %v5212 = vadd.f32 0.0, %v5211
        %v5213 = vpop.f32.mrb[0].mxu0
        %5214 = vmatprep.mubr.bf16.mxu0 0
        %5215 = vmatmul.mubr.bf16.gmra.mrb[0].mxu0 %v4732
        %v5216 = vpop.f32.mrb[0].mxu0
        %v5217 = vadd.f32 0.0, %v5216
        %v5218 = vpop.f32.mrb[0].mxu0
        %v5219 = vpop.f32.mrb[0].mxu0
        %v5220 = vadd.f32 0.0, %v5219
        %v5221 = vpop.f32.mrb[0].mxu0
        %5222 = vmatprep.mubr.bf16.mxu0 0
        %5223 = vmatmul.mubr.bf16.gmra.mrb[0].mxu0 %v4733
        %v5224 = vpop.f32.mrb[0].mxu0
        %v5225 = vadd.f32 0.0, %v5224
        %v5226 = vpop.f32.mrb[0].mxu0
        %v5227 = vpop.f32.mrb[0].mxu0
        %v5228 = vadd.f32 0.0, %v5227
        %v5229 = vpop.f32.mrb[0].mxu0
        %5230 = vmatprep.mubr.bf16.mxu0 0
        %5231 = vmatmul.mubr.bf16.gmra.mrb[0].mxu0 %v4734
        %v5232 = vpop.f32.mrb[0].mxu0
        %v5233 = vadd.f32 0.0, %v5232
        %v5234 = vpop.f32.mrb[0].mxu0
        %v5235 = vpop.f32.mrb[0].mxu0
        %v5236 = vadd.f32 0.0, %v5235
        %v5237 = vpop.f32.mrb[0].mxu0
        %5238 = vmatprep.mubr.bf16.mxu0 0
        %5239 = vmatmul.mubr.bf16.gmra.mrb[0].mxu0 %v4735
        %v5240 = vpop.f32.mrb[0].mxu0
        %v5241 = vadd.f32 0.0, %v5240
        %v5242 = vpop.f32.mrb[0].mxu0
        %v5243 = vpop.f32.mrb[0].mxu0
        %v5244 = vadd.f32 0.0, %v5243
        %v5245 = vpop.f32.mrb[0].mxu0
        %5246 = vmatprep.mubr.bf16.mxu0 0
        %5247 = vmatmul.mubr.bf16.gmra.mrb[0].mxu0 %v4736
        %v5248 = vpop.f32.mrb[0].mxu0
        %v5249 = vadd.f32 0.0, %v5248
        %v5250 = vpop.f32.mrb[0].mxu0
        %v5251 = vpop.f32.mrb[0].mxu0
        %v5252 = vadd.f32 0.0, %v5251
        %v5253 = vpop.f32.mrb[0].mxu0
        %5254 = vmatprep.mubr.bf16.mxu0 0
        %5255 = vmatmul.mubr.bf16.gmra.mrb[0].mxu0 %v4737
        %v5256 = vpop.f32.mrb[0].mxu0
        %v5257 = vadd.f32 0.0, %v5256
        %v5258 = vpop.f32.mrb[0].mxu0
        %v5259 = vpop.f32.mrb[0].mxu0
        %v5260 = vadd.f32 0.0, %v5259
        %v5261 = vpop.f32.mrb[0].mxu0
        %5262 = vmatprep.mubr.bf16.mxu0 0
        %5263 = vmatmul.mubr.bf16.gmra.mrb[0].mxu0 %v4738
        %v5264 = vpop.f32.mrb[0].mxu0
        %v5265 = vadd.f32 0.0, %v5264
        %v5266 = vpop.f32.mrb[0].mxu0
        %v5267 = vpop.f32.mrb[0].mxu0
        %v5268 = vadd.f32 0.0, %v5267
        %v5269 = vpop.f32.mrb[0].mxu0
        %5270 = vmatprep.mubr.bf16.mxu0 0
        %5271 = vmatmul.mubr.bf16.gmra.mrb[0].mxu0 %v4739
        %v5272 = vpop.f32.mrb[0].mxu0
        %v5273 = vadd.f32 0.0, %v5272
        %v5274 = vpop.f32.mrb[0].mxu0
        %v5275 = vpop.f32.mrb[0].mxu0
        %v5276 = vadd.f32 0.0, %v5275
        %v5277 = vpop.f32.mrb[0].mxu0
        %5278 = vmatprep.mubr.bf16.mxu0 0
        %5279 = vmatmul.mubr.bf16.gmra.mrb[0].mxu0 %v4740
        %v5280 = vpop.f32.mrb[0].mxu0
        %v5281 = vadd.f32 0.0, %v5280
        %v5282 = vpop.f32.mrb[0].mxu0
        %v5283 = vpop.f32.mrb[0].mxu0
        %v5284 = vadd.f32 0.0, %v5283
        %v5285 = vpop.f32.mrb[0].mxu0
        %5286 = vmatprep.mubr.bf16.mxu0 0
        %5287 = vmatmul.mubr.bf16.gmra.mrb[0].mxu0 %v4741
        %v5288 = vpop.f32.mrb[0].mxu0
        %v5289 = vadd.f32 0.0, %v5288
        %v5290 = vpop.f32.mrb[0].mxu0
        %v5291 = vpop.f32.mrb[0].mxu0
        %v5292 = vadd.f32 0.0, %v5291
        %v5293 = vpop.f32.mrb[0].mxu0
        %5294 = vmatprep.mubr.bf16.mxu0 0
        %5295 = vmatmul.mubr.bf16.gmra.mrb[0].mxu0 %v4742
        %v5296 = vpop.f32.mrb[0].mxu0
        %v5297 = vadd.f32 0.0, %v5296
        %v5298 = vpop.f32.mrb[0].mxu0
        %v5299 = vpop.f32.mrb[0].mxu0
        %v5300 = vadd.f32 0.0, %v5299
        %v5301 = vpop.f32.mrb[0].mxu0
        %5302 = vmatprep.mubr.bf16.mxu0 0
        %5303 = vmatmul.mubr.bf16.gmra.mrb[0].mxu0 %v4743
        %v5304 = vpop.f32.mrb[0].mxu0
        %v5305 = vadd.f32 0.0, %v5304
        %v5306 = vpop.f32.mrb[0].mxu0
        %v5307 = vpop.f32.mrb[0].mxu0
        %v5308 = vadd.f32 0.0, %v5307
        %v5309 = vpop.f32.mrb[0].mxu0
        %5310 = vmatprep.mubr.bf16.mxu0 0
        %5311 = vmatmul.mubr.bf16.gmra.mrb[0].mxu0 %v4744
        %v5312 = vpop.f32.mrb[0].mxu0
        %v5313 = vadd.f32 0.0, %v5312
        %v5314 = vpop.f32.mrb[0].mxu0
        %v5315 = vpop.f32.mrb[0].mxu0
        %v5316 = vadd.f32 0.0, %v5315
        %v5317 = vpop.f32.mrb[0].mxu0
        %5318 = vmatprep.mubr.bf16.mxu0 0
        %5319 = vmatmul.mubr.bf16.gmra.mrb[0].mxu0 %v4745
        %v5320 = vpop.f32.mrb[0].mxu0
        %v5321 = vadd.f32 0.0, %v5320
        %v5322 = vpop.f32.mrb[0].mxu0
        %v5323 = vpop.f32.mrb[0].mxu0
        %v5324 = vadd.f32 0.0, %v5323
        %v5325 = vpop.f32.mrb[0].mxu0
        %5326 = vmatprep.mubr.bf16.mxu0 0
        %5327 = vmatmul.mubr.bf16.gmra.mrb[0].mxu0 %v4746
        %v5328 = vpop.f32.mrb[0].mxu0
        %v5329 = vadd.f32 0.0, %v5328
        %v5330 = vpop.f32.mrb[0].mxu0
        %v5331 = vpop.f32.mrb[0].mxu0
        %v5332 = vadd.f32 0.0, %v5331
        %v5333 = vpop.f32.mrb[0].mxu0
        %5334 = vmatprep.mubr.bf16.mxu0 0
        %5335 = vmatmul.mubr.bf16.gmra.mrb[0].mxu0 %v4747
        %v5336 = vpop.f32.mrb[0].mxu0
        %v5337 = vadd.f32 0.0, %v5336
        %v5338 = vpop.f32.mrb[0].mxu0
        %v5339 = vpop.f32.mrb[0].mxu0
        %v5340 = vadd.f32 0.0, %v5339
        %v5341 = vpop.f32.mrb[0].mxu0
        %5342 = vmatprep.mubr.bf16.mxu0 0
        %5343 = vmatmul.mubr.bf16.gmra.mrb[0].mxu0 %v4748
        %v5344 = vpop.f32.mrb[0].mxu0
        %v5345 = vadd.f32 0.0, %v5344
        %v5346 = vpop.f32.mrb[0].mxu0
        %v5347 = vpop.f32.mrb[0].mxu0
        %v5348 = vadd.f32 0.0, %v5347
        %v5349 = vpop.f32.mrb[0].mxu0
        %5350 = vmatprep.mubr.bf16.mxu0 0
        %5351 = vmatmul.mubr.bf16.gmra.mrb[0].mxu0 %v4749
        %v5352 = vpop.f32.mrb[0].mxu0
        %v5353 = vadd.f32 0.0, %v5352
        %v5354 = vpop.f32.mrb[0].mxu0
        %v5355 = vpop.f32.mrb[0].mxu0
        %v5356 = vadd.f32 0.0, %v5355
        %v5357 = vpop.f32.mrb[0].mxu0
        %5358 = vdwg.mxu0
        %v5359 = vpack.c.bf16 %v4852, %v4849
        %v5360 = vpack.c.bf16 %v4860, %v4857
        %v5361 = vpack.c.bf16 %v4868, %v4865
        %v5362 = vpack.c.bf16 %v4876, %v4873
        %v5363 = vpack.c.bf16 %v4884, %v4881
        %v5364 = vpack.c.bf16 %v4892, %v4889
        %v5365 = vpack.c.bf16 %v4900, %v4897
        %v5366 = vpack.c.bf16 %v4908, %v4905
        %v5367 = vpack.c.bf16 %v4916, %v4913
        %v5368 = vpack.c.bf16 %v4924, %v4921
        %v5369 = vpack.c.bf16 %v4932, %v4929
        %v5370 = vpack.c.bf16 %v4940, %v4937
        %v5371 = vpack.c.bf16 %v4948, %v4945
        %v5372 = vpack.c.bf16 %v4956, %v4953
        %v5373 = vpack.c.bf16 %v4964, %v4961
        %v5374 = vpack.c.bf16 %v4972, %v4969
        %v5375 = vpack.c.bf16 %v4980, %v4977
        %v5376 = vpack.c.bf16 %v4988, %v4985
        %v5377 = vpack.c.bf16 %v4996, %v4993
        %v5378 = vpack.c.bf16 %v5004, %v5001
        %v5379 = vpack.c.bf16 %v5012, %v5009
        %v5380 = vpack.c.bf16 %v5020, %v5017
        %v5381 = vpack.c.bf16 %v5028, %v5025
        %v5382 = vpack.c.bf16 %v5036, %v5033
        %v5383 = vpack.c.bf16 %v5044, %v5041
        %v5384 = vpack.c.bf16 %v5052, %v5049
        %v5385 = vpack.c.bf16 %v5060, %v5057
        %v5386 = vpack.c.bf16 %v5068, %v5065
        %v5387 = vpack.c.bf16 %v5076, %v5073
        %v5388 = vpack.c.bf16 %v5084, %v5081
        %v5389 = vpack.c.bf16 %v5092, %v5089
        %v5390 = vpack.c.bf16 %v5100, %v5097
        %v5391 = vpack.c.bf16 %v5108, %v5105
        %v5392 = vpack.c.bf16 %v5116, %v5113
        %v5393 = vpack.c.bf16 %v5124, %v5121
        %v5394 = vpack.c.bf16 %v5132, %v5129
        %v5395 = vpack.c.bf16 %v5140, %v5137
        %v5396 = vpack.c.bf16 %v5148, %v5145
        %v5397 = vpack.c.bf16 %v5156, %v5153
        %v5398 = vpack.c.bf16 %v5164, %v5161
        %v5399 = vpack.c.bf16 %v5172, %v5169
        %v5400 = vpack.c.bf16 %v5180, %v5177
        %v5401 = vpack.c.bf16 %v5188, %v5185
        %v5402 = vpack.c.bf16 %v5196, %v5193
        %v5403 = vpack.c.bf16 %v5204, %v5201
        %v5404 = vpack.c.bf16 %v5212, %v5209
        %v5405 = vpack.c.bf16 %v5220, %v5217
        %v5406 = vpack.c.bf16 %v5228, %v5225
        %v5407 = vpack.c.bf16 %v5236, %v5233
        %v5408 = vpack.c.bf16 %v5244, %v5241
        %v5409 = vpack.c.bf16 %v5252, %v5249
        %v5410 = vpack.c.bf16 %v5260, %v5257
        %v5411 = vpack.c.bf16 %v5268, %v5265
        %v5412 = vpack.c.bf16 %v5276, %v5273
        %v5413 = vpack.c.bf16 %v5284, %v5281
        %v5414 = vpack.c.bf16 %v5292, %v5289
        %v5415 = vpack.c.bf16 %v5300, %v5297
        %v5416 = vpack.c.bf16 %v5308, %v5305
        %v5417 = vpack.c.bf16 %v5316, %v5313
        %v5418 = vpack.c.bf16 %v5324, %v5321
        %v5419 = vpack.c.bf16 %v5332, %v5329
        %v5420 = vpack.c.bf16 %v5340, %v5337
        %v5421 = vpack.c.bf16 %v5348, %v5345
        %v5422 = vpack.c.bf16 %v5356, %v5353
        %v5423 = vld [vmem:[%s6] sm:$0x1]
        %v5425 = vpack.i.b16 %v5423, %v5423
        %v5427 = vlaneseq
        %v5428 = vshrl.u32 %v5427, 7
        %v5429 = vsub.s32 0, %v5428
        %v5430 = vrot.slane %v5425, %v5429
        %v5431 = vadd.bf16 %v5359, %v5430
        %v5432 = vadd.bf16 %v5360, %v5430
        %v5433 = vadd.bf16 %v5361, %v5430
        %v5434 = vadd.bf16 %v5362, %v5430
        %v5435 = vadd.bf16 %v5363, %v5430
        %v5436 = vadd.bf16 %v5364, %v5430
        %v5437 = vadd.bf16 %v5365, %v5430
        %v5438 = vadd.bf16 %v5366, %v5430
        %v5439 = vadd.bf16 %v5367, %v5430
        %v5440 = vadd.bf16 %v5368, %v5430
        %v5441 = vadd.bf16 %v5369, %v5430
        %v5442 = vadd.bf16 %v5370, %v5430
        %v5443 = vadd.bf16 %v5371, %v5430
        %v5444 = vadd.bf16 %v5372, %v5430
        %v5445 = vadd.bf16 %v5373, %v5430
        %v5446 = vadd.bf16 %v5374, %v5430
        %v5447 = vadd.bf16 %v5375, %v5430
        %v5448 = vadd.bf16 %v5376, %v5430
        %v5449 = vadd.bf16 %v5377, %v5430
        %v5450 = vadd.bf16 %v5378, %v5430
        %v5451 = vadd.bf16 %v5379, %v5430
        %v5452 = vadd.bf16 %v5380, %v5430
        %v5453 = vadd.bf16 %v5381, %v5430
        %v5454 = vadd.bf16 %v5382, %v5430
        %v5455 = vadd.bf16 %v5383, %v5430
        %v5456 = vadd.bf16 %v5384, %v5430
        %v5457 = vadd.bf16 %v5385, %v5430
        %v5458 = vadd.bf16 %v5386, %v5430
        %v5459 = vadd.bf16 %v5387, %v5430
        %v5460 = vadd.bf16 %v5388, %v5430
        %v5461 = vadd.bf16 %v5389, %v5430
        %v5462 = vadd.bf16 %v5390, %v5430
        %v5463 = vadd.bf16 %v5391, %v5430
        %v5464 = vadd.bf16 %v5392, %v5430
        %v5465 = vadd.bf16 %v5393, %v5430
        %v5466 = vadd.bf16 %v5394, %v5430
        %v5467 = vadd.bf16 %v5395, %v5430
        %v5468 = vadd.bf16 %v5396, %v5430
        %v5469 = vadd.bf16 %v5397, %v5430
        %v5470 = vadd.bf16 %v5398, %v5430
        %v5471 = vadd.bf16 %v5399, %v5430
        %v5472 = vadd.bf16 %v5400, %v5430
        %v5473 = vadd.bf16 %v5401, %v5430
        %v5474 = vadd.bf16 %v5402, %v5430
        %v5475 = vadd.bf16 %v5403, %v5430
        %v5476 = vadd.bf16 %v5404, %v5430
        %v5477 = vadd.bf16 %v5405, %v5430
        %v5478 = vadd.bf16 %v5406, %v5430
        %v5479 = vadd.bf16 %v5407, %v5430
        %v5480 = vadd.bf16 %v5408, %v5430
        %v5481 = vadd.bf16 %v5409, %v5430
        %v5482 = vadd.bf16 %v5410, %v5430
        %v5483 = vadd.bf16 %v5411, %v5430
        %v5484 = vadd.bf16 %v5412, %v5430
        %v5485 = vadd.bf16 %v5413, %v5430
        %v5486 = vadd.bf16 %v5414, %v5430
        %v5487 = vadd.bf16 %v5415, %v5430
        %v5488 = vadd.bf16 %v5416, %v5430
        %v5489 = vadd.bf16 %v5417, %v5430
        %v5490 = vadd.bf16 %v5418, %v5430
        %v5491 = vadd.bf16 %v5419, %v5430
        %v5492 = vadd.bf16 %v5420, %v5430
        %v5493 = vadd.bf16 %v5421, %v5430
        %v5494 = vadd.bf16 %v5422, %v5430
        %v5495 = vmax.bf16 %v5431, 0
        %v5496 = vmax.bf16 %v5432, 0
        %v5497 = vmax.bf16 %v5433, 0
        %v5498 = vmax.bf16 %v5434, 0
        %v5499 = vmax.bf16 %v5435, 0
        %v5500 = vmax.bf16 %v5436, 0
        %v5501 = vmax.bf16 %v5437, 0
        %v5502 = vmax.bf16 %v5438, 0
        %v5503 = vmax.bf16 %v5439, 0
        %v5504 = vmax.bf16 %v5440, 0
        %v5505 = vmax.bf16 %v5441, 0
        %v5506 = vmax.bf16 %v5442, 0
        %v5507 = vmax.bf16 %v5443, 0
        %v5508 = vmax.bf16 %v5444, 0
        %v5509 = vmax.bf16 %v5445, 0
        %v5510 = vmax.bf16 %v5446, 0
        %v5511 = vmax.bf16 %v5447, 0
        %v5512 = vmax.bf16 %v5448, 0
        %v5513 = vmax.bf16 %v5449, 0
        %v5514 = vmax.bf16 %v5450, 0
        %v5515 = vmax.bf16 %v5451, 0
        %v5516 = vmax.bf16 %v5452, 0
        %v5517 = vmax.bf16 %v5453, 0
        %v5518 = vmax.bf16 %v5454, 0
        %v5519 = vmax.bf16 %v5455, 0
        %v5520 = vmax.bf16 %v5456, 0
        %v5521 = vmax.bf16 %v5457, 0
        %v5522 = vmax.bf16 %v5458, 0
        %v5523 = vmax.bf16 %v5459, 0
        %v5524 = vmax.bf16 %v5460, 0
        %v5525 = vmax.bf16 %v5461, 0
        %v5526 = vmax.bf16 %v5462, 0
        %v5527 = vmax.bf16 %v5463, 0
        %v5528 = vmax.bf16 %v5464, 0
        %v5529 = vmax.bf16 %v5465, 0
        %v5530 = vmax.bf16 %v5466, 0
        %v5531 = vmax.bf16 %v5467, 0
        %v5532 = vmax.bf16 %v5468, 0
        %v5533 = vmax.bf16 %v5469, 0
        %v5534 = vmax.bf16 %v5470, 0
        %v5535 = vmax.bf16 %v5471, 0
        %v5536 = vmax.bf16 %v5472, 0
        %v5537 = vmax.bf16 %v5473, 0
        %v5538 = vmax.bf16 %v5474, 0
        %v5539 = vmax.bf16 %v5475, 0
        %v5540 = vmax.bf16 %v5476, 0
        %v5541 = vmax.bf16 %v5477, 0
        %v5542 = vmax.bf16 %v5478, 0
        %v5543 = vmax.bf16 %v5479, 0
        %v5544 = vmax.bf16 %v5480, 0
        %v5545 = vmax.bf16 %v5481, 0
        %v5546 = vmax.bf16 %v5482, 0
        %v5547 = vmax.bf16 %v5483, 0
        %v5548 = vmax.bf16 %v5484, 0
        %v5549 = vmax.bf16 %v5485, 0
        %v5550 = vmax.bf16 %v5486, 0
        %v5551 = vmax.bf16 %v5487, 0
        %v5552 = vmax.bf16 %v5488, 0
        %v5553 = vmax.bf16 %v5489, 0
        %v5554 = vmax.bf16 %v5490, 0
        %v5555 = vmax.bf16 %v5491, 0
        %v5556 = vmax.bf16 %v5492, 0
        %v5557 = vmax.bf16 %v5493, 0
        %v5558 = vmax.bf16 %v5494, 0
        %v5559 = vld [vmem:[#allocation2] sm:$0x3]
        %v5560 = vmax.bf16 %v5495, %v5496
        %v5561 = vmax.bf16 %v5560, %v5497
        %v5562 = vmax.bf16 %v5561, %v5498
        %v5563 = vmax.bf16 %v5562, %v5499
        %v5564 = vmax.bf16 %v5563, %v5500
        %v5565 = vmax.bf16 %v5564, %v5501
        %v5566 = vmax.bf16 %v5565, %v5502
        %v5567 = vmax.bf16 %v5566, %v5503
        %v5568 = vmax.bf16 %v5567, %v5504
        %v5569 = vmax.bf16 %v5568, %v5505
        %v5570 = vmax.bf16 %v5569, %v5506
        %v5571 = vmax.bf16 %v5570, %v5507
        %v5572 = vmax.bf16 %v5571, %v5508
        %v5573 = vmax.bf16 %v5572, %v5509
        %v5574 = vmax.bf16 %v5573, %v5510
        %v5575 = vunpack.i.l.bf16 %v5574
        %v5576 = vunpack.i.h.bf16 %v5574
        %v5577 = vmax.f32 %v5575, %v5576
        %v5578 = vrot.slane %v5577, 4
        %v5579 = vmax.f32 %v5577, %v5578
        %v5580 = vrot.slane %v5579, 2
        %v5581 = vmax.f32 %v5579, %v5580
        %v5582 = vrot.slane %v5581, 1
        %v5583 = vmax.f32 %v5581, %v5582
        %v5584 = vpack.i.bf16 %v5583, %v5583
        %v5585 = vmax.bf16 %v5511, %v5512
        %v5586 = vmax.bf16 %v5585, %v5513
        %v5587 = vmax.bf16 %v5586, %v5514
        %v5588 = vmax.bf16 %v5587, %v5515
        %v5589 = vmax.bf16 %v5588, %v5516
        %v5590 = vmax.bf16 %v5589, %v5517
        %v5591 = vmax.bf16 %v5590, %v5518
        %v5592 = vmax.bf16 %v5591, %v5519
        %v5593 = vmax.bf16 %v5592, %v5520
        %v5594 = vmax.bf16 %v5593, %v5521
        %v5595 = vmax.bf16 %v5594, %v5522
        %v5596 = vmax.bf16 %v5595, %v5523
        %v5597 = vmax.bf16 %v5596, %v5524
        %v5598 = vmax.bf16 %v5597, %v5525
        %v5599 = vmax.bf16 %v5598, %v5526
        %v5600 = vunpack.i.l.bf16 %v5599
        %v5601 = vunpack.i.h.bf16 %v5599
        %v5602 = vmax.f32 %v5600, %v5601
        %v5603 = vrot.slane %v5602, 4
        %v5604 = vmax.f32 %v5602, %v5603
        %v5605 = vrot.slane %v5604, 2
        %v5606 = vmax.f32 %v5604, %v5605
        %v5607 = vrot.slane %v5606, 1
        %v5608 = vmax.f32 %v5606, %v5607
        %v5609 = vpack.i.bf16 %v5608, %v5608
        %v5610 = vmax.bf16 %v5527, %v5528
        %v5611 = vmax.bf16 %v5610, %v5529
        %v5612 = vmax.bf16 %v5611, %v5530
        %v5613 = vmax.bf16 %v5612, %v5531
        %v5614 = vmax.bf16 %v5613, %v5532
        %v5615 = vmax.bf16 %v5614, %v5533
        %v5616 = vmax.bf16 %v5615, %v5534
        %v5617 = vmax.bf16 %v5616, %v5535
        %v5618 = vmax.bf16 %v5617, %v5536
        %v5619 = vmax.bf16 %v5618, %v5537
        %v5620 = vmax.bf16 %v5619, %v5538
        %v5621 = vmax.bf16 %v5620, %v5539
        %v5622 = vmax.bf16 %v5621, %v5540
        %v5623 = vmax.bf16 %v5622, %v5541
        %v5624 = vmax.bf16 %v5623, %v5542
        %v5625 = vunpack.i.l.bf16 %v5624
        %v5626 = vunpack.i.h.bf16 %v5624
        %v5627 = vmax.f32 %v5625, %v5626
        %v5628 = vrot.slane %v5627, 4
        %v5629 = vmax.f32 %v5627, %v5628
        %v5630 = vrot.slane %v5629, 2
        %v5631 = vmax.f32 %v5629, %v5630
        %v5632 = vrot.slane %v5631, 1
        %v5633 = vmax.f32 %v5631, %v5632
        %v5634 = vpack.i.bf16 %v5633, %v5633
        %v5635 = vmax.bf16 %v5543, %v5544
        %v5636 = vmax.bf16 %v5635, %v5545
        %v5637 = vmax.bf16 %v5636, %v5546
        %v5638 = vmax.bf16 %v5637, %v5547
        %v5639 = vmax.bf16 %v5638, %v5548
        %v5640 = vmax.bf16 %v5639, %v5549
        %v5641 = vmax.bf16 %v5640, %v5550
        %v5642 = vmax.bf16 %v5641, %v5551
        %v5643 = vmax.bf16 %v5642, %v5552
        %v5644 = vmax.bf16 %v5643, %v5553
        %v5645 = vmax.bf16 %v5644, %v5554
        %v5646 = vmax.bf16 %v5645, %v5555
        %v5647 = vmax.bf16 %v5646, %v5556
        %v5648 = vmax.bf16 %v5647, %v5557
        %v5649 = vmax.bf16 %v5648, %v5558
        %v5650 = vunpack.i.l.bf16 %v5649
        %v5651 = vunpack.i.h.bf16 %v5649
        %v5652 = vmax.f32 %v5650, %v5651
        %v5653 = vrot.slane %v5652, 4
        %v5654 = vmax.f32 %v5652, %v5653
        %v5655 = vrot.slane %v5654, 2
        %v5656 = vmax.f32 %v5654, %v5655
        %v5657 = vrot.slane %v5656, 1
        %v5658 = vmax.f32 %v5656, %v5657
        %v5659 = vpack.i.bf16 %v5658, %v5658
        %v5664 = vunpack.c.l.b16 %v5584
        %v5665 = vunpack.c.l.b16 %v5609
        %v5666 = vunpack.c.l.b16 %v5634
        %v5667 = vunpack.c.l.b16 %v5659
        %v5668 = vpack.c.b16 %v5664, %v5664
        %v5669 = vpack.c.b16 %v5665, %v5665
        %v5670 = vpack.c.b16 %v5666, %v5666
        %v5671 = vpack.c.b16 %v5667, %v5667
        %v5672 = vunpack.c.l.b16 %v5668
        %v5673 = vunpack.c.l.b16 %v5669
        %v5674 = vunpack.c.l.b16 %v5670
        %v5675 = vunpack.c.l.b16 %v5671
        %vm5676 = vcmask 1041409
        %v5677 = vsel %vm5676, %v5673, %v5672
        %vm5678 = vcmask 1042434
        %v5679 = vsel %vm5678, %v5674, %v5677
        %vm5680 = vcmask 1043459
        %v5681 = vsel %vm5680, %v5675, %v5679
        %v5682 = vpack.c.b16 %v5681, %v5681
        %v5684 = vmax.bf16 %v5559, %v5682
        %5685 = vst [vmem:[#allocation2] sm:$0x3] %v5684
        %p5686 = scmp.eq.s32.totalorder %s29, 1
        // Predicated region
        $region115: #{transformation_net_forward.1} parent=105 // pred_check
          %p5687 = pneg %p5686
        $region116: #{transformation_net_forward.1} parent=105 // pred_check_branch
          %5689 = sbr.rel (%p5687) target = $region118
        $region117: #{transformation_net_forward.1} parent=105 // pred_region
          %v5690 = vld [vmem:[#allocation2] sm:$0xf]
          %v5691 = vld [vmem:[%s7] sm:$0xff]
          %v5692 = vld [vmem:[%s7 + $0x8] sm:$0xff]
          %v5693 = vld [vmem:[%s7 + $0x10] sm:$0xff]
          %v5694 = vld [vmem:[%s7 + $0x18] sm:$0xff]
          %v5695 = vld [vmem:[%s7 + $0x20] sm:$0xff]
          %v5696 = vld [vmem:[%s7 + $0x28] sm:$0xff]
          %v5697 = vld [vmem:[%s7 + $0x30] sm:$0xff]
          %v5698 = vld [vmem:[%s7 + $0x38] sm:$0xff]
          %v5699 = vld [vmem:[%s7 + $0x40] sm:$0xff]
          %v5700 = vld [vmem:[%s7 + $0x48] sm:$0xff]
          %v5701 = vld [vmem:[%s7 + $0x50] sm:$0xff]
          %v5702 = vld [vmem:[%s7 + $0x58] sm:$0xff]
          %v5703 = vld [vmem:[%s7 + $0x60] sm:$0xff]
          %v5704 = vld [vmem:[%s7 + $0x68] sm:$0xff]
          %v5705 = vld [vmem:[%s7 + $0x70] sm:$0xff]
          %v5706 = vld [vmem:[%s7 + $0x78] sm:$0xff]
          %v5707 = vld [vmem:[%s7 + $0x80] sm:$0xff]
          %v5708 = vld [vmem:[%s7 + $0x88] sm:$0xff]
          %v5709 = vld [vmem:[%s7 + $0x90] sm:$0xff]
          %v5710 = vld [vmem:[%s7 + $0x98] sm:$0xff]
          %v5711 = vld [vmem:[%s7 + $0xa0] sm:$0xff]
          %v5712 = vld [vmem:[%s7 + $0xa8] sm:$0xff]
          %v5713 = vld [vmem:[%s7 + $0xb0] sm:$0xff]
          %v5714 = vld [vmem:[%s7 + $0xb8] sm:$0xff]
          %v5715 = vld [vmem:[%s7 + $0xc0] sm:$0xff]
          %v5716 = vld [vmem:[%s7 + $0xc8] sm:$0xff]
          %v5717 = vld [vmem:[%s7 + $0xd0] sm:$0xff]
          %v5718 = vld [vmem:[%s7 + $0xd8] sm:$0xff]
          %v5719 = vld [vmem:[%s7 + $0xe0] sm:$0xff]
          %v5720 = vld [vmem:[%s7 + $0xe8] sm:$0xff]
          %v5721 = vld [vmem:[%s7 + $0xf0] sm:$0xff]
          %v5722 = vld [vmem:[%s7 + $0xf8] sm:$0xff]
          %v5723 = vld [vmem:[%s8] sm:$0xf]
          %v5725 = vlaneseq
          %v5726 = vshrl.u32 %v5725, 7
          %v5727 = vsub.s32 0, %v5726
          %v5728 = vrot.slane %v5723, %v5727
          %v5729 = vlaneseq
          %v5730 = vshrl.u32 %v5729, 7
          %v5731 = vsub.s32 1, %v5730
          %v5732 = vrot.slane %v5723, %v5731
          %v5733 = vlaneseq
          %v5734 = vshrl.u32 %v5733, 7
          %v5735 = vsub.s32 2, %v5734
          %v5736 = vrot.slane %v5723, %v5735
          %v5737 = vlaneseq
          %v5738 = vshrl.u32 %v5737, 7
          %v5739 = vsub.s32 3, %v5738
          %v5740 = vrot.slane %v5723, %v5739
          %v5777 = vunpack.c.l.b16 %v5691
          %v5778 = vunpack.c.h.b16 %v5691
          %v5779 = vunpack.c.l.b16 %v5692
          %v5780 = vunpack.c.h.b16 %v5692
          %v5781 = vunpack.c.l.b16 %v5693
          %v5782 = vunpack.c.h.b16 %v5693
          %v5783 = vunpack.c.l.b16 %v5694
          %v5784 = vunpack.c.h.b16 %v5694
          %v5785 = vunpack.c.l.b16 %v5695
          %v5786 = vunpack.c.h.b16 %v5695
          %v5787 = vunpack.c.l.b16 %v5696
          %v5788 = vunpack.c.h.b16 %v5696
          %v5789 = vunpack.c.l.b16 %v5697
          %v5790 = vunpack.c.h.b16 %v5697
          %v5791 = vunpack.c.l.b16 %v5698
          %v5792 = vunpack.c.h.b16 %v5698
          %v5793 = vunpack.c.l.b16 %v5699
          %v5794 = vunpack.c.h.b16 %v5699
          %v5795 = vunpack.c.l.b16 %v5700
          %v5796 = vunpack.c.h.b16 %v5700
          %v5797 = vunpack.c.l.b16 %v5701
          %v5798 = vunpack.c.h.b16 %v5701
          %v5799 = vunpack.c.l.b16 %v5702
          %v5800 = vunpack.c.h.b16 %v5702
          %v5801 = vunpack.c.l.b16 %v5703
          %v5802 = vunpack.c.h.b16 %v5703
          %v5803 = vunpack.c.l.b16 %v5704
          %v5804 = vunpack.c.h.b16 %v5704
          %v5805 = vunpack.c.l.b16 %v5705
          %v5806 = vunpack.c.h.b16 %v5705
          %v5807 = vunpack.c.l.b16 %v5706
          %v5808 = vunpack.c.h.b16 %v5706
          %v5809 = vunpack.c.l.b16 %v5707
          %v5810 = vunpack.c.h.b16 %v5707
          %v5811 = vunpack.c.l.b16 %v5708
          %v5812 = vunpack.c.h.b16 %v5708
          %v5813 = vunpack.c.l.b16 %v5709
          %v5814 = vunpack.c.h.b16 %v5709
          %v5815 = vunpack.c.l.b16 %v5710
          %v5816 = vunpack.c.h.b16 %v5710
          %v5817 = vunpack.c.l.b16 %v5711
          %v5818 = vunpack.c.h.b16 %v5711
          %v5819 = vunpack.c.l.b16 %v5712
          %v5820 = vunpack.c.h.b16 %v5712
          %v5821 = vunpack.c.l.b16 %v5713
          %v5822 = vunpack.c.h.b16 %v5713
          %v5823 = vunpack.c.l.b16 %v5714
          %v5824 = vunpack.c.h.b16 %v5714
          %v5825 = vunpack.c.l.b16 %v5715
          %v5826 = vunpack.c.h.b16 %v5715
          %v5827 = vunpack.c.l.b16 %v5716
          %v5828 = vunpack.c.h.b16 %v5716
          %v5829 = vunpack.c.l.b16 %v5717
          %v5830 = vunpack.c.h.b16 %v5717
          %v5831 = vunpack.c.l.b16 %v5718
          %v5832 = vunpack.c.h.b16 %v5718
          %v5833 = vunpack.c.l.b16 %v5719
          %v5834 = vunpack.c.h.b16 %v5719
          %v5835 = vunpack.c.l.b16 %v5720
          %v5836 = vunpack.c.h.b16 %v5720
          %v5837 = vunpack.c.l.b16 %v5721
          %v5838 = vunpack.c.h.b16 %v5721
          %v5839 = vunpack.c.l.b16 %v5722
          %v5840 = vunpack.c.h.b16 %v5722
          %v5841 = vpack.c.b16 %v5781, %v5777
          %v5842 = vpack.c.b16 %v5782, %v5778
          %v5843 = vpack.c.b16 %v5783, %v5779
          %v5844 = vpack.c.b16 %v5784, %v5780
          %v5845 = vpack.c.b16 %v5789, %v5785
          %v5846 = vpack.c.b16 %v5790, %v5786
          %v5847 = vpack.c.b16 %v5791, %v5787
          %v5848 = vpack.c.b16 %v5792, %v5788
          %v5849 = vpack.c.b16 %v5797, %v5793
          %v5850 = vpack.c.b16 %v5798, %v5794
          %v5851 = vpack.c.b16 %v5799, %v5795
          %v5852 = vpack.c.b16 %v5800, %v5796
          %v5853 = vpack.c.b16 %v5805, %v5801
          %v5854 = vpack.c.b16 %v5806, %v5802
          %v5855 = vpack.c.b16 %v5807, %v5803
          %v5856 = vpack.c.b16 %v5808, %v5804
          %v5857 = vpack.c.b16 %v5813, %v5809
          %v5858 = vpack.c.b16 %v5814, %v5810
          %v5859 = vpack.c.b16 %v5815, %v5811
          %v5860 = vpack.c.b16 %v5816, %v5812
          %v5861 = vpack.c.b16 %v5821, %v5817
          %v5862 = vpack.c.b16 %v5822, %v5818
          %v5863 = vpack.c.b16 %v5823, %v5819
          %v5864 = vpack.c.b16 %v5824, %v5820
          %v5865 = vpack.c.b16 %v5829, %v5825
          %v5866 = vpack.c.b16 %v5830, %v5826
          %v5867 = vpack.c.b16 %v5831, %v5827
          %v5868 = vpack.c.b16 %v5832, %v5828
          %v5869 = vpack.c.b16 %v5837, %v5833
          %v5870 = vpack.c.b16 %v5838, %v5834
          %v5871 = vpack.c.b16 %v5839, %v5835
          %v5872 = vpack.c.b16 %v5840, %v5836
          %5905 = vmatprep.subr.bf16.mxu0 %v5842
          %5906 = vmatpush1.bf16.msra.mxu0 %v5841
          %5907 = vmatprep.subr.bf16.mxu0 %v5846
          %5908 = vmatpush1.bf16.msra.mxu0 %v5845
          %5909 = vmatprep.subr.bf16.mxu0 %v5850
          %5910 = vmatpush1.bf16.msra.mxu0 %v5849
          %5911 = vmatprep.subr.bf16.mxu0 %v5854
          %5912 = vmatpush1.bf16.msra.mxu0 %v5853
          %5913 = vmatprep.subr.bf16.mxu0 %v5858
          %5914 = vmatpush1.bf16.msra.mxu0 %v5857
          %5915 = vmatprep.subr.bf16.mxu0 %v5862
          %5916 = vmatpush1.bf16.msra.mxu0 %v5861
          %5917 = vmatprep.subr.bf16.mxu0 %v5866
          %5918 = vmatpush1.bf16.msra.mxu0 %v5865
          %5919 = vmatprep.subr.bf16.mxu0 %v5870
          %5920 = vmatpush1.bf16.msra.mxu0 %v5869
          %5921 = vmatprep.subr.bf16.mxu0 0
          %5922 = vmatpush1.bf16.msra.mxu0 0
          %5923 = vmatprep.subr.bf16.mxu0 0
          %5924 = vmatpush1.bf16.msra.mxu0 0
          %5925 = vmatprep.subr.bf16.mxu0 0
          %5926 = vmatpush1.bf16.msra.mxu0 0
          %5927 = vmatprep.subr.bf16.mxu0 0
          %5928 = vmatpush1.bf16.msra.mxu0 0
          %5929 = vmatprep.subr.bf16.mxu0 0
          %5930 = vmatpush1.bf16.msra.mxu0 0
          %5931 = vmatprep.subr.bf16.mxu0 0
          %5932 = vmatpush1.bf16.msra.mxu0 0
          %5933 = vmatprep.subr.bf16.mxu0 0
          %5934 = vmatpush1.bf16.msra.mxu0 0
          %5935 = vmatprep.subr.bf16.mxu0 0
          %5936 = vmatpush1.bf16.msra.mxu0 0
          %5937 = vmatprep.mubr.bf16.mxu0 0
          %5938 = vmatmul.mubr.bf16.gmra.mrb[0].mxu0 %v5690
          %v5939 = vpop.f32.mrb[0].mxu0
          %v5940 = vadd.f32 %v5728, %v5939
          %v5941 = vpop.f32.mrb[0].mxu0
          %v5942 = vadd.f32 %v5732, %v5941
          %v5943 = vpop.f32.mrb[0].mxu0
          %v5944 = vpop.f32.mrb[0].mxu0
          %5945 = vdwg.mxu0
          %5946 = vmatprep.subr.bf16.mxu0 %v5844
          %5947 = vmatpush1.bf16.msra.mxu0 %v5843
          %5948 = vmatprep.subr.bf16.mxu0 %v5848
          %5949 = vmatpush1.bf16.msra.mxu0 %v5847
          %5950 = vmatprep.subr.bf16.mxu0 %v5852
          %5951 = vmatpush1.bf16.msra.mxu0 %v5851
          %5952 = vmatprep.subr.bf16.mxu0 %v5856
          %5953 = vmatpush1.bf16.msra.mxu0 %v5855
          %5954 = vmatprep.subr.bf16.mxu0 %v5860
          %5955 = vmatpush1.bf16.msra.mxu0 %v5859
          %5956 = vmatprep.subr.bf16.mxu0 %v5864
          %5957 = vmatpush1.bf16.msra.mxu0 %v5863
          %5958 = vmatprep.subr.bf16.mxu0 %v5868
          %5959 = vmatpush1.bf16.msra.mxu0 %v5867
          %5960 = vmatprep.subr.bf16.mxu0 %v5872
          %5961 = vmatpush1.bf16.msra.mxu0 %v5871
          %5962 = vmatprep.subr.bf16.mxu0 0
          %5963 = vmatpush1.bf16.msra.mxu0 0
          %5964 = vmatprep.subr.bf16.mxu0 0
          %5965 = vmatpush1.bf16.msra.mxu0 0
          %5966 = vmatprep.subr.bf16.mxu0 0
          %5967 = vmatpush1.bf16.msra.mxu0 0
          %5968 = vmatprep.subr.bf16.mxu0 0
          %5969 = vmatpush1.bf16.msra.mxu0 0
          %5970 = vmatprep.subr.bf16.mxu0 0
          %5971 = vmatpush1.bf16.msra.mxu0 0
          %5972 = vmatprep.subr.bf16.mxu0 0
          %5973 = vmatpush1.bf16.msra.mxu0 0
          %5974 = vmatprep.subr.bf16.mxu0 0
          %5975 = vmatpush1.bf16.msra.mxu0 0
          %5976 = vmatprep.subr.bf16.mxu0 0
          %5977 = vmatpush1.bf16.msra.mxu0 0
          %5978 = vmatprep.mubr.bf16.mxu0 0
          %5979 = vmatmul.mubr.bf16.gmra.mrb[0].mxu0 %v5690
          %v5980 = vpop.f32.mrb[0].mxu0
          %v5981 = vadd.f32 %v5736, %v5980
          %v5982 = vpop.f32.mrb[0].mxu0
          %v5983 = vadd.f32 %v5740, %v5982
          %v5984 = vpop.f32.mrb[0].mxu0
          %v5985 = vpop.f32.mrb[0].mxu0
          %5986 = vdwg.mxu0
          %v5987 = vmax.f32 %v5940, 0.0
          %v5988 = vmax.f32 %v5942, 0.0
          %v5989 = vmax.f32 %v5981, 0.0
          %v5990 = vmax.f32 %v5983, 0.0
          %v5991 = vpack.c.bf16 %v5987, %v5987
          %v5992 = vpack.c.bf16 %v5988, %v5988
          %v5993 = vpack.c.bf16 %v5989, %v5989
          %v5994 = vpack.c.bf16 %v5990, %v5990
          %v5995 = vld [vmem:[%s9] sm:$0xff]
          %v5996 = vld [vmem:[%s9 + $0x8] sm:$0xff]
          %v5997 = vld [vmem:[%s9 + $0x10] sm:$0xff]
          %v5998 = vld [vmem:[%s9 + $0x18] sm:$0xff]
          %v5999 = vld [vmem:[%s9 + $0x20] sm:$0xff]
          %v6000 = vld [vmem:[%s9 + $0x28] sm:$0xff]
          %v6001 = vld [vmem:[%s9 + $0x30] sm:$0xff]
          %v6002 = vld [vmem:[%s9 + $0x38] sm:$0xff]
          %v6003 = vld [vmem:[%s9 + $0x40] sm:$0xff]
          %v6004 = vld [vmem:[%s9 + $0x48] sm:$0xff]
          %v6005 = vld [vmem:[%s9 + $0x50] sm:$0xff]
          %v6006 = vld [vmem:[%s9 + $0x58] sm:$0xff]
          %v6007 = vld [vmem:[%s9 + $0x60] sm:$0xff]
          %v6008 = vld [vmem:[%s9 + $0x68] sm:$0xff]
          %v6009 = vld [vmem:[%s9 + $0x70] sm:$0xff]
          %v6010 = vld [vmem:[%s9 + $0x78] sm:$0xff]
          %v6011 = vld [vmem:[%s9 + $0x80] sm:$0xff]
          %v6012 = vld [vmem:[%s9 + $0x88] sm:$0xff]
          %v6013 = vld [vmem:[%s9 + $0x90] sm:$0xff]
          %v6014 = vld [vmem:[%s9 + $0x98] sm:$0xff]
          %v6015 = vld [vmem:[%s9 + $0xa0] sm:$0xff]
          %v6016 = vld [vmem:[%s9 + $0xa8] sm:$0xff]
          %v6017 = vld [vmem:[%s9 + $0xb0] sm:$0xff]
          %v6018 = vld [vmem:[%s9 + $0xb8] sm:$0xff]
          %v6019 = vld [vmem:[%s9 + $0xc0] sm:$0xff]
          %v6020 = vld [vmem:[%s9 + $0xc8] sm:$0xff]
          %v6021 = vld [vmem:[%s9 + $0xd0] sm:$0xff]
          %v6022 = vld [vmem:[%s9 + $0xd8] sm:$0xff]
          %v6023 = vld [vmem:[%s9 + $0xe0] sm:$0xff]
          %v6024 = vld [vmem:[%s9 + $0xe8] sm:$0xff]
          %v6025 = vld [vmem:[%s9 + $0xf0] sm:$0xff]
          %v6026 = vld [vmem:[%s9 + $0xf8] sm:$0xff]
          %v6027 = vld [vmem:[%s9 + $0x100] sm:$0xff]
          %v6028 = vld [vmem:[%s9 + $0x108] sm:$0xff]
          %v6029 = vld [vmem:[%s9 + $0x110] sm:$0xff]
          %v6030 = vld [vmem:[%s9 + $0x118] sm:$0xff]
          %v6031 = vld [vmem:[%s9 + $0x120] sm:$0xff]
          %v6032 = vld [vmem:[%s9 + $0x128] sm:$0xff]
          %v6033 = vld [vmem:[%s9 + $0x130] sm:$0xff]
          %v6034 = vld [vmem:[%s9 + $0x138] sm:$0xff]
          %v6035 = vld [vmem:[%s9 + $0x140] sm:$0xff]
          %v6036 = vld [vmem:[%s9 + $0x148] sm:$0xff]
          %v6037 = vld [vmem:[%s9 + $0x150] sm:$0xff]
          %v6038 = vld [vmem:[%s9 + $0x158] sm:$0xff]
          %v6039 = vld [vmem:[%s9 + $0x160] sm:$0xff]
          %v6040 = vld [vmem:[%s9 + $0x168] sm:$0xff]
          %v6041 = vld [vmem:[%s9 + $0x170] sm:$0xff]
          %v6042 = vld [vmem:[%s9 + $0x178] sm:$0xff]
          %v6043 = vld [vmem:[%s9 + $0x180] sm:$0xff]
          %v6044 = vld [vmem:[%s9 + $0x188] sm:$0xff]
          %v6045 = vld [vmem:[%s9 + $0x190] sm:$0xff]
          %v6046 = vld [vmem:[%s9 + $0x198] sm:$0xff]
          %v6047 = vld [vmem:[%s9 + $0x1a0] sm:$0xff]
          %v6048 = vld [vmem:[%s9 + $0x1a8] sm:$0xff]
          %v6049 = vld [vmem:[%s9 + $0x1b0] sm:$0xff]
          %v6050 = vld [vmem:[%s9 + $0x1b8] sm:$0xff]
          %v6051 = vld [vmem:[%s9 + $0x1c0] sm:$0xff]
          %v6052 = vld [vmem:[%s9 + $0x1c8] sm:$0xff]
          %v6053 = vld [vmem:[%s9 + $0x1d0] sm:$0xff]
          %v6054 = vld [vmem:[%s9 + $0x1d8] sm:$0xff]
          %v6055 = vld [vmem:[%s9 + $0x1e0] sm:$0xff]
          %v6056 = vld [vmem:[%s9 + $0x1e8] sm:$0xff]
          %v6057 = vld [vmem:[%s9 + $0x1f0] sm:$0xff]
          %v6058 = vld [vmem:[%s9 + $0x1f8] sm:$0xff]
          %v6059 = vld [vmem:[%s10] sm:$0x3]
          %v6061 = vlaneseq
          %v6062 = vshrl.u32 %v6061, 7
          %v6063 = vsub.s32 0, %v6062
          %v6064 = vrot.slane %v6059, %v6063
          %v6065 = vlaneseq
          %v6066 = vshrl.u32 %v6065, 7
          %v6067 = vsub.s32 1, %v6066
          %v6068 = vrot.slane %v6059, %v6067
          %v6135 = vunpack.c.l.b16 %v5995
          %v6136 = vunpack.c.h.b16 %v5995
          %v6137 = vunpack.c.l.b16 %v5996
          %v6138 = vunpack.c.h.b16 %v5996
          %v6139 = vunpack.c.l.b16 %v5997
          %v6140 = vunpack.c.h.b16 %v5997
          %v6141 = vunpack.c.l.b16 %v5998
          %v6142 = vunpack.c.h.b16 %v5998
          %v6143 = vunpack.c.l.b16 %v5999
          %v6144 = vunpack.c.h.b16 %v5999
          %v6145 = vunpack.c.l.b16 %v6000
          %v6146 = vunpack.c.h.b16 %v6000
          %v6147 = vunpack.c.l.b16 %v6001
          %v6148 = vunpack.c.h.b16 %v6001
          %v6149 = vunpack.c.l.b16 %v6002
          %v6150 = vunpack.c.h.b16 %v6002
          %v6151 = vunpack.c.l.b16 %v6003
          %v6152 = vunpack.c.h.b16 %v6003
          %v6153 = vunpack.c.l.b16 %v6004
          %v6154 = vunpack.c.h.b16 %v6004
          %v6155 = vunpack.c.l.b16 %v6005
          %v6156 = vunpack.c.h.b16 %v6005
          %v6157 = vunpack.c.l.b16 %v6006
          %v6158 = vunpack.c.h.b16 %v6006
          %v6159 = vunpack.c.l.b16 %v6007
          %v6160 = vunpack.c.h.b16 %v6007
          %v6161 = vunpack.c.l.b16 %v6008
          %v6162 = vunpack.c.h.b16 %v6008
          %v6163 = vunpack.c.l.b16 %v6009
          %v6164 = vunpack.c.h.b16 %v6009
          %v6165 = vunpack.c.l.b16 %v6010
          %v6166 = vunpack.c.h.b16 %v6010
          %v6167 = vunpack.c.l.b16 %v6011
          %v6168 = vunpack.c.h.b16 %v6011
          %v6169 = vunpack.c.l.b16 %v6012
          %v6170 = vunpack.c.h.b16 %v6012
          %v6171 = vunpack.c.l.b16 %v6013
          %v6172 = vunpack.c.h.b16 %v6013
          %v6173 = vunpack.c.l.b16 %v6014
          %v6174 = vunpack.c.h.b16 %v6014
          %v6175 = vunpack.c.l.b16 %v6015
          %v6176 = vunpack.c.h.b16 %v6015
          %v6177 = vunpack.c.l.b16 %v6016
          %v6178 = vunpack.c.h.b16 %v6016
          %v6179 = vunpack.c.l.b16 %v6017
          %v6180 = vunpack.c.h.b16 %v6017
          %v6181 = vunpack.c.l.b16 %v6018
          %v6182 = vunpack.c.h.b16 %v6018
          %v6183 = vunpack.c.l.b16 %v6019
          %v6184 = vunpack.c.h.b16 %v6019
          %v6185 = vunpack.c.l.b16 %v6020
          %v6186 = vunpack.c.h.b16 %v6020
          %v6187 = vunpack.c.l.b16 %v6021
          %v6188 = vunpack.c.h.b16 %v6021
          %v6189 = vunpack.c.l.b16 %v6022
          %v6190 = vunpack.c.h.b16 %v6022
          %v6191 = vunpack.c.l.b16 %v6023
          %v6192 = vunpack.c.h.b16 %v6023
          %v6193 = vunpack.c.l.b16 %v6024
          %v6194 = vunpack.c.h.b16 %v6024
          %v6195 = vunpack.c.l.b16 %v6025
          %v6196 = vunpack.c.h.b16 %v6025
          %v6197 = vunpack.c.l.b16 %v6026
          %v6198 = vunpack.c.h.b16 %v6026
          %v6199 = vunpack.c.l.b16 %v6027
          %v6200 = vunpack.c.h.b16 %v6027
          %v6201 = vunpack.c.l.b16 %v6028
          %v6202 = vunpack.c.h.b16 %v6028
          %v6203 = vunpack.c.l.b16 %v6029
          %v6204 = vunpack.c.h.b16 %v6029
          %v6205 = vunpack.c.l.b16 %v6030
          %v6206 = vunpack.c.h.b16 %v6030
          %v6207 = vunpack.c.l.b16 %v6031
          %v6208 = vunpack.c.h.b16 %v6031
          %v6209 = vunpack.c.l.b16 %v6032
          %v6210 = vunpack.c.h.b16 %v6032
          %v6211 = vunpack.c.l.b16 %v6033
          %v6212 = vunpack.c.h.b16 %v6033
          %v6213 = vunpack.c.l.b16 %v6034
          %v6214 = vunpack.c.h.b16 %v6034
          %v6215 = vunpack.c.l.b16 %v6035
          %v6216 = vunpack.c.h.b16 %v6035
          %v6217 = vunpack.c.l.b16 %v6036
          %v6218 = vunpack.c.h.b16 %v6036
          %v6219 = vunpack.c.l.b16 %v6037
          %v6220 = vunpack.c.h.b16 %v6037
          %v6221 = vunpack.c.l.b16 %v6038
          %v6222 = vunpack.c.h.b16 %v6038
          %v6223 = vunpack.c.l.b16 %v6039
          %v6224 = vunpack.c.h.b16 %v6039
          %v6225 = vunpack.c.l.b16 %v6040
          %v6226 = vunpack.c.h.b16 %v6040
          %v6227 = vunpack.c.l.b16 %v6041
          %v6228 = vunpack.c.h.b16 %v6041
          %v6229 = vunpack.c.l.b16 %v6042
          %v6230 = vunpack.c.h.b16 %v6042
          %v6231 = vunpack.c.l.b16 %v6043
          %v6232 = vunpack.c.h.b16 %v6043
          %v6233 = vunpack.c.l.b16 %v6044
          %v6234 = vunpack.c.h.b16 %v6044
          %v6235 = vunpack.c.l.b16 %v6045
          %v6236 = vunpack.c.h.b16 %v6045
          %v6237 = vunpack.c.l.b16 %v6046
          %v6238 = vunpack.c.h.b16 %v6046
          %v6239 = vunpack.c.l.b16 %v6047
          %v6240 = vunpack.c.h.b16 %v6047
          %v6241 = vunpack.c.l.b16 %v6048
          %v6242 = vunpack.c.h.b16 %v6048
          %v6243 = vunpack.c.l.b16 %v6049
          %v6244 = vunpack.c.h.b16 %v6049
          %v6245 = vunpack.c.l.b16 %v6050
          %v6246 = vunpack.c.h.b16 %v6050
          %v6247 = vunpack.c.l.b16 %v6051
          %v6248 = vunpack.c.h.b16 %v6051
          %v6249 = vunpack.c.l.b16 %v6052
          %v6250 = vunpack.c.h.b16 %v6052
          %v6251 = vunpack.c.l.b16 %v6053
          %v6252 = vunpack.c.h.b16 %v6053
          %v6253 = vunpack.c.l.b16 %v6054
          %v6254 = vunpack.c.h.b16 %v6054
          %v6255 = vunpack.c.l.b16 %v6055
          %v6256 = vunpack.c.h.b16 %v6055
          %v6257 = vunpack.c.l.b16 %v6056
          %v6258 = vunpack.c.h.b16 %v6056
          %v6259 = vunpack.c.l.b16 %v6057
          %v6260 = vunpack.c.h.b16 %v6057
          %v6261 = vunpack.c.l.b16 %v6058
          %v6262 = vunpack.c.h.b16 %v6058
          %v6263 = vpack.c.b16 %v6137, %v6135
          %v6264 = vpack.c.b16 %v6138, %v6136
          %v6265 = vpack.c.b16 %v6141, %v6139
          %v6266 = vpack.c.b16 %v6142, %v6140
          %v6267 = vpack.c.b16 %v6145, %v6143
          %v6268 = vpack.c.b16 %v6146, %v6144
          %v6269 = vpack.c.b16 %v6149, %v6147
          %v6270 = vpack.c.b16 %v6150, %v6148
          %v6271 = vpack.c.b16 %v6153, %v6151
          %v6272 = vpack.c.b16 %v6154, %v6152
          %v6273 = vpack.c.b16 %v6157, %v6155
          %v6274 = vpack.c.b16 %v6158, %v6156
          %v6275 = vpack.c.b16 %v6161, %v6159
          %v6276 = vpack.c.b16 %v6162, %v6160
          %v6277 = vpack.c.b16 %v6165, %v6163
          %v6278 = vpack.c.b16 %v6166, %v6164
          %v6279 = vpack.c.b16 %v6169, %v6167
          %v6280 = vpack.c.b16 %v6170, %v6168
          %v6281 = vpack.c.b16 %v6173, %v6171
          %v6282 = vpack.c.b16 %v6174, %v6172
          %v6283 = vpack.c.b16 %v6177, %v6175
          %v6284 = vpack.c.b16 %v6178, %v6176
          %v6285 = vpack.c.b16 %v6181, %v6179
          %v6286 = vpack.c.b16 %v6182, %v6180
          %v6287 = vpack.c.b16 %v6185, %v6183
          %v6288 = vpack.c.b16 %v6186, %v6184
          %v6289 = vpack.c.b16 %v6189, %v6187
          %v6290 = vpack.c.b16 %v6190, %v6188
          %v6291 = vpack.c.b16 %v6193, %v6191
          %v6292 = vpack.c.b16 %v6194, %v6192
          %v6293 = vpack.c.b16 %v6197, %v6195
          %v6294 = vpack.c.b16 %v6198, %v6196
          %v6295 = vpack.c.b16 %v6201, %v6199
          %v6296 = vpack.c.b16 %v6202, %v6200
          %v6297 = vpack.c.b16 %v6205, %v6203
          %v6298 = vpack.c.b16 %v6206, %v6204
          %v6299 = vpack.c.b16 %v6209, %v6207
          %v6300 = vpack.c.b16 %v6210, %v6208
          %v6301 = vpack.c.b16 %v6213, %v6211
          %v6302 = vpack.c.b16 %v6214, %v6212
          %v6303 = vpack.c.b16 %v6217, %v6215
          %v6304 = vpack.c.b16 %v6218, %v6216
          %v6305 = vpack.c.b16 %v6221, %v6219
          %v6306 = vpack.c.b16 %v6222, %v6220
          %v6307 = vpack.c.b16 %v6225, %v6223
          %v6308 = vpack.c.b16 %v6226, %v6224
          %v6309 = vpack.c.b16 %v6229, %v6227
          %v6310 = vpack.c.b16 %v6230, %v6228
          %v6311 = vpack.c.b16 %v6233, %v6231
          %v6312 = vpack.c.b16 %v6234, %v6232
          %v6313 = vpack.c.b16 %v6237, %v6235
          %v6314 = vpack.c.b16 %v6238, %v6236
          %v6315 = vpack.c.b16 %v6241, %v6239
          %v6316 = vpack.c.b16 %v6242, %v6240
          %v6317 = vpack.c.b16 %v6245, %v6243
          %v6318 = vpack.c.b16 %v6246, %v6244
          %v6319 = vpack.c.b16 %v6249, %v6247
          %v6320 = vpack.c.b16 %v6250, %v6248
          %v6321 = vpack.c.b16 %v6253, %v6251
          %v6322 = vpack.c.b16 %v6254, %v6252
          %v6323 = vpack.c.b16 %v6257, %v6255
          %v6324 = vpack.c.b16 %v6258, %v6256
          %v6325 = vpack.c.b16 %v6261, %v6259
          %v6326 = vpack.c.b16 %v6262, %v6260
          %6391 = vmatprep.subr.bf16.mxu0 %v6264
          %6392 = vmatpush1.bf16.msra.mxu0 %v6263
          %6393 = vmatprep.subr.bf16.mxu0 %v6266
          %6394 = vmatpush1.bf16.msra.mxu0 %v6265
          %6395 = vmatprep.subr.bf16.mxu0 %v6268
          %6396 = vmatpush1.bf16.msra.mxu0 %v6267
          %6397 = vmatprep.subr.bf16.mxu0 %v6270
          %6398 = vmatpush1.bf16.msra.mxu0 %v6269
          %6399 = vmatprep.subr.bf16.mxu0 %v6272
          %6400 = vmatpush1.bf16.msra.mxu0 %v6271
          %6401 = vmatprep.subr.bf16.mxu0 %v6274
          %6402 = vmatpush1.bf16.msra.mxu0 %v6273
          %6403 = vmatprep.subr.bf16.mxu0 %v6276
          %6404 = vmatpush1.bf16.msra.mxu0 %v6275
          %6405 = vmatprep.subr.bf16.mxu0 %v6278
          %6406 = vmatpush1.bf16.msra.mxu0 %v6277
          %6407 = vmatprep.subr.bf16.mxu0 %v6280
          %6408 = vmatpush1.bf16.msra.mxu0 %v6279
          %6409 = vmatprep.subr.bf16.mxu0 %v6282
          %6410 = vmatpush1.bf16.msra.mxu0 %v6281
          %6411 = vmatprep.subr.bf16.mxu0 %v6284
          %6412 = vmatpush1.bf16.msra.mxu0 %v6283
          %6413 = vmatprep.subr.bf16.mxu0 %v6286
          %6414 = vmatpush1.bf16.msra.mxu0 %v6285
          %6415 = vmatprep.subr.bf16.mxu0 %v6288
          %6416 = vmatpush1.bf16.msra.mxu0 %v6287
          %6417 = vmatprep.subr.bf16.mxu0 %v6290
          %6418 = vmatpush1.bf16.msra.mxu0 %v6289
          %6419 = vmatprep.subr.bf16.mxu0 %v6292
          %6420 = vmatpush1.bf16.msra.mxu0 %v6291
          %6421 = vmatprep.subr.bf16.mxu0 %v6294
          %6422 = vmatpush1.bf16.msra.mxu0 %v6293
          %6423 = vmatprep.mubr.bf16.mxu0 %v5992
          %6424 = vmatmul.mubr.bf16.gmra.mrb[0].mxu0 %v5991
          %v6425 = vpop.f32.mrb[0].mxu0
          %v6426 = vadd.f32 %v6064, %v6425
          %v6427 = vpop.f32.mrb[0].mxu0
          %v6428 = vadd.f32 %v6068, %v6427
          %v6429 = vpop.f32.mrb[0].mxu0
          %v6430 = vpop.f32.mrb[0].mxu0
          %6431 = vdwg.mxu0
          %6432 = vmatprep.subr.bf16.mxu0 %v6296
          %6433 = vmatpush1.bf16.msra.mxu0 %v6295
          %6434 = vmatprep.subr.bf16.mxu0 %v6298
          %6435 = vmatpush1.bf16.msra.mxu0 %v6297
          %6436 = vmatprep.subr.bf16.mxu0 %v6300
          %6437 = vmatpush1.bf16.msra.mxu0 %v6299
          %6438 = vmatprep.subr.bf16.mxu0 %v6302
          %6439 = vmatpush1.bf16.msra.mxu0 %v6301
          %6440 = vmatprep.subr.bf16.mxu0 %v6304
          %6441 = vmatpush1.bf16.msra.mxu0 %v6303
          %6442 = vmatprep.subr.bf16.mxu0 %v6306
          %6443 = vmatpush1.bf16.msra.mxu0 %v6305
          %6444 = vmatprep.subr.bf16.mxu0 %v6308
          %6445 = vmatpush1.bf16.msra.mxu0 %v6307
          %6446 = vmatprep.subr.bf16.mxu0 %v6310
          %6447 = vmatpush1.bf16.msra.mxu0 %v6309
          %6448 = vmatprep.subr.bf16.mxu0 %v6312
          %6449 = vmatpush1.bf16.msra.mxu0 %v6311
          %6450 = vmatprep.subr.bf16.mxu0 %v6314
          %6451 = vmatpush1.bf16.msra.mxu0 %v6313
          %6452 = vmatprep.subr.bf16.mxu0 %v6316
          %6453 = vmatpush1.bf16.msra.mxu0 %v6315
          %6454 = vmatprep.subr.bf16.mxu0 %v6318
          %6455 = vmatpush1.bf16.msra.mxu0 %v6317
          %6456 = vmatprep.subr.bf16.mxu0 %v6320
          %6457 = vmatpush1.bf16.msra.mxu0 %v6319
          %6458 = vmatprep.subr.bf16.mxu0 %v6322
          %6459 = vmatpush1.bf16.msra.mxu0 %v6321
          %6460 = vmatprep.subr.bf16.mxu0 %v6324
          %6461 = vmatpush1.bf16.msra.mxu0 %v6323
          %6462 = vmatprep.subr.bf16.mxu0 %v6326
          %6463 = vmatpush1.bf16.msra.mxu0 %v6325
          %6464 = vmatprep.mubr.bf16.mxu0 %v5994
          %6465 = vmatmul.mubr.bf16.gmra.mrb[0].mxu0 %v5993
          %v6466 = vpop.f32.mrb[0].mxu0
          %v6467 = vadd.f32 %v6426, %v6466
          %v6468 = vpop.f32.mrb[0].mxu0
          %v6469 = vadd.f32 %v6428, %v6468
          %v6470 = vpop.f32.mrb[0].mxu0
          %v6471 = vpop.f32.mrb[0].mxu0
          %6472 = vdwg.mxu0
          %v6473 = vmax.f32 %v6467, 0.0
          %v6474 = vmax.f32 %v6469, 0.0
          %v6475 = vpack.c.bf16 %v6473, %v6473
          %v6476 = vpack.c.bf16 %v6474, %v6474
          %v6477 = vld [vmem:[%s11] sm:$0xf]
          %v6478 = vld [vmem:[%s11 + $0x4] sm:$0xf]
          %v6479 = vld [vmem:[%s11 + $0x8] sm:$0xf]
          %v6480 = vld [vmem:[%s11 + $0xc] sm:$0xf]
          %v6481 = vld [vmem:[%s11 + $0x10] sm:$0xf]
          %v6482 = vld [vmem:[%s11 + $0x14] sm:$0xf]
          %v6483 = vld [vmem:[%s11 + $0x18] sm:$0xf]
          %v6484 = vld [vmem:[%s11 + $0x1c] sm:$0xf]
          %v6485 = vld [vmem:[%s11 + $0x20] sm:$0xf]
          %v6486 = vld [vmem:[%s11 + $0x24] sm:$0xf]
          %v6487 = vld [vmem:[%s11 + $0x28] sm:$0xf]
          %v6488 = vld [vmem:[%s11 + $0x2c] sm:$0xf]
          %v6489 = vld [vmem:[%s11 + $0x30] sm:$0xf]
          %v6490 = vld [vmem:[%s11 + $0x34] sm:$0xf]
          %v6491 = vld [vmem:[%s11 + $0x38] sm:$0xf]
          %v6492 = vld [vmem:[%s11 + $0x3c] sm:$0xf]
          %v6493 = vld [vmem:[%s11 + $0x40] sm:$0xf]
          %v6494 = vld [vmem:[%s11 + $0x44] sm:$0xf]
          %v6495 = vld [vmem:[%s11 + $0x48] sm:$0xf]
          %v6496 = vld [vmem:[%s11 + $0x4c] sm:$0xf]
          %v6497 = vld [vmem:[%s11 + $0x50] sm:$0xf]
          %v6498 = vld [vmem:[%s11 + $0x54] sm:$0xf]
          %v6499 = vld [vmem:[%s11 + $0x58] sm:$0xf]
          %v6500 = vld [vmem:[%s11 + $0x5c] sm:$0xf]
          %v6501 = vld [vmem:[%s11 + $0x60] sm:$0xf]
          %v6502 = vld [vmem:[%s11 + $0x64] sm:$0xf]
          %v6503 = vld [vmem:[%s11 + $0x68] sm:$0xf]
          %v6504 = vld [vmem:[%s11 + $0x6c] sm:$0xf]
          %v6505 = vld [vmem:[%s11 + $0x70] sm:$0xf]
          %v6506 = vld [vmem:[%s11 + $0x74] sm:$0xf]
          %v6507 = vld [vmem:[%s11 + $0x78] sm:$0xf]
          %v6508 = vld [vmem:[%s11 + $0x7c] sm:$0xf]
          %v6541 = vunpack.c.l.b16 %v6477
          %v6542 = vunpack.c.l.b16 %v6478
          %v6543 = vunpack.c.l.b16 %v6479
          %v6544 = vunpack.c.l.b16 %v6480
          %v6545 = vunpack.c.l.b16 %v6481
          %v6546 = vunpack.c.l.b16 %v6482
          %v6547 = vunpack.c.l.b16 %v6483
          %v6548 = vunpack.c.l.b16 %v6484
          %v6549 = vunpack.c.l.b16 %v6485
          %v6550 = vunpack.c.l.b16 %v6486
          %v6551 = vunpack.c.l.b16 %v6487
          %v6552 = vunpack.c.l.b16 %v6488
          %v6553 = vunpack.c.l.b16 %v6489
          %v6554 = vunpack.c.l.b16 %v6490
          %v6555 = vunpack.c.l.b16 %v6491
          %v6556 = vunpack.c.l.b16 %v6492
          %v6557 = vunpack.c.l.b16 %v6493
          %v6558 = vunpack.c.l.b16 %v6494
          %v6559 = vunpack.c.l.b16 %v6495
          %v6560 = vunpack.c.l.b16 %v6496
          %v6561 = vunpack.c.l.b16 %v6497
          %v6562 = vunpack.c.l.b16 %v6498
          %v6563 = vunpack.c.l.b16 %v6499
          %v6564 = vunpack.c.l.b16 %v6500
          %v6565 = vunpack.c.l.b16 %v6501
          %v6566 = vunpack.c.l.b16 %v6502
          %v6567 = vunpack.c.l.b16 %v6503
          %v6568 = vunpack.c.l.b16 %v6504
          %v6569 = vunpack.c.l.b16 %v6505
          %v6570 = vunpack.c.l.b16 %v6506
          %v6571 = vunpack.c.l.b16 %v6507
          %v6572 = vunpack.c.l.b16 %v6508
          %v6573 = vpack.c.b16 %v6542, %v6541
          %v6574 = vpack.c.b16 %v6544, %v6543
          %v6575 = vpack.c.b16 %v6546, %v6545
          %v6576 = vpack.c.b16 %v6548, %v6547
          %v6577 = vpack.c.b16 %v6550, %v6549
          %v6578 = vpack.c.b16 %v6552, %v6551
          %v6579 = vpack.c.b16 %v6554, %v6553
          %v6580 = vpack.c.b16 %v6556, %v6555
          %v6581 = vpack.c.b16 %v6558, %v6557
          %v6582 = vpack.c.b16 %v6560, %v6559
          %v6583 = vpack.c.b16 %v6562, %v6561
          %v6584 = vpack.c.b16 %v6564, %v6563
          %v6585 = vpack.c.b16 %v6566, %v6565
          %v6586 = vpack.c.b16 %v6568, %v6567
          %v6587 = vpack.c.b16 %v6570, %v6569
          %v6588 = vpack.c.b16 %v6572, %v6571
          %6605 = vmatprep.subr.bf16.mxu0 0
          %6606 = vmatpush1.bf16.msra.mxu0 %v6573
          %6607 = vmatprep.subr.bf16.mxu0 0
          %6608 = vmatpush1.bf16.msra.mxu0 %v6574
          %6609 = vmatprep.subr.bf16.mxu0 0
          %6610 = vmatpush1.bf16.msra.mxu0 %v6575
          %6611 = vmatprep.subr.bf16.mxu0 0
          %6612 = vmatpush1.bf16.msra.mxu0 %v6576
          %6613 = vmatprep.subr.bf16.mxu0 0
          %6614 = vmatpush1.bf16.msra.mxu0 %v6577
          %6615 = vmatprep.subr.bf16.mxu0 0
          %6616 = vmatpush1.bf16.msra.mxu0 %v6578
          %6617 = vmatprep.subr.bf16.mxu0 0
          %6618 = vmatpush1.bf16.msra.mxu0 %v6579
          %6619 = vmatprep.subr.bf16.mxu0 0
          %6620 = vmatpush1.bf16.msra.mxu0 %v6580
          %6621 = vmatprep.subr.bf16.mxu0 0
          %6622 = vmatpush1.bf16.msra.mxu0 %v6581
          %6623 = vmatprep.subr.bf16.mxu0 0
          %6624 = vmatpush1.bf16.msra.mxu0 %v6582
          %6625 = vmatprep.subr.bf16.mxu0 0
          %6626 = vmatpush1.bf16.msra.mxu0 %v6583
          %6627 = vmatprep.subr.bf16.mxu0 0
          %6628 = vmatpush1.bf16.msra.mxu0 %v6584
          %6629 = vmatprep.subr.bf16.mxu0 0
          %6630 = vmatpush1.bf16.msra.mxu0 %v6585
          %6631 = vmatprep.subr.bf16.mxu0 0
          %6632 = vmatpush1.bf16.msra.mxu0 %v6586
          %6633 = vmatprep.subr.bf16.mxu0 0
          %6634 = vmatpush1.bf16.msra.mxu0 %v6587
          %6635 = vmatprep.subr.bf16.mxu0 0
          %6636 = vmatpush1.bf16.msra.mxu0 %v6588
          %6637 = vmatprep.mubr.bf16.mxu0 %v6476
          %6638 = vmatmul.mubr.bf16.gmra.mrb[0].mxu0 %v6475
          %v6639 = vpop.f32.mrb[0].mxu0
          %v6640 = vadd.f32 0.0, %v6639
          %v6641 = vpop.f32.mrb[0].mxu0
          %v6642 = vpop.f32.mrb[0].mxu0
          %v6643 = vpop.f32.mrb[0].mxu0
          %6644 = vdwg.mxu0
          %v6645 = vld [vmem:[%s12] sm:$0x1]
          %v6647 = vlaneseq
          %v6648 = vshrl.u32 %v6647, 7
          %v6649 = vsub.s32 0, %v6648
          %v6650 = vrot.slane %v6645, %v6649
          %v6652 = vadd.f32 %v6640, %v6650
          %6653 = vst [vmem:[%s1000] sm:$0xf] %v6652
        $region118: #{transformation_net_forward.1} parent=105 // pred_fallthru
          _
        %p6654 = scmp.lt.s32.totalorder %s28, 1
        %s6655 = scalar_select %p6654, %s28, 1
        %s6656 = smul.addr %s6655, 4
        %s6657 = scalar_lea.vmem %s13, %s6656
        // Predicated region
        $region119: #{transformation_net_forward.1} parent=105 // pred_check
          %p6658 = pneg %p334
        $region120: #{transformation_net_forward.1} parent=105 // pred_check_branch
          %6660 = sbr.rel (%p6658) target = $region122
        $region121: #{transformation_net_forward.1} parent=105 // pred_region
          _
        $region122: #{transformation_net_forward.1} parent=105 // pred_fallthru
          _
      $region106: #{transformation_net_forward.1} parent=5 // pred_fallthru
        _
      %p6661 = scmp.le.s32.totalorder 2, %s19
      // Predicated region
      $region123: #{transformation_net_forward.1} parent=5 // pred_check
        %p6662 = pneg %p6661
      $region124: #{transformation_net_forward.1} parent=5 // pred_check_branch
        %6664 = sbr.rel (%p6662) target = $region126
      $region125: #{transformation_net_forward.1} parent=5 // pred_region
        %s6665 = ssub.s32 %s19, 2
        // Predicated region
        $region127: #{transformation_net_forward.1} parent=125 // pred_check
          %p6666 = pneg %p340
        $region128: #{transformation_net_forward.1} parent=125 // pred_check_branch
          %6668 = sbr.rel (%p6666) target = $region130
        $region129: #{transformation_net_forward.1} parent=125 // pred_region
          %p6669 = scmp.lt.s32.totalorder %s30, 1
          %s6670 = scalar_select %p6669, %s30, 1
          %s6671 = smul.addr %s6670, 4
          %s6672 = scalar_lea.vmem %s13, %s6671
        $region130: #{transformation_net_forward.1} parent=125 // pred_fallthru
          _
      $region126: #{transformation_net_forward.1} parent=5 // pred_fallthru
        _
    $region6: #{transformation_net_forward.1} parent=1 // loop_footer
      %s23 = sadd.s32 1, %s19
    $region7: #{transformation_net_forward.1} parent=1 // loop_footer_branch
      %18 = sbr.rel target = $region3
    $region8: #{transformation_net_forward.1} parent=1 // loop_exit
      _

</llo_original>
